<compile_context>
chip_gen: v6e
topology: v6e:2x2x1
jax: 0.10.0
libtpu: 0.0.40
codegen_flags: <defaults>
</compile_context>

<pallas_src>
import functools

import jax
import jax.numpy as jnp
from jax.experimental import pallas as pl
from jax.experimental.pallas import tpu as pltpu

KERNEL_SIZES = (40, 20, 10)


def _inception_kernel(x_ref, wbn_ref, wfused_ref, o_ref, yext_ref, a_ref, *,
                      c_in, c_out, b_blk, length, n_taps, max_left):
    lanes = b_blk * length
    x = x_ref[0]                                    # [c_in, lanes], native dtype
    wfused = wfused_ref[...]                        # [4*c_out, n_taps*c_out + c_in]
    op_dtype = wfused.dtype

    # ---- bottleneck 1x1 conv over all folded batch elements (one MXU issue) ----
    y = jnp.dot(wbn_ref[...], x, preferred_element_type=jnp.float32)
    # Stash y into a lane-extended scratch so every tap is a plain static slice
    # (columns [0, max_left) and [max_left+lanes, ...) stay unwritten; they are
    # only ever read at lane positions that the per-batch mask zeroes anyway).
    yext_ref[:, max_left:max_left + lanes] = y.astype(op_dtype)

    # Per-lane local position inside each folded batch element (hoisted once).
    p = jax.lax.broadcasted_iota(jnp.int32, (c_out, lanes), 1) % length
    zero = jnp.zeros((c_out, lanes), op_dtype)

    # ---- tap-stacked (im2col) operand written straight into VMEM scratch ----
    for t in range(n_taps):
        s = t - max_left                            # tap offset: reads y[:, i + s]
        blk = yext_ref[:, t:t + lanes]              # whole-row static slice
        if s < 0:                                   # per-batch left 'same' padding
            blk = jnp.where(p >= -s, blk, zero)
        elif s > 0:                                 # per-batch right 'same' padding
            blk = jnp.where(p < length - s, blk, zero)
        a_ref[t * c_out:(t + 1) * c_out, :] = blk

    # ---- maxpool(3, stride 1, pad 1) on the raw input, whole-row (no per-batch
    #      loop): neighbour shifts + boundary fix via the lane-position mask.
    #      Using x itself as the fill value is equivalent to -inf padding,
    #      because max(x, x) == x. ----
    xf = x.astype(op_dtype)
    left_nb = jnp.concatenate([xf[:, :1], xf[:, :lanes - 1]], axis=1)    # x[:, i-1]
    right_nb = jnp.concatenate([xf[:, 1:], xf[:, lanes - 1:]], axis=1)   # x[:, i+1]
    px = jax.lax.broadcasted_iota(jnp.int32, (c_in, lanes), 1) % length
    left_nb = jnp.where(px == 0, xf, left_nb)             # drop left neighbour
    right_nb = jnp.where(px == length - 1, xf, right_nb)  # drop right neighbour
    a_ref[n_taps * c_out:n_taps * c_out + c_in, :] = jnp.maximum(
        jnp.maximum(left_nb, xf), right_nb)

    # ---- single fused MXU issue: 3 conv branches + maxpool 1x1 conv ----
    out = jnp.dot(wfused, a_ref[...], preferred_element_type=jnp.float32)
    # One lane-dense store of the already-concatenated [4*c_out, lanes] block.
    o_ref[0] = jnp.maximum(out, 0.0).astype(o_ref.dtype)


def _fuse_weights(conv_ws, wmp, ksizes, c_out, c_in, n_taps, max_left):
    """Pack the three PyTorch-layout conv weights ([O, I, K] each) AND the
    maxpool-branch 1x1 conv weight ([O, I]) into one lane-dense matrix of shape
    [4*c_out, n_taps*c_out + c_in], aligned with the tap-stacked + pooled
    operand built inside the kernel.  Shorter kernels are zero padded and
    shifted to their own PyTorch 'same'-padding offset."""
    dt = conv_ws[0].dtype
    blocks = []
    for k, w in zip(ksizes, conv_ws):
        off0 = max_left - (k - 1) // 2              # PyTorch 'same' left-pad offset
        wt = jnp.transpose(w, (0, 2, 1)).astype(dt)  # [O, K, I]
        full = jnp.zeros((c_out, n_taps, c_out), dt)
        full = full.at[:, off0:off0 + k, :].set(wt)
        blk = full.reshape(c_out, n_taps * c_out)
        blocks.append(jnp.concatenate([blk, jnp.zeros((c_out, c_in), dt)], axis=1))
    mp_rows = jnp.concatenate(
        [jnp.zeros((c_out, n_taps * c_out), dt), wmp.astype(dt)], axis=1)
    return jnp.concatenate(blocks + [mp_rows], axis=0)   # [4*c_out, n_taps*c_out+c_in]


def _pick_batch_block(n, length, target_lanes=512, max_lanes=4096):
    """Fold batch elements into the lane axis.  Prefer (in order): lanes that
    are a multiple of 128 (dense vector stores), >= target_lanes lanes per grid
    step (amortize the ~0.35us/step pipeline overhead and fill the MXU N side),
    keeping >= 2 grid steps (two v7x TensorCores), and then the smallest block
    achieving all of that."""
    best, best_key = 1, None
    for d in range(1, n + 1):
        if n % d:
            continue
        lanes = d * length
        if lanes > max_lanes and d != 1:
            continue
        key = (lanes % 128 == 0, min(lanes, target_lanes), n // d >= 2, -lanes)
        if best_key is None or key > best_key:
            best, best_key = d, key
    return best


@jax.jit
def inception_module(x, wbn, w40, w20, w10, wmp):
    """x: [N, C_in, L]; wbn/wmp: [C_out, C_in]; w{40,20,10}: [C_out, C_out, k].
    Returns [N, 4*C_out, L] (PyTorch NCL layout)."""
    n, c_in, length = x.shape
    c_out = wbn.shape[0]
    n_taps = max(KERNEL_SIZES)
    max_left = (n_taps - 1) // 2

    b_blk = _pick_batch_block(n, length)
    nc = n // b_blk
    lanes = b_blk * length
    k_rows = n_taps * c_out + c_in

    # Fold b_blk batch elements into the lane axis: [N, C, L] -> [nc, C, b_blk*L]
    xk = x.reshape(nc, b_blk, c_in, length).transpose(0, 2, 1, 3).reshape(
        nc, c_in, lanes)
    # Fused, lane-dense weight covering all four branches.
    wfused = _fuse_weights((w40, w20, w10), wmp, KERNEL_SIZES, c_out, c_in,
                           n_taps, max_left)

    kernel = functools.partial(
        _inception_kernel, c_in=c_in, c_out=c_out, b_blk=b_blk, length=length,
        n_taps=n_taps, max_left=max_left)

    flops = nc * (2 * c_out * c_in * lanes + 2 * (4 * c_out) * k_rows * lanes)
    bytes_accessed = (xk.size * xk.dtype.itemsize
                      + nc * 4 * c_out * lanes * x.dtype.itemsize
                      + wbn.size * wbn.dtype.itemsize
                      + wfused.size * wfused.dtype.itemsize)

    out = pl.pallas_call(
        kernel,
        out_shape=jax.ShapeDtypeStruct((nc, 4 * c_out, lanes), x.dtype),
        grid_spec=pltpu.PrefetchScalarGridSpec(
            num_scalar_prefetch=0,
            grid=(nc,),
            in_specs=[
                pl.BlockSpec((1, c_in, lanes), lambda b: (b, 0, 0)),
                pl.BlockSpec((c_out, c_in), lambda b: (0, 0)),
                pl.BlockSpec((4 * c_out, k_rows), lambda b: (0, 0)),
            ],
            out_specs=pl.BlockSpec((1, 4 * c_out, lanes), lambda b: (b, 0, 0)),
            scratch_shapes=[
                # lane-extended y so every tap is a plain static slice
                pltpu.VMEM((c_out, lanes + n_taps - 1), wfused.dtype),
                # fused im2col + pooled operand for the single big matmul
                pltpu.VMEM((k_rows, lanes), wfused.dtype),
            ],
        ),
        compiler_params=pltpu.CompilerParams(dimension_semantics=("parallel",)),
        cost_estimate=pl.CostEstimate(flops=flops, transcendentals=0,
                                      bytes_accessed=bytes_accessed),
    )(xk, wbn, wfused)

    # Unfold the lane axis back to [N, 4*C_out, L] (wrapper-side layout plumbing).
    return out.reshape(nc, 4 * c_out, b_blk, length).transpose(0, 2, 1, 3).reshape(
        n, 4 * c_out, length)


def _reference(x, wbn, w40, w20, w10, wmp):
    """Pure-JAX reference mirroring the PyTorch forward (NCL layout)."""
    dn = ("NCH", "OIH", "NCH")
    y = jax.lax.conv_general_dilated(x, wbn[:, :, None], (1,), [(0, 0)],
                                     dimension_numbers=dn)
    outs = []
    for k, wk in zip(KERNEL_SIZES, (w40, w20, w10)):
        left = (k - 1) // 2
        right = (k - 1) - left
        outs.append(jax.lax.conv_general_dilated(
            y, wk, (1,), [(left, right)], dimension_numbers=dn))
    xpad = jnp.pad(x, ((0, 0), (0, 0), (1, 1)), constant_values=-jnp.inf)
    pooled = jnp.maximum(jnp.maximum(xpad[:, :, :-2], xpad[:, :, 1:-1]),
                         xpad[:, :, 2:])
    outs.append(jax.lax.conv_general_dilated(pooled, wmp[:, :, None], (1,),
                                             [(0, 0)], dimension_numbers=dn))
    return jax.nn.relu(jnp.concatenate(outs, axis=1))


if __name__ == "__main__":
    # batch=16, L=64: _pick_batch_block folds 8 batch elements per grid step
    # (512 lanes, multiple of 128 -> dense stores) while keeping 2 "parallel"
    # grid steps so both v7x TensorCores are busy.
    batch, c_in, c_out, length = 16, 4, 8, 64
    key = jax.random.PRNGKey(0)
    k0, k1, k2, k3, k4, k5 = jax.random.split(key, 6)

    x = jax.random.normal(k0, (batch, c_in, length), jnp.float32)
    # Parameters in native PyTorch Conv1d layout [O, I, K] (1x1 convs as [O, I]).
    wbn = 0.1 * jax.random.normal(k1, (c_out, c_in), jnp.float32)
    w40 = 0.1 * jax.random.normal(k2, (c_out, c_out, KERNEL_SIZES[0]), jnp.float32)
    w20 = 0.1 * jax.random.normal(k3, (c_out, c_out, KERNEL_SIZES[1]), jnp.float32)
    w10 = 0.1 * jax.random.normal(k4, (c_out, c_out, KERNEL_SIZES[2]), jnp.float32)
    wmp = 0.1 * jax.random.normal(k5, (c_out, c_in), jnp.float32)

    out = jax.block_until_ready(inception_module(x, wbn, w40, w20, w10, wmp))
    ref = jax.block_until_ready(_reference(x, wbn, w40, w20, w10, wmp))

    assert out.shape == (batch, 4 * c_out, length), out.shape
    assert jnp.allclose(out, ref, rtol=2e-3, atol=2e-3), float(
        jnp.max(jnp.abs(out - ref)))
    print("KERNEL_OK")
</pallas_src>

<mosaic_0001>
module attributes {stable_mosaic.version = 11 : i64} {
  func.func @_inception_kernel(%arg0: i32, %arg1: memref<1x4x512xf32, #tpu.memory_space<vmem>>, %arg2: memref<8x4xf32, #tpu.memory_space<vmem>>, %arg3: memref<32x324xf32, #tpu.memory_space<vmem>>, %arg4: memref<1x32x512xf32, #tpu.memory_space<vmem>>, %arg5: memref<8x551xf32, #tpu.memory_space<vmem>>, %arg6: memref<324x512xf32, #tpu.memory_space<vmem>>) attributes {dimension_semantics = [#tpu.dimension_semantics<parallel>], iteration_bounds = array<i64: 2>, scalar_prefetch = 0 : i64, scratch_operands = 2 : i64, tpu.core_type = #tpu.core_type<tc>, window_params = [{transform_indices = @transform_0, window_bounds = array<i64: 1, 4, 512>}, {pipeline_mode = #tpu.pipeline_mode<synchronous>, transform_indices = @transform_1, window_bounds = array<i64: 8, 4>}, {pipeline_mode = #tpu.pipeline_mode<synchronous>, transform_indices = @transform_2, window_bounds = array<i64: 32, 324>}, {transform_indices = @transform_3, window_bounds = array<i64: 1, 32, 512>}]} {
    %c0 = arith.constant 0 : index
    %c0_0 = arith.constant 0 : index
    %c0_1 = arith.constant 0 : index
    %0 = vector.load %arg1[%c0, %c0_0, %c0_1] : memref<1x4x512xf32, #tpu.memory_space<vmem>>, vector<1x4x512xf32>
    %1 = vector.shape_cast %0 : vector<1x4x512xf32> to vector<4x512xf32>
    %c0_2 = arith.constant 0 : index
    %c0_3 = arith.constant 0 : index
    %2 = vector.load %arg3[%c0_2, %c0_3] : memref<32x324xf32, #tpu.memory_space<vmem>>, vector<32x324xf32>
    %c0_4 = arith.constant 0 : index
    %c0_5 = arith.constant 0 : index
    %3 = vector.load %arg2[%c0_4, %c0_5] : memref<8x4xf32, #tpu.memory_space<vmem>>, vector<8x4xf32>
    %cst = arith.constant dense<0.000000e+00> : vector<8x512xf32>
    %4 = tpu.matmul %3, %1, %cst {dimension_numbers = #tpu.dot_dimension_numbers<[1], [0], [0], [1], [0, 0, 1, 1], [], []>} : vector<8x4xf32>, vector<4x512xf32>, vector<8x512xf32> -> vector<8x512xf32>
    %c0_6 = arith.constant 0 : index
    %c19 = arith.constant 19 : index
    %5 = vector.load %arg5[%c0_6, %c19] : memref<8x551xf32, #tpu.memory_space<vmem>>, vector<8x512xf32>
    tpu.vector_store %arg5[%c0_6, %c19], %4 {strides = array<i32>} : memref<8x551xf32, #tpu.memory_space<vmem>>, vector<8x512xf32>,
    %6 = tpu.iota {dimensions = array<i32: 1>} : vector<8x512xi32>
    %c64_i32 = arith.constant 64 : i32
    %c0_i32 = arith.constant 0 : i32
    %7 = arith.cmpi eq, %c64_i32, %c0_i32 : i32
    %c1_i32 = arith.constant 1 : i32
    %8 = arith.select %7, %c1_i32, %c64_i32 : i32
    %9 = vector.broadcast %8 : i32 to vector<8x512xi32>
    %10 = arith.remsi %6, %9 : vector<8x512xi32>
    %c0_i32_7 = arith.constant 0 : i32
    %11 = vector.broadcast %c0_i32_7 : i32 to vector<8x512xi32>
    %12 = arith.cmpi ne, %10, %11 : vector<8x512xi32>
    %c0_i32_8 = arith.constant 0 : i32
    %13 = vector.broadcast %c0_i32_8 : i32 to vector<8x512xi32>
    %14 = arith.cmpi slt, %10, %13 : vector<8x512xi32>
    %c0_i32_9 = arith.constant 0 : i32
    %15 = arith.cmpi slt, %8, %c0_i32_9 : i32
    %16 = vector.broadcast %15 : i1 to vector<8x512xi1>
    %17 = vector.broadcast %16 : vector<8x512xi1> to vector<8x512xi1>
    %18 = arith.xori %14, %17 : vector<8x512xi1>
    %19 = arith.andi %18, %12 : vector<8x512xi1>
    %20 = vector.broadcast %8 : i32 to vector<8x512xi32>
    %21 = arith.addi %10, %20 : vector<8x512xi32>
    %22 = arith.select %19, %21, %10 : vector<8x512xi1>, vector<8x512xi32>
    %cst_10 = arith.constant 0.000000e+00 : f32
    %23 = vector.broadcast %cst_10 : f32 to vector<8x512xf32>
    %c0_11 = arith.constant 0 : index
    %c0_12 = arith.constant 0 : index
    %24 = vector.load %arg5[%c0_11, %c0_12] : memref<8x551xf32, #tpu.memory_space<vmem>>, vector<8x512xf32>
    %c19_i32 = arith.constant 19 : i32
    %25 = vector.broadcast %c19_i32 : i32 to vector<8x512xi32>
    %26 = arith.cmpi sge, %22, %25 : vector<8x512xi32>
    %27 = arith.select %26, %24, %23 : vector<8x512xi1>, vector<8x512xf32>
    %c0_13 = arith.constant 0 : index
    %c0_14 = arith.constant 0 : index
    %28 = vector.load %arg6[%c0_13, %c0_14] : memref<324x512xf32, #tpu.memory_space<vmem>>, vector<8x512xf32>
    tpu.vector_store %arg6[%c0_13, %c0_14], %27 {strides = array<i32>} : memref<324x512xf32, #tpu.memory_space<vmem>>, vector<8x512xf32>,
    %c0_15 = arith.constant 0 : index
    %c1 = arith.constant 1 : index
    %29 = vector.load %arg5[%c0_15, %c1] : memref<8x551xf32, #tpu.memory_space<vmem>>, vector<8x512xf32>
    %c18_i32 = arith.constant 18 : i32
    %30 = vector.broadcast %c18_i32 : i32 to vector<8x512xi32>
    %31 = arith.cmpi sge, %22, %30 : vector<8x512xi32>
    %32 = arith.select %31, %29, %23 : vector<8x512xi1>, vector<8x512xf32>
    %c8 = arith.constant 8 : index
    %c0_16 = arith.constant 0 : index
    %33 = vector.load %arg6[%c8, %c0_16] : memref<324x512xf32, #tpu.memory_space<vmem>>, vector<8x512xf32>
    tpu.vector_store %arg6[%c8, %c0_16], %32 {strides = array<i32>} : memref<324x512xf32, #tpu.memory_space<vmem>>, vector<8x512xf32>,
    %c0_17 = arith.constant 0 : index
    %c2 = arith.constant 2 : index
    %34 = vector.load %arg5[%c0_17, %c2] : memref<8x551xf32, #tpu.memory_space<vmem>>, vector<8x512xf32>
    %c17_i32 = arith.constant 17 : i32
    %35 = vector.broadcast %c17_i32 : i32 to vector<8x512xi32>
    %36 = arith.cmpi sge, %22, %35 : vector<8x512xi32>
    %37 = arith.select %36, %34, %23 : vector<8x512xi1>, vector<8x512xf32>
    %c16 = arith.constant 16 : index
    %c0_18 = arith.constant 0 : index
    %38 = vector.load %arg6[%c16, %c0_18] : memref<324x512xf32, #tpu.memory_space<vmem>>, vector<8x512xf32>
    tpu.vector_store %arg6[%c16, %c0_18], %37 {strides = array<i32>} : memref<324x512xf32, #tpu.memory_space<vmem>>, vector<8x512xf32>,
    %c0_19 = arith.constant 0 : index
    %c3 = arith.constant 3 : index
    %39 = vector.load %arg5[%c0_19, %c3] : memref<8x551xf32, #tpu.memory_space<vmem>>, vector<8x512xf32>
    %c16_i32 = arith.constant 16 : i32
    %40 = vector.broadcast %c16_i32 : i32 to vector<8x512xi32>
    %41 = arith.cmpi sge, %22, %40 : vector<8x512xi32>
    %42 = arith.select %41, %39, %23 : vector<8x512xi1>, vector<8x512xf32>
    %c24 = arith.constant 24 : index
    %c0_20 = arith.constant 0 : index
    %43 = vector.load %arg6[%c24, %c0_20] : memref<324x512xf32, #tpu.memory_space<vmem>>, vector<8x512xf32>
    tpu.vector_store %arg6[%c24, %c0_20], %42 {strides = array<i32>} : memref<324x512xf32, #tpu.memory_space<vmem>>, vector<8x512xf32>,
    %c0_21 = arith.constant 0 : index
    %c4 = arith.constant 4 : index
    %44 = vector.load %arg5[%c0_21, %c4] : memref<8x551xf32, #tpu.memory_space<vmem>>, vector<8x512xf32>
    %c15_i32 = arith.constant 15 : i32
    %45 = vector.broadcast %c15_i32 : i32 to vector<8x512xi32>
    %46 = arith.cmpi sge, %22, %45 : vector<8x512xi32>
    %47 = arith.select %46, %44, %23 : vector<8x512xi1>, vector<8x512xf32>
    %c32 = arith.constant 32 : index
    %c0_22 = arith.constant 0 : index
    %48 = vector.load %arg6[%c32, %c0_22] : memref<324x512xf32, #tpu.memory_space<vmem>>, vector<8x512xf32>
    tpu.vector_store %arg6[%c32, %c0_22], %47 {strides = array<i32>} : memref<324x512xf32, #tpu.memory_space<vmem>>, vector<8x512xf32>,
    %c0_23 = arith.constant 0 : index
    %c5 = arith.constant 5 : index
    %49 = vector.load %arg5[%c0_23, %c5] : memref<8x551xf32, #tpu.memory_space<vmem>>, vector<8x512xf32>
    %c14_i32 = arith.constant 14 : i32
    %50 = vector.broadcast %c14_i32 : i32 to vector<8x512xi32>
    %51 = arith.cmpi sge, %22, %50 : vector<8x512xi32>
    %52 = arith.select %51, %49, %23 : vector<8x512xi1>, vector<8x512xf32>
    %c40 = arith.constant 40 : index
    %c0_24 = arith.constant 0 : index
    %53 = vector.load %arg6[%c40, %c0_24] : memref<324x512xf32, #tpu.memory_space<vmem>>, vector<8x512xf32>
    tpu.vector_store %arg6[%c40, %c0_24], %52 {strides = array<i32>} : memref<324x512xf32, #tpu.memory_space<vmem>>, vector<8x512xf32>,
    %c0_25 = arith.constant 0 : index
    %c6 = arith.constant 6 : index
    %54 = vector.load %arg5[%c0_25, %c6] : memref<8x551xf32, #tpu.memory_space<vmem>>, vector<8x512xf32>
    %c13_i32 = arith.constant 13 : i32
    %55 = vector.broadcast %c13_i32 : i32 to vector<8x512xi32>
    %56 = arith.cmpi sge, %22, %55 : vector<8x512xi32>
    %57 = arith.select %56, %54, %23 : vector<8x512xi1>, vector<8x512xf32>
    %c48 = arith.constant 48 : index
    %c0_26 = arith.constant 0 : index
    %58 = vector.load %arg6[%c48, %c0_26] : memref<324x512xf32, #tpu.memory_space<vmem>>, vector<8x512xf32>
    tpu.vector_store %arg6[%c48, %c0_26], %57 {strides = array<i32>} : memref<324x512xf32, #tpu.memory_space<vmem>>, vector<8x512xf32>,
    %c0_27 = arith.constant 0 : index
    %c7 = arith.constant 7 : index
    %59 = vector.load %arg5[%c0_27, %c7] : memref<8x551xf32, #tpu.memory_space<vmem>>, vector<8x512xf32>
    %c12_i32 = arith.constant 12 : i32
    %60 = vector.broadcast %c12_i32 : i32 to vector<8x512xi32>
    %61 = arith.cmpi sge, %22, %60 : vector<8x512xi32>
    %62 = arith.select %61, %59, %23 : vector<8x512xi1>, vector<8x512xf32>
    %c56 = arith.constant 56 : index
    %c0_28 = arith.constant 0 : index
    %63 = vector.load %arg6[%c56, %c0_28] : memref<324x512xf32, #tpu.memory_space<vmem>>, vector<8x512xf32>
    tpu.vector_store %arg6[%c56, %c0_28], %62 {strides = array<i32>} : memref<324x512xf32, #tpu.memory_space<vmem>>, vector<8x512xf32>,
    %c0_29 = arith.constant 0 : index
    %c8_30 = arith.constant 8 : index
    %64 = vector.load %arg5[%c0_29, %c8_30] : memref<8x551xf32, #tpu.memory_space<vmem>>, vector<8x512xf32>
    %c11_i32 = arith.constant 11 : i32
    %65 = vector.broadcast %c11_i32 : i32 to vector<8x512xi32>
    %66 = arith.cmpi sge, %22, %65 : vector<8x512xi32>
    %67 = arith.select %66, %64, %23 : vector<8x512xi1>, vector<8x512xf32>
    %c64 = arith.constant 64 : index
    %c0_31 = arith.constant 0 : index
    %68 = vector.load %arg6[%c64, %c0_31] : memref<324x512xf32, #tpu.memory_space<vmem>>, vector<8x512xf32>
    tpu.vector_store %arg6[%c64, %c0_31], %67 {strides = array<i32>} : memref<324x512xf32, #tpu.memory_space<vmem>>, vector<8x512xf32>,
    %c0_32 = arith.constant 0 : index
    %c9 = arith.constant 9 : index
    %69 = vector.load %arg5[%c0_32, %c9] : memref<8x551xf32, #tpu.memory_space<vmem>>, vector<8x512xf32>
    %c10_i32 = arith.constant 10 : i32
    %70 = vector.broadcast %c10_i32 : i32 to vector<8x512xi32>
    %71 = arith.cmpi sge, %22, %70 : vector<8x512xi32>
    %72 = arith.select %71, %69, %23 : vector<8x512xi1>, vector<8x512xf32>
    %c72 = arith.constant 72 : index
    %c0_33 = arith.constant 0 : index
    %73 = vector.load %arg6[%c72, %c0_33] : memref<324x512xf32, #tpu.memory_space<vmem>>, vector<8x512xf32>
    tpu.vector_store %arg6[%c72, %c0_33], %72 {strides = array<i32>} : memref<324x512xf32, #tpu.memory_space<vmem>>, vector<8x512xf32>,
    %c0_34 = arith.constant 0 : index
    %c10 = arith.constant 10 : index
    %74 = vector.load %arg5[%c0_34, %c10] : memref<8x551xf32, #tpu.memory_space<vmem>>, vector<8x512xf32>
    %c9_i32 = arith.constant 9 : i32
    %75 = vector.broadcast %c9_i32 : i32 to vector<8x512xi32>
    %76 = arith.cmpi sge, %22, %75 : vector<8x512xi32>
    %77 = arith.select %76, %74, %23 : vector<8x512xi1>, vector<8x512xf32>
    %c80 = arith.constant 80 : index
    %c0_35 = arith.constant 0 : index
    %78 = vector.load %arg6[%c80, %c0_35] : memref<324x512xf32, #tpu.memory_space<vmem>>, vector<8x512xf32>
    tpu.vector_store %arg6[%c80, %c0_35], %77 {strides = array<i32>} : memref<324x512xf32, #tpu.memory_space<vmem>>, vector<8x512xf32>,
    %c0_36 = arith.constant 0 : index
    %c11 = arith.constant 11 : index
    %79 = vector.load %arg5[%c0_36, %c11] : memref<8x551xf32, #tpu.memory_space<vmem>>, vector<8x512xf32>
    %c8_i32 = arith.constant 8 : i32
    %80 = vector.broadcast %c8_i32 : i32 to vector<8x512xi32>
    %81 = arith.cmpi sge, %22, %80 : vector<8x512xi32>
    %82 = arith.select %81, %79, %23 : vector<8x512xi1>, vector<8x512xf32>
    %c88 = arith.constant 88 : index
    %c0_37 = arith.constant 0 : index
    %83 = vector.load %arg6[%c88, %c0_37] : memref<324x512xf32, #tpu.memory_space<vmem>>, vector<8x512xf32>
    tpu.vector_store %arg6[%c88, %c0_37], %82 {strides = array<i32>} : memref<324x512xf32, #tpu.memory_space<vmem>>, vector<8x512xf32>,
    %c0_38 = arith.constant 0 : index
    %c12 = arith.constant 12 : index
    %84 = vector.load %arg5[%c0_38, %c12] : memref<8x551xf32, #tpu.memory_space<vmem>>, vector<8x512xf32>
    %c7_i32 = arith.constant 7 : i32
    %85 = vector.broadcast %c7_i32 : i32 to vector<8x512xi32>
    %86 = arith.cmpi sge, %22, %85 : vector<8x512xi32>
    %87 = arith.select %86, %84, %23 : vector<8x512xi1>, vector<8x512xf32>
    %c96 = arith.constant 96 : index
    %c0_39 = arith.constant 0 : index
    %88 = vector.load %arg6[%c96, %c0_39] : memref<324x512xf32, #tpu.memory_space<vmem>>, vector<8x512xf32>
    tpu.vector_store %arg6[%c96, %c0_39], %87 {strides = array<i32>} : memref<324x512xf32, #tpu.memory_space<vmem>>, vector<8x512xf32>,
    %c0_40 = arith.constant 0 : index
    %c13 = arith.constant 13 : index
    %89 = vector.load %arg5[%c0_40, %c13] : memref<8x551xf32, #tpu.memory_space<vmem>>, vector<8x512xf32>
    %c6_i32 = arith.constant 6 : i32
    %90 = vector.broadcast %c6_i32 : i32 to vector<8x512xi32>
    %91 = arith.cmpi sge, %22, %90 : vector<8x512xi32>
    %92 = arith.select %91, %89, %23 : vector<8x512xi1>, vector<8x512xf32>
    %c104 = arith.constant 104 : index
    %c0_41 = arith.constant 0 : index
    %93 = vector.load %arg6[%c104, %c0_41] : memref<324x512xf32, #tpu.memory_space<vmem>>, vector<8x512xf32>
    tpu.vector_store %arg6[%c104, %c0_41], %92 {strides = array<i32>} : memref<324x512xf32, #tpu.memory_space<vmem>>, vector<8x512xf32>,
    %c0_42 = arith.constant 0 : index
    %c14 = arith.constant 14 : index
    %94 = vector.load %arg5[%c0_42, %c14] : memref<8x551xf32, #tpu.memory_space<vmem>>, vector<8x512xf32>
    %c5_i32 = arith.constant 5 : i32
    %95 = vector.broadcast %c5_i32 : i32 to vector<8x512xi32>
    %96 = arith.cmpi sge, %22, %95 : vector<8x512xi32>
    %97 = arith.select %96, %94, %23 : vector<8x512xi1>, vector<8x512xf32>
    %c112 = arith.constant 112 : index
    %c0_43 = arith.constant 0 : index
    %98 = vector.load %arg6[%c112, %c0_43] : memref<324x512xf32, #tpu.memory_space<vmem>>, vector<8x512xf32>
    tpu.vector_store %arg6[%c112, %c0_43], %97 {strides = array<i32>} : memref<324x512xf32, #tpu.memory_space<vmem>>, vector<8x512xf32>,
    %c0_44 = arith.constant 0 : index
    %c15 = arith.constant 15 : index
    %99 = vector.load %arg5[%c0_44, %c15] : memref<8x551xf32, #tpu.memory_space<vmem>>, vector<8x512xf32>
    %c4_i32 = arith.constant 4 : i32
    %100 = vector.broadcast %c4_i32 : i32 to vector<8x512xi32>
    %101 = arith.cmpi sge, %22, %100 : vector<8x512xi32>
    %102 = arith.select %101, %99, %23 : vector<8x512xi1>, vector<8x512xf32>
    %c120 = arith.constant 120 : index
    %c0_45 = arith.constant 0 : index
    %103 = vector.load %arg6[%c120, %c0_45] : memref<324x512xf32, #tpu.memory_space<vmem>>, vector<8x512xf32>
    tpu.vector_store %arg6[%c120, %c0_45], %102 {strides = array<i32>} : memref<324x512xf32, #tpu.memory_space<vmem>>, vector<8x512xf32>,
    %c0_46 = arith.constant 0 : index
    %c16_47 = arith.constant 16 : index
    %104 = vector.load %arg5[%c0_46, %c16_47] : memref<8x551xf32, #tpu.memory_space<vmem>>, vector<8x512xf32>
    %c3_i32 = arith.constant 3 : i32
    %105 = vector.broadcast %c3_i32 : i32 to vector<8x512xi32>
    %106 = arith.cmpi sge, %22, %105 : vector<8x512xi32>
    %107 = arith.select %106, %104, %23 : vector<8x512xi1>, vector<8x512xf32>
    %c128 = arith.constant 128 : index
    %c0_48 = arith.constant 0 : index
    %108 = vector.load %arg6[%c128, %c0_48] : memref<324x512xf32, #tpu.memory_space<vmem>>, vector<8x512xf32>
    tpu.vector_store %arg6[%c128, %c0_48], %107 {strides = array<i32>} : memref<324x512xf32, #tpu.memory_space<vmem>>, vector<8x512xf32>,
    %c0_49 = arith.constant 0 : index
    %c17 = arith.constant 17 : index
    %109 = vector.load %arg5[%c0_49, %c17] : memref<8x551xf32, #tpu.memory_space<vmem>>, vector<8x512xf32>
    %c2_i32 = arith.constant 2 : i32
    %110 = vector.broadcast %c2_i32 : i32 to vector<8x512xi32>
    %111 = arith.cmpi sge, %22, %110 : vector<8x512xi32>
    %112 = arith.select %111, %109, %23 : vector<8x512xi1>, vector<8x512xf32>
    %c136 = arith.constant 136 : index
    %c0_50 = arith.constant 0 : index
    %113 = vector.load %arg6[%c136, %c0_50] : memref<324x512xf32, #tpu.memory_space<vmem>>, vector<8x512xf32>
    tpu.vector_store %arg6[%c136, %c0_50], %112 {strides = array<i32>} : memref<324x512xf32, #tpu.memory_space<vmem>>, vector<8x512xf32>,
    %c0_51 = arith.constant 0 : index
    %c18 = arith.constant 18 : index
    %114 = vector.load %arg5[%c0_51, %c18] : memref<8x551xf32, #tpu.memory_space<vmem>>, vector<8x512xf32>
    %c1_i32_52 = arith.constant 1 : i32
    %115 = vector.broadcast %c1_i32_52 : i32 to vector<8x512xi32>
    %116 = arith.cmpi sge, %22, %115 : vector<8x512xi32>
    %117 = arith.select %116, %114, %23 : vector<8x512xi1>, vector<8x512xf32>
    %c144 = arith.constant 144 : index
    %c0_53 = arith.constant 0 : index
    %118 = vector.load %arg6[%c144, %c0_53] : memref<324x512xf32, #tpu.memory_space<vmem>>, vector<8x512xf32>
    tpu.vector_store %arg6[%c144, %c0_53], %117 {strides = array<i32>} : memref<324x512xf32, #tpu.memory_space<vmem>>, vector<8x512xf32>,
    %c0_54 = arith.constant 0 : index
    %c19_55 = arith.constant 19 : index
    %119 = vector.load %arg5[%c0_54, %c19_55] : memref<8x551xf32, #tpu.memory_space<vmem>>, vector<8x512xf32>
    %c152 = arith.constant 152 : index
    %c0_56 = arith.constant 0 : index
    %120 = vector.load %arg6[%c152, %c0_56] : memref<324x512xf32, #tpu.memory_space<vmem>>, vector<8x512xf32>
    tpu.vector_store %arg6[%c152, %c0_56], %119 {strides = array<i32>} : memref<324x512xf32, #tpu.memory_space<vmem>>, vector<8x512xf32>,
    %c0_57 = arith.constant 0 : index
    %c20 = arith.constant 20 : index
    %121 = vector.load %arg5[%c0_57, %c20] : memref<8x551xf32, #tpu.memory_space<vmem>>, vector<8x512xf32>
    %c63_i32 = arith.constant 63 : i32
    %122 = vector.broadcast %c63_i32 : i32 to vector<8x512xi32>
    %123 = arith.cmpi slt, %22, %122 : vector<8x512xi32>
    %124 = arith.select %123, %121, %23 : vector<8x512xi1>, vector<8x512xf32>
    %c160 = arith.constant 160 : index
    %c0_58 = arith.constant 0 : index
    %125 = vector.load %arg6[%c160, %c0_58] : memref<324x512xf32, #tpu.memory_space<vmem>>, vector<8x512xf32>
    tpu.vector_store %arg6[%c160, %c0_58], %124 {strides = array<i32>} : memref<324x512xf32, #tpu.memory_space<vmem>>, vector<8x512xf32>,
    %c0_59 = arith.constant 0 : index
    %c21 = arith.constant 21 : index
    %126 = vector.load %arg5[%c0_59, %c21] : memref<8x551xf32, #tpu.memory_space<vmem>>, vector<8x512xf32>
    %c62_i32 = arith.constant 62 : i32
    %127 = vector.broadcast %c62_i32 : i32 to vector<8x512xi32>
    %128 = arith.cmpi slt, %22, %127 : vector<8x512xi32>
    %129 = arith.select %128, %126, %23 : vector<8x512xi1>, vector<8x512xf32>
    %c168 = arith.constant 168 : index
    %c0_60 = arith.constant 0 : index
    %130 = vector.load %arg6[%c168, %c0_60] : memref<324x512xf32, #tpu.memory_space<vmem>>, vector<8x512xf32>
    tpu.vector_store %arg6[%c168, %c0_60], %129 {strides = array<i32>} : memref<324x512xf32, #tpu.memory_space<vmem>>, vector<8x512xf32>,
    %c0_61 = arith.constant 0 : index
    %c22 = arith.constant 22 : index
    %131 = vector.load %arg5[%c0_61, %c22] : memref<8x551xf32, #tpu.memory_space<vmem>>, vector<8x512xf32>
    %c61_i32 = arith.constant 61 : i32
    %132 = vector.broadcast %c61_i32 : i32 to vector<8x512xi32>
    %133 = arith.cmpi slt, %22, %132 : vector<8x512xi32>
    %134 = arith.select %133, %131, %23 : vector<8x512xi1>, vector<8x512xf32>
    %c176 = arith.constant 176 : index
    %c0_62 = arith.constant 0 : index
    %135 = vector.load %arg6[%c176, %c0_62] : memref<324x512xf32, #tpu.memory_space<vmem>>, vector<8x512xf32>
    tpu.vector_store %arg6[%c176, %c0_62], %134 {strides = array<i32>} : memref<324x512xf32, #tpu.memory_space<vmem>>, vector<8x512xf32>,
    %c0_63 = arith.constant 0 : index
    %c23 = arith.constant 23 : index
    %136 = vector.load %arg5[%c0_63, %c23] : memref<8x551xf32, #tpu.memory_space<vmem>>, vector<8x512xf32>
    %c60_i32 = arith.constant 60 : i32
    %137 = vector.broadcast %c60_i32 : i32 to vector<8x512xi32>
    %138 = arith.cmpi slt, %22, %137 : vector<8x512xi32>
    %139 = arith.select %138, %136, %23 : vector<8x512xi1>, vector<8x512xf32>
    %c184 = arith.constant 184 : index
    %c0_64 = arith.constant 0 : index
    %140 = vector.load %arg6[%c184, %c0_64] : memref<324x512xf32, #tpu.memory_space<vmem>>, vector<8x512xf32>
    tpu.vector_store %arg6[%c184, %c0_64], %139 {strides = array<i32>} : memref<324x512xf32, #tpu.memory_space<vmem>>, vector<8x512xf32>,
    %c0_65 = arith.constant 0 : index
    %c24_66 = arith.constant 24 : index
    %141 = vector.load %arg5[%c0_65, %c24_66] : memref<8x551xf32, #tpu.memory_space<vmem>>, vector<8x512xf32>
    %c59_i32 = arith.constant 59 : i32
    %142 = vector.broadcast %c59_i32 : i32 to vector<8x512xi32>
    %143 = arith.cmpi slt, %22, %142 : vector<8x512xi32>
    %144 = arith.select %143, %141, %23 : vector<8x512xi1>, vector<8x512xf32>
    %c192 = arith.constant 192 : index
    %c0_67 = arith.constant 0 : index
    %145 = vector.load %arg6[%c192, %c0_67] : memref<324x512xf32, #tpu.memory_space<vmem>>, vector<8x512xf32>
    tpu.vector_store %arg6[%c192, %c0_67], %144 {strides = array<i32>} : memref<324x512xf32, #tpu.memory_space<vmem>>, vector<8x512xf32>,
    %c0_68 = arith.constant 0 : index
    %c25 = arith.constant 25 : index
    %146 = vector.load %arg5[%c0_68, %c25] : memref<8x551xf32, #tpu.memory_space<vmem>>, vector<8x512xf32>
    %c58_i32 = arith.constant 58 : i32
    %147 = vector.broadcast %c58_i32 : i32 to vector<8x512xi32>
    %148 = arith.cmpi slt, %22, %147 : vector<8x512xi32>
    %149 = arith.select %148, %146, %23 : vector<8x512xi1>, vector<8x512xf32>
    %c200 = arith.constant 200 : index
    %c0_69 = arith.constant 0 : index
    %150 = vector.load %arg6[%c200, %c0_69] : memref<324x512xf32, #tpu.memory_space<vmem>>, vector<8x512xf32>
    tpu.vector_store %arg6[%c200, %c0_69], %149 {strides = array<i32>} : memref<324x512xf32, #tpu.memory_space<vmem>>, vector<8x512xf32>,
    %c0_70 = arith.constant 0 : index
    %c26 = arith.constant 26 : index
    %151 = vector.load %arg5[%c0_70, %c26] : memref<8x551xf32, #tpu.memory_space<vmem>>, vector<8x512xf32>
    %c57_i32 = arith.constant 57 : i32
    %152 = vector.broadcast %c57_i32 : i32 to vector<8x512xi32>
    %153 = arith.cmpi slt, %22, %152 : vector<8x512xi32>
    %154 = arith.select %153, %151, %23 : vector<8x512xi1>, vector<8x512xf32>
    %c208 = arith.constant 208 : index
    %c0_71 = arith.constant 0 : index
    %155 = vector.load %arg6[%c208, %c0_71] : memref<324x512xf32, #tpu.memory_space<vmem>>, vector<8x512xf32>
    tpu.vector_store %arg6[%c208, %c0_71], %154 {strides = array<i32>} : memref<324x512xf32, #tpu.memory_space<vmem>>, vector<8x512xf32>,
    %c0_72 = arith.constant 0 : index
    %c27 = arith.constant 27 : index
    %156 = vector.load %arg5[%c0_72, %c27] : memref<8x551xf32, #tpu.memory_space<vmem>>, vector<8x512xf32>
    %c56_i32 = arith.constant 56 : i32
    %157 = vector.broadcast %c56_i32 : i32 to vector<8x512xi32>
    %158 = arith.cmpi slt, %22, %157 : vector<8x512xi32>
    %159 = arith.select %158, %156, %23 : vector<8x512xi1>, vector<8x512xf32>
    %c216 = arith.constant 216 : index
    %c0_73 = arith.constant 0 : index
    %160 = vector.load %arg6[%c216, %c0_73] : memref<324x512xf32, #tpu.memory_space<vmem>>, vector<8x512xf32>
    tpu.vector_store %arg6[%c216, %c0_73], %159 {strides = array<i32>} : memref<324x512xf32, #tpu.memory_space<vmem>>, vector<8x512xf32>,
    %c0_74 = arith.constant 0 : index
    %c28 = arith.constant 28 : index
    %161 = vector.load %arg5[%c0_74, %c28] : memref<8x551xf32, #tpu.memory_space<vmem>>, vector<8x512xf32>
    %c55_i32 = arith.constant 55 : i32
    %162 = vector.broadcast %c55_i32 : i32 to vector<8x512xi32>
    %163 = arith.cmpi slt, %22, %162 : vector<8x512xi32>
    %164 = arith.select %163, %161, %23 : vector<8x512xi1>, vector<8x512xf32>
    %c224 = arith.constant 224 : index
    %c0_75 = arith.constant 0 : index
    %165 = vector.load %arg6[%c224, %c0_75] : memref<324x512xf32, #tpu.memory_space<vmem>>, vector<8x512xf32>
    tpu.vector_store %arg6[%c224, %c0_75], %164 {strides = array<i32>} : memref<324x512xf32, #tpu.memory_space<vmem>>, vector<8x512xf32>,
    %c0_76 = arith.constant 0 : index
    %c29 = arith.constant 29 : index
    %166 = vector.load %arg5[%c0_76, %c29] : memref<8x551xf32, #tpu.memory_space<vmem>>, vector<8x512xf32>
    %c54_i32 = arith.constant 54 : i32
    %167 = vector.broadcast %c54_i32 : i32 to vector<8x512xi32>
    %168 = arith.cmpi slt, %22, %167 : vector<8x512xi32>
    %169 = arith.select %168, %166, %23 : vector<8x512xi1>, vector<8x512xf32>
    %c232 = arith.constant 232 : index
    %c0_77 = arith.constant 0 : index
    %170 = vector.load %arg6[%c232, %c0_77] : memref<324x512xf32, #tpu.memory_space<vmem>>, vector<8x512xf32>
    tpu.vector_store %arg6[%c232, %c0_77], %169 {strides = array<i32>} : memref<324x512xf32, #tpu.memory_space<vmem>>, vector<8x512xf32>,
    %c0_78 = arith.constant 0 : index
    %c30 = arith.constant 30 : index
    %171 = vector.load %arg5[%c0_78, %c30] : memref<8x551xf32, #tpu.memory_space<vmem>>, vector<8x512xf32>
    %c53_i32 = arith.constant 53 : i32
    %172 = vector.broadcast %c53_i32 : i32 to vector<8x512xi32>
    %173 = arith.cmpi slt, %22, %172 : vector<8x512xi32>
    %174 = arith.select %173, %171, %23 : vector<8x512xi1>, vector<8x512xf32>
    %c240 = arith.constant 240 : index
    %c0_79 = arith.constant 0 : index
    %175 = vector.load %arg6[%c240, %c0_79] : memref<324x512xf32, #tpu.memory_space<vmem>>, vector<8x512xf32>
    tpu.vector_store %arg6[%c240, %c0_79], %174 {strides = array<i32>} : memref<324x512xf32, #tpu.memory_space<vmem>>, vector<8x512xf32>,
    %c0_80 = arith.constant 0 : index
    %c31 = arith.constant 31 : index
    %176 = vector.load %arg5[%c0_80, %c31] : memref<8x551xf32, #tpu.memory_space<vmem>>, vector<8x512xf32>
    %c52_i32 = arith.constant 52 : i32
    %177 = vector.broadcast %c52_i32 : i32 to vector<8x512xi32>
    %178 = arith.cmpi slt, %22, %177 : vector<8x512xi32>
    %179 = arith.select %178, %176, %23 : vector<8x512xi1>, vector<8x512xf32>
    %c248 = arith.constant 248 : index
    %c0_81 = arith.constant 0 : index
    %180 = vector.load %arg6[%c248, %c0_81] : memref<324x512xf32, #tpu.memory_space<vmem>>, vector<8x512xf32>
    tpu.vector_store %arg6[%c248, %c0_81], %179 {strides = array<i32>} : memref<324x512xf32, #tpu.memory_space<vmem>>, vector<8x512xf32>,
    %c0_82 = arith.constant 0 : index
    %c32_83 = arith.constant 32 : index
    %181 = vector.load %arg5[%c0_82, %c32_83] : memref<8x551xf32, #tpu.memory_space<vmem>>, vector<8x512xf32>
    %c51_i32 = arith.constant 51 : i32
    %182 = vector.broadcast %c51_i32 : i32 to vector<8x512xi32>
    %183 = arith.cmpi slt, %22, %182 : vector<8x512xi32>
    %184 = arith.select %183, %181, %23 : vector<8x512xi1>, vector<8x512xf32>
    %c256 = arith.constant 256 : index
    %c0_84 = arith.constant 0 : index
    %185 = vector.load %arg6[%c256, %c0_84] : memref<324x512xf32, #tpu.memory_space<vmem>>, vector<8x512xf32>
    tpu.vector_store %arg6[%c256, %c0_84], %184 {strides = array<i32>} : memref<324x512xf32, #tpu.memory_space<vmem>>, vector<8x512xf32>,
    %c0_85 = arith.constant 0 : index
    %c33 = arith.constant 33 : index
    %186 = vector.load %arg5[%c0_85, %c33] : memref<8x551xf32, #tpu.memory_space<vmem>>, vector<8x512xf32>
    %c50_i32 = arith.constant 50 : i32
    %187 = vector.broadcast %c50_i32 : i32 to vector<8x512xi32>
    %188 = arith.cmpi slt, %22, %187 : vector<8x512xi32>
    %189 = arith.select %188, %186, %23 : vector<8x512xi1>, vector<8x512xf32>
    %c264 = arith.constant 264 : index
    %c0_86 = arith.constant 0 : index
    %190 = vector.load %arg6[%c264, %c0_86] : memref<324x512xf32, #tpu.memory_space<vmem>>, vector<8x512xf32>
    tpu.vector_store %arg6[%c264, %c0_86], %189 {strides = array<i32>} : memref<324x512xf32, #tpu.memory_space<vmem>>, vector<8x512xf32>,
    %c0_87 = arith.constant 0 : index
    %c34 = arith.constant 34 : index
    %191 = vector.load %arg5[%c0_87, %c34] : memref<8x551xf32, #tpu.memory_space<vmem>>, vector<8x512xf32>
    %c49_i32 = arith.constant 49 : i32
    %192 = vector.broadcast %c49_i32 : i32 to vector<8x512xi32>
    %193 = arith.cmpi slt, %22, %192 : vector<8x512xi32>
    %194 = arith.select %193, %191, %23 : vector<8x512xi1>, vector<8x512xf32>
    %c272 = arith.constant 272 : index
    %c0_88 = arith.constant 0 : index
    %195 = vector.load %arg6[%c272, %c0_88] : memref<324x512xf32, #tpu.memory_space<vmem>>, vector<8x512xf32>
    tpu.vector_store %arg6[%c272, %c0_88], %194 {strides = array<i32>} : memref<324x512xf32, #tpu.memory_space<vmem>>, vector<8x512xf32>,
    %c0_89 = arith.constant 0 : index
    %c35 = arith.constant 35 : index
    %196 = vector.load %arg5[%c0_89, %c35] : memref<8x551xf32, #tpu.memory_space<vmem>>, vector<8x512xf32>
    %c48_i32 = arith.constant 48 : i32
    %197 = vector.broadcast %c48_i32 : i32 to vector<8x512xi32>
    %198 = arith.cmpi slt, %22, %197 : vector<8x512xi32>
    %199 = arith.select %198, %196, %23 : vector<8x512xi1>, vector<8x512xf32>
    %c280 = arith.constant 280 : index
    %c0_90 = arith.constant 0 : index
    %200 = vector.load %arg6[%c280, %c0_90] : memref<324x512xf32, #tpu.memory_space<vmem>>, vector<8x512xf32>
    tpu.vector_store %arg6[%c280, %c0_90], %199 {strides = array<i32>} : memref<324x512xf32, #tpu.memory_space<vmem>>, vector<8x512xf32>,
    %c0_91 = arith.constant 0 : index
    %c36 = arith.constant 36 : index
    %201 = vector.load %arg5[%c0_91, %c36] : memref<8x551xf32, #tpu.memory_space<vmem>>, vector<8x512xf32>
    %c47_i32 = arith.constant 47 : i32
    %202 = vector.broadcast %c47_i32 : i32 to vector<8x512xi32>
    %203 = arith.cmpi slt, %22, %202 : vector<8x512xi32>
    %204 = arith.select %203, %201, %23 : vector<8x512xi1>, vector<8x512xf32>
    %c288 = arith.constant 288 : index
    %c0_92 = arith.constant 0 : index
    %205 = vector.load %arg6[%c288, %c0_92] : memref<324x512xf32, #tpu.memory_space<vmem>>, vector<8x512xf32>
    tpu.vector_store %arg6[%c288, %c0_92], %204 {strides = array<i32>} : memref<324x512xf32, #tpu.memory_space<vmem>>, vector<8x512xf32>,
    %c0_93 = arith.constant 0 : index
    %c37 = arith.constant 37 : index
    %206 = vector.load %arg5[%c0_93, %c37] : memref<8x551xf32, #tpu.memory_space<vmem>>, vector<8x512xf32>
    %c46_i32 = arith.constant 46 : i32
    %207 = vector.broadcast %c46_i32 : i32 to vector<8x512xi32>
    %208 = arith.cmpi slt, %22, %207 : vector<8x512xi32>
    %209 = arith.select %208, %206, %23 : vector<8x512xi1>, vector<8x512xf32>
    %c296 = arith.constant 296 : index
    %c0_94 = arith.constant 0 : index
    %210 = vector.load %arg6[%c296, %c0_94] : memref<324x512xf32, #tpu.memory_space<vmem>>, vector<8x512xf32>
    tpu.vector_store %arg6[%c296, %c0_94], %209 {strides = array<i32>} : memref<324x512xf32, #tpu.memory_space<vmem>>, vector<8x512xf32>,
    %c0_95 = arith.constant 0 : index
    %c38 = arith.constant 38 : index
    %211 = vector.load %arg5[%c0_95, %c38] : memref<8x551xf32, #tpu.memory_space<vmem>>, vector<8x512xf32>
    %c45_i32 = arith.constant 45 : i32
    %212 = vector.broadcast %c45_i32 : i32 to vector<8x512xi32>
    %213 = arith.cmpi slt, %22, %212 : vector<8x512xi32>
    %214 = arith.select %213, %211, %23 : vector<8x512xi1>, vector<8x512xf32>
    %c304 = arith.constant 304 : index
    %c0_96 = arith.constant 0 : index
    %215 = vector.load %arg6[%c304, %c0_96] : memref<324x512xf32, #tpu.memory_space<vmem>>, vector<8x512xf32>
    tpu.vector_store %arg6[%c304, %c0_96], %214 {strides = array<i32>} : memref<324x512xf32, #tpu.memory_space<vmem>>, vector<8x512xf32>,
    %c0_97 = arith.constant 0 : index
    %c39 = arith.constant 39 : index
    %216 = vector.load %arg5[%c0_97, %c39] : memref<8x551xf32, #tpu.memory_space<vmem>>, vector<8x512xf32>
    %c44_i32 = arith.constant 44 : i32
    %217 = vector.broadcast %c44_i32 : i32 to vector<8x512xi32>
    %218 = arith.cmpi slt, %22, %217 : vector<8x512xi32>
    %219 = arith.select %218, %216, %23 : vector<8x512xi1>, vector<8x512xf32>
    %c312 = arith.constant 312 : index
    %c0_98 = arith.constant 0 : index
    %220 = vector.load %arg6[%c312, %c0_98] : memref<324x512xf32, #tpu.memory_space<vmem>>, vector<8x512xf32>
    tpu.vector_store %arg6[%c312, %c0_98], %219 {strides = array<i32>} : memref<324x512xf32, #tpu.memory_space<vmem>>, vector<8x512xf32>,
    %221 = vector.extract_strided_slice %1 {offsets = [0, 0], sizes = [4, 1], strides = [1, 1]} : vector<4x512xf32> to vector<4x1xf32>
    %222 = vector.extract_strided_slice %1 {offsets = [0, 0], sizes = [4, 511], strides = [1, 1]} : vector<4x512xf32> to vector<4x511xf32>
    %223 = tpu.concatenate %221, %222 in 1 : vector<4x1xf32>, vector<4x511xf32> -> vector<4x512xf32>
    %224 = vector.extract_strided_slice %1 {offsets = [0, 1], sizes = [4, 511], strides = [1, 1]} : vector<4x512xf32> to vector<4x511xf32>
    %225 = vector.extract_strided_slice %1 {offsets = [0, 511], sizes = [4, 1], strides = [1, 1]} : vector<4x512xf32> to vector<4x1xf32>
    %226 = tpu.concatenate %224, %225 in 1 : vector<4x511xf32>, vector<4x1xf32> -> vector<4x512xf32>
    %227 = tpu.iota {dimensions = array<i32: 1>} : vector<4x512xi32>
    %c64_i32_99 = arith.constant 64 : i32
    %c0_i32_100 = arith.constant 0 : i32
    %228 = arith.cmpi eq, %c64_i32_99, %c0_i32_100 : i32
    %c1_i32_101 = arith.constant 1 : i32
    %229 = arith.select %228, %c1_i32_101, %c64_i32_99 : i32
    %230 = vector.broadcast %229 : i32 to vector<4x512xi32>
    %231 = arith.remsi %227, %230 : vector<4x512xi32>
    %c0_i32_102 = arith.constant 0 : i32
    %232 = vector.broadcast %c0_i32_102 : i32 to vector<4x512xi32>
    %233 = arith.cmpi ne, %231, %232 : vector<4x512xi32>
    %c0_i32_103 = arith.constant 0 : i32
    %234 = vector.broadcast %c0_i32_103 : i32 to vector<4x512xi32>
    %235 = arith.cmpi slt, %231, %234 : vector<4x512xi32>
    %c0_i32_104 = arith.constant 0 : i32
    %236 = arith.cmpi slt, %229, %c0_i32_104 : i32
    %237 = vector.broadcast %236 : i1 to vector<4x512xi1>
    %238 = vector.broadcast %237 : vector<4x512xi1> to vector<4x512xi1>
    %239 = arith.xori %235, %238 : vector<4x512xi1>
    %240 = arith.andi %239, %233 : vector<4x512xi1>
    %241 = vector.broadcast %229 : i32 to vector<4x512xi32>
    %242 = arith.addi %231, %241 : vector<4x512xi32>
    %243 = arith.select %240, %242, %231 : vector<4x512xi1>, vector<4x512xi32>
    %c0_i32_105 = arith.constant 0 : i32
    %244 = vector.broadcast %c0_i32_105 : i32 to vector<4x512xi32>
    %245 = arith.cmpi eq, %243, %244 : vector<4x512xi32>
    %246 = arith.select %245, %1, %223 : vector<4x512xi1>, vector<4x512xf32>
    %c63_i32_106 = arith.constant 63 : i32
    %247 = vector.broadcast %c63_i32_106 : i32 to vector<4x512xi32>
    %248 = arith.cmpi eq, %243, %247 : vector<4x512xi32>
    %249 = arith.select %248, %1, %226 : vector<4x512xi1>, vector<4x512xf32>
    %250 = arith.maximumf %246, %1 : vector<4x512xf32>
    %251 = arith.maximumf %250, %249 : vector<4x512xf32>
    %c320 = arith.constant 320 : index
    %c0_107 = arith.constant 0 : index
    %252 = vector.load %arg6[%c320, %c0_107] : memref<324x512xf32, #tpu.memory_space<vmem>>, vector<4x512xf32>
    tpu.vector_store %arg6[%c320, %c0_107], %251 {strides = array<i32>} : memref<324x512xf32, #tpu.memory_space<vmem>>, vector<4x512xf32>,
    %c0_108 = arith.constant 0 : index
    %c0_109 = arith.constant 0 : index
    %253 = vector.load %arg6[%c0_108, %c0_109] : memref<324x512xf32, #tpu.memory_space<vmem>>, vector<324x512xf32>
    %cst_110 = arith.constant dense<0.000000e+00> : vector<32x512xf32>
    %254 = tpu.matmul %2, %253, %cst_110 {dimension_numbers = #tpu.dot_dimension_numbers<[1], [0], [0], [1], [0, 0, 1, 1], [], []>} : vector<32x324xf32>, vector<324x512xf32>, vector<32x512xf32> -> vector<32x512xf32>
    %cst_111 = arith.constant 0.000000e+00 : f32
    %255 = vector.broadcast %cst_111 : f32 to vector<32x512xf32>
    %256 = arith.maximumf %254, %255 : vector<32x512xf32>
    %c0_112 = arith.constant 0 : index
    %c0_113 = arith.constant 0 : index
    %c0_114 = arith.constant 0 : index
    %257 = vector.load %arg4[%c0_112, %c0_113, %c0_114] : memref<1x32x512xf32, #tpu.memory_space<vmem>>, vector<1x32x512xf32>
    %258 = vector.shape_cast %257 : vector<1x32x512xf32> to vector<32x512xf32>
    %259 = vector.shape_cast %256 : vector<32x512xf32> to vector<1x32x512xf32>
    tpu.vector_store %arg4[%c0_112, %c0_113, %c0_114], %259 {strides = array<i32>} : memref<1x32x512xf32, #tpu.memory_space<vmem>>, vector<1x32x512xf32>,
    return
  }
  func.func @transform_0(%arg0: i32) -> (i32, i32, i32) {
    %c0_i32 = arith.constant 0 : i32
    %c0_i32_0 = arith.constant 0 : i32
    %c0_i32_1 = arith.constant 0 : i32
    return %arg0, %c0_i32, %c0_i32_0 : i32, i32, i32
  }
  func.func @transform_1(%arg0: i32) -> (i32, i32) {
    %c0_i32 = arith.constant 0 : i32
    %c0_i32_0 = arith.constant 0 : i32
    %c0_i32_1 = arith.constant 0 : i32
    return %c0_i32, %c0_i32_0 : i32, i32
  }
  func.func @transform_2(%arg0: i32) -> (i32, i32) {
    %c0_i32 = arith.constant 0 : i32
    %c0_i32_0 = arith.constant 0 : i32
    %c0_i32_1 = arith.constant 0 : i32
    return %c0_i32, %c0_i32_0 : i32, i32
  }
  func.func @transform_3(%arg0: i32) -> (i32, i32, i32) {
    %c0_i32 = arith.constant 0 : i32
    %c0_i32_0 = arith.constant 0 : i32
    %c0_i32_1 = arith.constant 0 : i32
    return %arg0, %c0_i32, %c0_i32_0 : i32, i32, i32
  }
}

</mosaic_0001>

<llo_original>
// kernel: inception_module.1
$region0: #{inception_module.1}
  #allocation0 [shape = 'u32[]', space=smem, size = 0x4, offset = 0x4, fixed_abs, tag = 'smem constant byte address 0x4 - core index']
  #allocation1 [shape = 'u32[144,128]{1,0:T(1,128)}', space=vmem, size = 0x12000, scoped, tag = 'internal scratch']
  #allocation2 [shape = 'f32[8,551]{1,0:T(8,128)}', space=vmem, size = 0x5000, scoped, tag = 'scratch operand']
  #allocation3 [shape = 'f32[324,512]{1,0:T(8,128)}', space=vmem, size = 0xa4000, scoped, tag = 'scratch operand']
  %s0 = inlined_call_operand.vmem [shape: f32[2,4,512], index: 0, kind: input, shape index: {}]
  %s1 = inlined_call_operand.vmem [shape: f32[8,4], index: 1, kind: input, shape index: {}]
  %s2 = inlined_call_operand.vmem [shape: f32[32,324], index: 2, kind: input, shape index: {}]
  %s3 = inlined_call_operand.vmem [shape: f32[2,32,512], index: 3, kind: output, shape index: {}]
  %s4 = sld [smem:[#allocation0]]
  $region45: #{inception_module.1} parent=0
    _
  %s6 = ssub.s32 1, %s4
  %s7 = scalar_select 0, %s6, %s4
  loop: start=0, step=1, limit=4
  $region2: #{inception_module.1} parent=0 // loop_pre_header
    _
  $region3: #{inception_module.1} parent=0 // loop_header
    %s9 = sphi 0, %s13
    %p10 = scmp.ge.s32.totalorder %s9, 4
    %s19 = sphi 0, %s21
    %s22 = sphi 0, %s19
    %s23 = sphi 0, %s22
    %s39 = sphi 0, %s23
    %s43 = sphi 0, %s43
    %s45 = sphi 0, %s43
    %s46 = sphi 0, %s45
    %s60 = sphi 0, %s46
    %s64 = sphi 0, %s64
    %s66 = sphi 0, %s64
    %s67 = sphi 0, %s66
    %s81 = sphi 0, %s67
    %s87 = sphi 0, %s89
    %s90 = sphi 0, %s87
    %s91 = sphi 0, %s90
    %s107 = sphi 0, %s91
  $region4: #{inception_module.1} parent=0 // loop_header_branch
    %12 = sbr.rel (%p10) target = $region8
  $region5: #{inception_module.1} parent=0 // loop_body
    %s14 = ssub.s32 %s9, 1
    %s15 = ssub.s32 %s9, 2
    %s16 = sadd.s32 %s9, 1
    %s17 = ssub.s32 %s9, %s16
    %p18 = scmp.eq.s32.totalorder %s17, 0
    %s20 = sadd.s32 %s19, 1
    %s21 = scalar_select %p18, %s19, %s20
    %p24 = pneg %p18
    %p25 = scmp.eq.s32.totalorder %s9, 1
    %p26 = por %p24, %p25
    %p27 = scmp.ne.s32.totalorder %s19, %s22
    %p28 = scmp.eq.s32.totalorder %s9, 0
    %p29 = por %p27, %p28
    %p30 = scmp.ne.s32.totalorder %s19, %s22
    %p31 = scmp.eq.s32.totalorder %s14, 1
    %p32 = por %p30, %p31
    %p33 = scmp.ne.s32.totalorder %s22, %s23
    %p34 = scmp.eq.s32.totalorder %s14, 0
    %p35 = por %p33, %p34
    %p36 = scmp.ne.s32.totalorder %s22, %s23
    %p37 = scmp.eq.s32.totalorder %s15, 1
    %p38 = por %p36, %p37
    %p40 = scmp.ne.s32.totalorder %s23, %s39
    %p41 = scmp.eq.s32.totalorder %s15, 0
    %p42 = por %p40, %p41
    %s44 = sadd.s32 %s43, 1
    %p47 = scmp.eq.s32.totalorder %s9, 1
    %p48 = scmp.ne.s32.totalorder %s43, %s45
    %p49 = scmp.eq.s32.totalorder %s9, 0
    %p50 = por %p48, %p49
    %p51 = scmp.ne.s32.totalorder %s43, %s45
    %p52 = scmp.eq.s32.totalorder %s14, 1
    %p53 = por %p51, %p52
    %p54 = scmp.ne.s32.totalorder %s45, %s46
    %p55 = scmp.eq.s32.totalorder %s14, 0
    %p56 = por %p54, %p55
    %p57 = scmp.ne.s32.totalorder %s45, %s46
    %p58 = scmp.eq.s32.totalorder %s15, 1
    %p59 = por %p57, %p58
    %p61 = scmp.ne.s32.totalorder %s46, %s60
    %p62 = scmp.eq.s32.totalorder %s15, 0
    %p63 = por %p61, %p62
    %s65 = sadd.s32 %s64, 1
    %p68 = scmp.eq.s32.totalorder %s9, 1
    %p69 = scmp.ne.s32.totalorder %s64, %s66
    %p70 = scmp.eq.s32.totalorder %s9, 0
    %p71 = por %p69, %p70
    %p72 = scmp.ne.s32.totalorder %s64, %s66
    %p73 = scmp.eq.s32.totalorder %s14, 1
    %p74 = por %p72, %p73
    %p75 = scmp.ne.s32.totalorder %s66, %s67
    %p76 = scmp.eq.s32.totalorder %s14, 0
    %p77 = por %p75, %p76
    %p78 = scmp.ne.s32.totalorder %s66, %s67
    %p79 = scmp.eq.s32.totalorder %s15, 1
    %p80 = por %p78, %p79
    %p82 = scmp.ne.s32.totalorder %s67, %s81
    %p83 = scmp.eq.s32.totalorder %s15, 0
    %p84 = por %p82, %p83
    %s85 = ssub.s32 %s9, %s16
    %p86 = scmp.eq.s32.totalorder %s85, 0
    %s88 = sadd.s32 %s87, 1
    %s89 = scalar_select %p86, %s87, %s88
    %p92 = pneg %p86
    %p93 = scmp.eq.s32.totalorder %s9, 1
    %p94 = por %p92, %p93
    %p95 = scmp.ne.s32.totalorder %s87, %s90
    %p96 = scmp.eq.s32.totalorder %s9, 0
    %p97 = por %p95, %p96
    %p98 = scmp.ne.s32.totalorder %s87, %s90
    %p99 = scmp.eq.s32.totalorder %s14, 1
    %p100 = por %p98, %p99
    %p101 = scmp.ne.s32.totalorder %s90, %s91
    %p102 = scmp.eq.s32.totalorder %s14, 0
    %p103 = por %p101, %p102
    %p104 = scmp.ne.s32.totalorder %s90, %s91
    %p105 = scmp.eq.s32.totalorder %s15, 1
    %p106 = por %p104, %p105
    %p108 = scmp.ne.s32.totalorder %s91, %s107
    %p109 = scmp.eq.s32.totalorder %s15, 0
    %p110 = por %p108, %p109
    %p111 = scmp.le.s32.totalorder 1, %s9
    %p112 = scmp.lt.s32.totalorder %s9, 3
    %p113 = pnand %p111, %p112
    %p114 = pneg %p113
    // Predicated region
    $region9: #{inception_module.1} parent=5 // pred_check
      _
    $region10: #{inception_module.1} parent=5 // pred_check_branch
      %116 = sbr.rel (%p113) target = $region12
    $region11: #{inception_module.1} parent=5 // pred_region
      %s117 = ssub.s32 %s9, 1
      // Predicated region
      $region13: #{inception_module.1} parent=11 // pred_check
        %p118 = pneg %p56
      $region14: #{inception_module.1} parent=11 // pred_check_branch
        %120 = sbr.rel (%p118) target = $region16
      $region15: #{inception_module.1} parent=11 // pred_region
        _
      $region16: #{inception_module.1} parent=11 // pred_fallthru
        _
      // Predicated region
      $region17: #{inception_module.1} parent=11 // pred_check
        %p121 = pneg %p77
      $region18: #{inception_module.1} parent=11 // pred_check_branch
        %123 = sbr.rel (%p121) target = $region20
      $region19: #{inception_module.1} parent=11 // pred_region
        _
      $region20: #{inception_module.1} parent=11 // pred_fallthru
        _
    $region12: #{inception_module.1} parent=5 // pred_fallthru
      _
    %p124 = scmp.lt.s32.totalorder %s9, 2
    // Predicated region
    $region21: #{inception_module.1} parent=5 // pred_check
      %p125 = pneg %p124
    $region22: #{inception_module.1} parent=5 // pred_check_branch
      %127 = sbr.rel (%p125) target = $region24
    $region23: #{inception_module.1} parent=5 // pred_region
      // Predicated region
      $region25: #{inception_module.1} parent=23 // pred_check
        %p128 = pneg %p29
      $region26: #{inception_module.1} parent=23 // pred_check_branch
        %130 = sbr.rel (%p128) target = $region28
      $region27: #{inception_module.1} parent=23 // pred_region
        %p131 = scmp.lt.s32.totalorder %s9, 1
        %s132 = scalar_select %p131, %s9, 1
        %s133 = smul.addr %s132, 4
        %s134 = smul.addr %s133, 4
        %s135 = scalar_lea.vmem %s0, %s134
      $region28: #{inception_module.1} parent=23 // pred_fallthru
        _
    $region24: #{inception_module.1} parent=5 // pred_fallthru
      _
    %p136 = scmp.le.s32.totalorder 1, %s9
    %p137 = scmp.lt.s32.totalorder %s9, 3
    %p138 = pnand %p136, %p137
    %p139 = pneg %p138
    // Predicated region
    $region29: #{inception_module.1} parent=5 // pred_check
      _
    $region30: #{inception_module.1} parent=5 // pred_check_branch
      %141 = sbr.rel (%p138) target = $region32
    $region31: #{inception_module.1} parent=5 // pred_region
      %s142 = ssub.s32 %s9, 1
      %p143 = scmp.lt.s32.totalorder %s14, 1
      %s144 = scalar_select %p143, %s14, 1
      %s145 = smul.addr %s144, 4
      %s146 = smul.addr %s145, 4
      %s147 = scalar_lea.vmem %s0, %s146
      %p148 = pneg %p35
      %p149 = pneg %p32
      %p150 = pneg %p56
      %p151 = pneg %p53
      %p152 = pneg %p77
      %p153 = pneg %p74
      %p154 = pneg %p103
      %p155 = pneg %p100
      %p156 = scmp.lt.s32.totalorder %s14, 1
      %s157 = scalar_select %p156, %s14, 1
      %s158 = smul.addr %s157, 16
      %s159 = smul.addr %s158, 8
      %s160 = scalar_lea.vmem %s3, %s159
      %p161 = scmp.lt.s32.totalorder %s14, 1
      %s162 = scalar_select %p161, %s14, 1
      %s163 = smul.addr %s162, 4
      %s164 = smul.addr %s163, 4
      %s165 = scalar_lea.vmem %s0, %s164
      %p166 = scmp.lt.s32.totalorder %s14, 1
      %s167 = scalar_select %p166, %s14, 1
      %s168 = smul.addr %s167, 16
      %s169 = smul.addr %s168, 8
      %s170 = scalar_lea.vmem %s3, %s169
      %v171 = vld [vmem:[%s165] sm:$0xff]
      %v172 = vld [vmem:[%s165 + $0x8] sm:$0xff]
      %v173 = vld [vmem:[%s2] sm:$0xff]
      %v174 = vld [vmem:[%s2 + $0x8] sm:$0xff]
      %v175 = vld [vmem:[%s2 + $0x10] sm:$0xff]
      %v176 = vld [vmem:[%s2 + $0x18] sm:$0xff]
      %v177 = vld [vmem:[%s2 + $0x20] sm:$0xff]
      %v178 = vld [vmem:[%s2 + $0x28] sm:$0xff]
      %v179 = vld [vmem:[%s2 + $0x30] sm:$0xff]
      %v180 = vld [vmem:[%s2 + $0x38] sm:$0xff]
      %v181 = vld [vmem:[%s2 + $0x40] sm:$0xff]
      %v182 = vld [vmem:[%s2 + $0x48] sm:$0xff]
      %v183 = vld [vmem:[%s2 + $0x50] sm:$0xff]
      %v184 = vld [vmem:[%s2 + $0x58] sm:$0xff]
      %v185 = vld [vmem:[%s1] sm:$0xff]
      %v188 = vcombine.high %v171, %v171
      %v189 = vcombine.high %v172, %v172
      %vm190 = vcmask 31744
      %v192 = vsel %vm190, %v185, 0
      %vm194 = vcmask 1043456
      %v195 = vsel %vm194, %v171, 0
      %v197 = vsel %vm194, %v188, 0
      %v199 = vsel %vm194, %v172, 0
      %v201 = vsel %vm194, %v189, 0
      %203 = vmatprep.subr.mxu0 0.0
      %204 = vmatpush1.msra.mxu0 0.0
      %205 = vmatprep.subr.mxu0 0.0
      %206 = vmatpush1.msra.mxu0 0.0
      %207 = vmatprep.subr.mxu0 0.0
      %208 = vmatpush1.msra.mxu0 0.0
      %209 = vmatprep.subr.mxu0 0.0
      %210 = vmatpush1.msra.mxu0 0.0
      %211 = vmatprep.subr.mxu0 0.0
      %212 = vmatpush1.msra.mxu0 0.0
      %213 = vmatprep.subr.mxu0 0.0
      %214 = vmatpush1.msra.mxu0 0.0
      %215 = vmatprep.subr.mxu0 0.0
      %216 = vmatpush1.msra.mxu0 0.0
      %217 = vmatprep.subr.mxu0 0.0
      %218 = vmatpush1.msra.mxu0 0.0
      %219 = vmatprep.subr.mxu0 0.0
      %220 = vmatpush1.msra.mxu0 0.0
      %221 = vmatprep.subr.mxu0 0.0
      %222 = vmatpush1.msra.mxu0 0.0
      %223 = vmatprep.subr.mxu0 0.0
      %224 = vmatpush1.msra.mxu0 0.0
      %225 = vmatprep.subr.mxu0 0.0
      %226 = vmatpush1.msra.mxu0 0.0
      %227 = vmatprep.subr.mxu0 0.0
      %228 = vmatpush1.msra.mxu0 0.0
      %229 = vmatprep.subr.mxu0 0.0
      %230 = vmatpush1.msra.mxu0 0.0
      %231 = vmatprep.subr.mxu0 0.0
      %232 = vmatpush1.msra.mxu0 0.0
      %233 = vmatprep.subr.mxu0 %v197
      %234 = vmatpush1.msra.mxu0 %v195
      %235 = vmatprep.subr.mxu0 0.0
      %236 = vmatpush2.msra.mxu0 0.0
      %237 = vmatprep.subr.mxu0 0.0
      %238 = vmatpush2.msra.mxu0 0.0
      %239 = vmatprep.subr.mxu0 0.0
      %240 = vmatpush2.msra.mxu0 0.0
      %241 = vmatprep.subr.mxu0 0.0
      %242 = vmatpush2.msra.mxu0 0.0
      %243 = vmatprep.subr.mxu0 0.0
      %244 = vmatpush2.msra.mxu0 0.0
      %245 = vmatprep.subr.mxu0 0.0
      %246 = vmatpush2.msra.mxu0 0.0
      %247 = vmatprep.subr.mxu0 0.0
      %248 = vmatpush2.msra.mxu0 0.0
      %249 = vmatprep.subr.mxu0 0.0
      %250 = vmatpush2.msra.mxu0 0.0
      %251 = vmatprep.subr.mxu0 0.0
      %252 = vmatpush2.msra.mxu0 0.0
      %253 = vmatprep.subr.mxu0 0.0
      %254 = vmatpush2.msra.mxu0 0.0
      %255 = vmatprep.subr.mxu0 0.0
      %256 = vmatpush2.msra.mxu0 0.0
      %257 = vmatprep.subr.mxu0 0.0
      %258 = vmatpush2.msra.mxu0 0.0
      %259 = vmatprep.subr.mxu0 0.0
      %260 = vmatpush2.msra.mxu0 0.0
      %261 = vmatprep.subr.mxu0 0.0
      %262 = vmatpush2.msra.mxu0 0.0
      %263 = vmatprep.subr.mxu0 0.0
      %264 = vmatpush2.msra.mxu0 0.0
      %265 = vmatprep.subr.mxu0 0.0
      %266 = vmatpush2.msra.mxu0 0.0
      %267 = vmatprep.mubr.f32.mxu0 0.0
      %268 = vmatmul.mubr.f32.gmra.mxu0 %v192
      %v269 = vpop.f32.mrf.mxu0
      %v270 = vadd.f32 0.0, %v269
      %v271 = vpop.f32.mrf.mxu0
      %v272 = vadd.f32 0.0, %v271
      %273 = vdwg.mxu0
      %274 = vmatprep.subr.mxu0 0.0
      %275 = vmatpush1.msra.mxu0 0.0
      %276 = vmatprep.subr.mxu0 0.0
      %277 = vmatpush1.msra.mxu0 0.0
      %278 = vmatprep.subr.mxu0 0.0
      %279 = vmatpush1.msra.mxu0 0.0
      %280 = vmatprep.subr.mxu0 0.0
      %281 = vmatpush1.msra.mxu0 0.0
      %282 = vmatprep.subr.mxu0 0.0
      %283 = vmatpush1.msra.mxu0 0.0
      %284 = vmatprep.subr.mxu0 0.0
      %285 = vmatpush1.msra.mxu0 0.0
      %286 = vmatprep.subr.mxu0 0.0
      %287 = vmatpush1.msra.mxu0 0.0
      %288 = vmatprep.subr.mxu0 0.0
      %289 = vmatpush1.msra.mxu0 0.0
      %290 = vmatprep.subr.mxu0 0.0
      %291 = vmatpush1.msra.mxu0 0.0
      %292 = vmatprep.subr.mxu0 0.0
      %293 = vmatpush1.msra.mxu0 0.0
      %294 = vmatprep.subr.mxu0 0.0
      %295 = vmatpush1.msra.mxu0 0.0
      %296 = vmatprep.subr.mxu0 0.0
      %297 = vmatpush1.msra.mxu0 0.0
      %298 = vmatprep.subr.mxu0 0.0
      %299 = vmatpush1.msra.mxu0 0.0
      %300 = vmatprep.subr.mxu0 0.0
      %301 = vmatpush1.msra.mxu0 0.0
      %302 = vmatprep.subr.mxu0 0.0
      %303 = vmatpush1.msra.mxu0 0.0
      %304 = vmatprep.subr.mxu0 %v201
      %305 = vmatpush1.msra.mxu0 %v199
      %306 = vmatprep.subr.mxu0 0.0
      %307 = vmatpush2.msra.mxu0 0.0
      %308 = vmatprep.subr.mxu0 0.0
      %309 = vmatpush2.msra.mxu0 0.0
      %310 = vmatprep.subr.mxu0 0.0
      %311 = vmatpush2.msra.mxu0 0.0
      %312 = vmatprep.subr.mxu0 0.0
      %313 = vmatpush2.msra.mxu0 0.0
      %314 = vmatprep.subr.mxu0 0.0
      %315 = vmatpush2.msra.mxu0 0.0
      %316 = vmatprep.subr.mxu0 0.0
      %317 = vmatpush2.msra.mxu0 0.0
      %318 = vmatprep.subr.mxu0 0.0
      %319 = vmatpush2.msra.mxu0 0.0
      %320 = vmatprep.subr.mxu0 0.0
      %321 = vmatpush2.msra.mxu0 0.0
      %322 = vmatprep.subr.mxu0 0.0
      %323 = vmatpush2.msra.mxu0 0.0
      %324 = vmatprep.subr.mxu0 0.0
      %325 = vmatpush2.msra.mxu0 0.0
      %326 = vmatprep.subr.mxu0 0.0
      %327 = vmatpush2.msra.mxu0 0.0
      %328 = vmatprep.subr.mxu0 0.0
      %329 = vmatpush2.msra.mxu0 0.0
      %330 = vmatprep.subr.mxu0 0.0
      %331 = vmatpush2.msra.mxu0 0.0
      %332 = vmatprep.subr.mxu0 0.0
      %333 = vmatpush2.msra.mxu0 0.0
      %334 = vmatprep.subr.mxu0 0.0
      %335 = vmatpush2.msra.mxu0 0.0
      %336 = vmatprep.subr.mxu0 0.0
      %337 = vmatpush2.msra.mxu0 0.0
      %338 = vmatprep.mubr.f32.mxu0 0.0
      %339 = vmatmul.mubr.f32.gmra.mxu0 %v192
      %v340 = vpop.f32.mrf.mxu0
      %v341 = vadd.f32 0.0, %v340
      %v342 = vpop.f32.mrf.mxu0
      %v343 = vadd.f32 0.0, %v342
      %344 = vdwg.mxu0
      %349 = vrot.lane.b32.xlu0 %v270, 19
      %v350 = vpop.permute.xlu0 %349
      %351 = vrot.lane.b32.xlu0 %v272, 19
      %v352 = vpop.permute.xlu0 %351
      %353 = vrot.lane.b32.xlu0 %v341, 19
      %v354 = vpop.permute.xlu0 %353
      %355 = vrot.lane.b32.xlu0 %v343, 19
      %v356 = vpop.permute.xlu0 %355
      %vm357 = vcmask 154624
      %v358 = vsel %vm357, %v350, %v352
      %v359 = vsel %vm357, %v352, %v354
      %v360 = vsel %vm357, %v354, %v356
      %vm366 = vcmask 1047704
      %367 = vst.msk [vmem:[#allocation2] sm:$0xff] %vm366, %v350
      %368 = vst [vmem:[#allocation2 + $0x8] sm:$0xff] %v358
      %369 = vst [vmem:[#allocation2 + $0x10] sm:$0xff] %v359
      %370 = vst [vmem:[#allocation2 + $0x18] sm:$0xff] %v360
      %371 = vst.msk [vmem:[#allocation2 + $0x20] sm:$0xff] %vm357, %v356
      %v372 = vlaneseq
      %v373 = vand.u32 %v372, 127
      %v374 = vadd.s32 %v373, 128
      %v375 = vadd.s32 %v373, 256
      %v376 = vadd.s32 %v373, 384
      %vm377 = vcmp.lt.s32.totalorder %v373, 0
      %v378 = vsub.s32 0, %v373
      %v379 = vsel %vm377, %v378, %v373
      %v380 = vshrl.u32 %v379, 6
      %v381 = vand.u32 %v379, 63
      %v382 = vsub.s32 0, %v381
      %v383 = vsel %vm377, %v382, %v381
      %vm384 = vcmp.lt.s32.totalorder %v374, 0
      %v385 = vsub.s32 0, %v374
      %v386 = vsel %vm384, %v385, %v374
      %v387 = vshrl.u32 %v386, 6
      %v388 = vand.u32 %v386, 63
      %v389 = vsub.s32 0, %v388
      %v390 = vsel %vm384, %v389, %v388
      %vm391 = vcmp.lt.s32.totalorder %v375, 0
      %v392 = vsub.s32 0, %v375
      %v393 = vsel %vm391, %v392, %v375
      %v394 = vshrl.u32 %v393, 6
      %v395 = vand.u32 %v393, 63
      %v396 = vsub.s32 0, %v395
      %v397 = vsel %vm391, %v396, %v395
      %vm398 = vcmp.lt.s32.totalorder %v376, 0
      %v399 = vsub.s32 0, %v376
      %v400 = vsel %vm398, %v399, %v376
      %v401 = vshrl.u32 %v400, 6
      %v402 = vand.u32 %v400, 63
      %v403 = vsub.s32 0, %v402
      %v404 = vsel %vm398, %v403, %v402
      %vm405 = vcmp.ne.s32.totalorder %v383, 0
      %vm406 = vcmp.ne.s32.totalorder %v390, 0
      %vm407 = vcmp.ne.s32.totalorder %v397, 0
      %vm408 = vcmp.ne.s32.totalorder %v404, 0
      %vm409 = vcmp.lt.s32.totalorder %v383, 0
      %vm410 = vcmp.lt.s32.totalorder %v390, 0
      %vm411 = vcmp.lt.s32.totalorder %v397, 0
      %vm412 = vcmp.lt.s32.totalorder %v404, 0
      %vm413 = vmand %vm409, %vm405
      %vm414 = vmand %vm410, %vm406
      %vm415 = vmand %vm411, %vm407
      %vm416 = vmand %vm412, %vm408
      %v417 = vadd.s32 %v383, 64
      %v418 = vadd.s32 %v390, 64
      %v419 = vadd.s32 %v397, 64
      %v420 = vadd.s32 %v404, 64
      %v421 = vsel %vm413, %v417, %v383
      %v422 = vsel %vm414, %v418, %v390
      %v423 = vsel %vm415, %v419, %v397
      %v424 = vsel %vm416, %v420, %v404
      %v425 = vld [vmem:[#allocation2] sm:$0xff]
      %v426 = vld [vmem:[#allocation2 + $0x8] sm:$0xff]
      %v427 = vld [vmem:[#allocation2 + $0x10] sm:$0xff]
      %v428 = vld [vmem:[#allocation2 + $0x18] sm:$0xff]
      %vm429 = vcmp.ge.s32.totalorder %v421, 19
      %vm430 = vcmp.ge.s32.totalorder %v422, 19
      %vm431 = vcmp.ge.s32.totalorder %v423, 19
      %vm432 = vcmp.ge.s32.totalorder %v424, 19
      %v433 = vsel %vm429, %v425, 0.0
      %v434 = vsel %vm430, %v426, 0.0
      %v435 = vsel %vm431, %v427, 0.0
      %v436 = vsel %vm432, %v428, 0.0
      %437 = vst [vmem:[#allocation3] sm:$0xff] %v433
      %438 = vst [vmem:[#allocation3 + $0x8] sm:$0xff] %v434
      %439 = vst [vmem:[#allocation3 + $0x10] sm:$0xff] %v435
      %440 = vst [vmem:[#allocation3 + $0x18] sm:$0xff] %v436
      %v441 = vld [vmem:[#allocation2] sm:$0xff]
      %v442 = vld [vmem:[#allocation2 + $0x8] sm:$0xff]
      %v443 = vld [vmem:[#allocation2 + $0x10] sm:$0xff]
      %v444 = vld [vmem:[#allocation2 + $0x18] sm:$0xff]
      %v445 = vld [vmem:[#allocation2 + $0x20] sm:$0xff]
      %vm446 = vcmp.ge.s32.totalorder %v421, 18
      %vm447 = vcmp.ge.s32.totalorder %v422, 18
      %vm448 = vcmp.ge.s32.totalorder %v423, 18
      %vm449 = vcmp.ge.s32.totalorder %v424, 18
      %455 = vrot.lane.b32.xlu0 %v441, 127
      %v456 = vpop.permute.xlu0 %455
      %457 = vrot.lane.b32.xlu0 %v442, 127
      %v458 = vpop.permute.xlu0 %457
      %459 = vrot.lane.b32.xlu0 %v443, 127
      %v460 = vpop.permute.xlu0 %459
      %461 = vrot.lane.b32.xlu0 %v444, 127
      %v462 = vpop.permute.xlu0 %461
      %463 = vrot.lane.b32.xlu0 %v445, 127
      %v464 = vpop.permute.xlu0 %463
      %vm465 = vcmask 1039360
      %v466 = vsel %vm465, %v456, %v458
      %v467 = vsel %vm465, %v458, %v460
      %v468 = vsel %vm465, %v460, %v462
      %v469 = vsel %vm465, %v462, %v464
      %v474 = vsel %vm446, %v466, 0.0
      %v475 = vsel %vm447, %v467, 0.0
      %v476 = vsel %vm448, %v468, 0.0
      %v477 = vsel %vm449, %v469, 0.0
      %478 = vst [vmem:[#allocation3 + $0x20] sm:$0xff] %v474
      %479 = vst [vmem:[#allocation3 + $0x28] sm:$0xff] %v475
      %480 = vst [vmem:[#allocation3 + $0x30] sm:$0xff] %v476
      %481 = vst [vmem:[#allocation3 + $0x38] sm:$0xff] %v477
      %v482 = vld [vmem:[#allocation2] sm:$0xff]
      %v483 = vld [vmem:[#allocation2 + $0x8] sm:$0xff]
      %v484 = vld [vmem:[#allocation2 + $0x10] sm:$0xff]
      %v485 = vld [vmem:[#allocation2 + $0x18] sm:$0xff]
      %v486 = vld [vmem:[#allocation2 + $0x20] sm:$0xff]
      %vm487 = vcmp.ge.s32.totalorder %v421, 17
      %vm488 = vcmp.ge.s32.totalorder %v422, 17
      %vm489 = vcmp.ge.s32.totalorder %v423, 17
      %vm490 = vcmp.ge.s32.totalorder %v424, 17
      %496 = vrot.lane.b32.xlu0 %v482, 126
      %v497 = vpop.permute.xlu0 %496
      %498 = vrot.lane.b32.xlu0 %v483, 126
      %v499 = vpop.permute.xlu0 %498
      %500 = vrot.lane.b32.xlu0 %v484, 126
      %v501 = vpop.permute.xlu0 %500
      %502 = vrot.lane.b32.xlu0 %v485, 126
      %v503 = vpop.permute.xlu0 %502
      %504 = vrot.lane.b32.xlu0 %v486, 126
      %v505 = vpop.permute.xlu0 %504
      %vm506 = vcmask 1031168
      %v507 = vsel %vm506, %v497, %v499
      %v508 = vsel %vm506, %v499, %v501
      %v509 = vsel %vm506, %v501, %v503
      %v510 = vsel %vm506, %v503, %v505
      %v515 = vsel %vm487, %v507, 0.0
      %v516 = vsel %vm488, %v508, 0.0
      %v517 = vsel %vm489, %v509, 0.0
      %v518 = vsel %vm490, %v510, 0.0
      %519 = vst [vmem:[#allocation3 + $0x40] sm:$0xff] %v515
      %520 = vst [vmem:[#allocation3 + $0x48] sm:$0xff] %v516
      %521 = vst [vmem:[#allocation3 + $0x50] sm:$0xff] %v517
      %522 = vst [vmem:[#allocation3 + $0x58] sm:$0xff] %v518
      %v523 = vld [vmem:[#allocation2] sm:$0xff]
      %v524 = vld [vmem:[#allocation2 + $0x8] sm:$0xff]
      %v525 = vld [vmem:[#allocation2 + $0x10] sm:$0xff]
      %v526 = vld [vmem:[#allocation2 + $0x18] sm:$0xff]
      %v527 = vld [vmem:[#allocation2 + $0x20] sm:$0xff]
      %vm528 = vcmp.ge.s32.totalorder %v421, 16
      %vm529 = vcmp.ge.s32.totalorder %v422, 16
      %vm530 = vcmp.ge.s32.totalorder %v423, 16
      %vm531 = vcmp.ge.s32.totalorder %v424, 16
      %537 = vrot.lane.b32.xlu0 %v523, 125
      %v538 = vpop.permute.xlu0 %537
      %539 = vrot.lane.b32.xlu0 %v524, 125
      %v540 = vpop.permute.xlu0 %539
      %541 = vrot.lane.b32.xlu0 %v525, 125
      %v542 = vpop.permute.xlu0 %541
      %543 = vrot.lane.b32.xlu0 %v526, 125
      %v544 = vpop.permute.xlu0 %543
      %545 = vrot.lane.b32.xlu0 %v527, 125
      %v546 = vpop.permute.xlu0 %545
      %vm547 = vcmask 1022976
      %v548 = vsel %vm547, %v538, %v540
      %v549 = vsel %vm547, %v540, %v542
      %v550 = vsel %vm547, %v542, %v544
      %v551 = vsel %vm547, %v544, %v546
      %v556 = vsel %vm528, %v548, 0.0
      %v557 = vsel %vm529, %v549, 0.0
      %v558 = vsel %vm530, %v550, 0.0
      %v559 = vsel %vm531, %v551, 0.0
      %560 = vst [vmem:[#allocation3 + $0x60] sm:$0xff] %v556
      %561 = vst [vmem:[#allocation3 + $0x68] sm:$0xff] %v557
      %562 = vst [vmem:[#allocation3 + $0x70] sm:$0xff] %v558
      %563 = vst [vmem:[#allocation3 + $0x78] sm:$0xff] %v559
      %v564 = vld [vmem:[#allocation2] sm:$0xff]
      %v565 = vld [vmem:[#allocation2 + $0x8] sm:$0xff]
      %v566 = vld [vmem:[#allocation2 + $0x10] sm:$0xff]
      %v567 = vld [vmem:[#allocation2 + $0x18] sm:$0xff]
      %v568 = vld [vmem:[#allocation2 + $0x20] sm:$0xff]
      %vm569 = vcmp.ge.s32.totalorder %v421, 15
      %vm570 = vcmp.ge.s32.totalorder %v422, 15
      %vm571 = vcmp.ge.s32.totalorder %v423, 15
      %vm572 = vcmp.ge.s32.totalorder %v424, 15
      %578 = vrot.lane.b32.xlu0 %v564, 124
      %v579 = vpop.permute.xlu0 %578
      %580 = vrot.lane.b32.xlu0 %v565, 124
      %v581 = vpop.permute.xlu0 %580
      %582 = vrot.lane.b32.xlu0 %v566, 124
      %v583 = vpop.permute.xlu0 %582
      %584 = vrot.lane.b32.xlu0 %v567, 124
      %v585 = vpop.permute.xlu0 %584
      %586 = vrot.lane.b32.xlu0 %v568, 124
      %v587 = vpop.permute.xlu0 %586
      %vm588 = vcmask 1014784
      %v589 = vsel %vm588, %v579, %v581
      %v590 = vsel %vm588, %v581, %v583
      %v591 = vsel %vm588, %v583, %v585
      %v592 = vsel %vm588, %v585, %v587
      %v597 = vsel %vm569, %v589, 0.0
      %v598 = vsel %vm570, %v590, 0.0
      %v599 = vsel %vm571, %v591, 0.0
      %v600 = vsel %vm572, %v592, 0.0
      %601 = vst [vmem:[#allocation3 + $0x80] sm:$0xff] %v597
      %602 = vst [vmem:[#allocation3 + $0x88] sm:$0xff] %v598
      %603 = vst [vmem:[#allocation3 + $0x90] sm:$0xff] %v599
      %604 = vst [vmem:[#allocation3 + $0x98] sm:$0xff] %v600
      %v605 = vld [vmem:[#allocation2] sm:$0xff]
      %v606 = vld [vmem:[#allocation2 + $0x8] sm:$0xff]
      %v607 = vld [vmem:[#allocation2 + $0x10] sm:$0xff]
      %v608 = vld [vmem:[#allocation2 + $0x18] sm:$0xff]
      %v609 = vld [vmem:[#allocation2 + $0x20] sm:$0xff]
      %vm610 = vcmp.ge.s32.totalorder %v421, 14
      %vm611 = vcmp.ge.s32.totalorder %v422, 14
      %vm612 = vcmp.ge.s32.totalorder %v423, 14
      %vm613 = vcmp.ge.s32.totalorder %v424, 14
      %619 = vrot.lane.b32.xlu0 %v605, 123
      %v620 = vpop.permute.xlu0 %619
      %621 = vrot.lane.b32.xlu0 %v606, 123
      %v622 = vpop.permute.xlu0 %621
      %623 = vrot.lane.b32.xlu0 %v607, 123
      %v624 = vpop.permute.xlu0 %623
      %625 = vrot.lane.b32.xlu0 %v608, 123
      %v626 = vpop.permute.xlu0 %625
      %627 = vrot.lane.b32.xlu0 %v609, 123
      %v628 = vpop.permute.xlu0 %627
      %vm629 = vcmask 1006592
      %v630 = vsel %vm629, %v620, %v622
      %v631 = vsel %vm629, %v622, %v624
      %v632 = vsel %vm629, %v624, %v626
      %v633 = vsel %vm629, %v626, %v628
      %v638 = vsel %vm610, %v630, 0.0
      %v639 = vsel %vm611, %v631, 0.0
      %v640 = vsel %vm612, %v632, 0.0
      %v641 = vsel %vm613, %v633, 0.0
      %642 = vst [vmem:[#allocation3 + $0xa0] sm:$0xff] %v638
      %643 = vst [vmem:[#allocation3 + $0xa8] sm:$0xff] %v639
      %644 = vst [vmem:[#allocation3 + $0xb0] sm:$0xff] %v640
      %645 = vst [vmem:[#allocation3 + $0xb8] sm:$0xff] %v641
      %v646 = vld [vmem:[#allocation2] sm:$0xff]
      %v647 = vld [vmem:[#allocation2 + $0x8] sm:$0xff]
      %v648 = vld [vmem:[#allocation2 + $0x10] sm:$0xff]
      %v649 = vld [vmem:[#allocation2 + $0x18] sm:$0xff]
      %v650 = vld [vmem:[#allocation2 + $0x20] sm:$0xff]
      %vm651 = vcmp.ge.s32.totalorder %v421, 13
      %vm652 = vcmp.ge.s32.totalorder %v422, 13
      %vm653 = vcmp.ge.s32.totalorder %v423, 13
      %vm654 = vcmp.ge.s32.totalorder %v424, 13
      %660 = vrot.lane.b32.xlu0 %v646, 122
      %v661 = vpop.permute.xlu0 %660
      %662 = vrot.lane.b32.xlu0 %v647, 122
      %v663 = vpop.permute.xlu0 %662
      %664 = vrot.lane.b32.xlu0 %v648, 122
      %v665 = vpop.permute.xlu0 %664
      %666 = vrot.lane.b32.xlu0 %v649, 122
      %v667 = vpop.permute.xlu0 %666
      %668 = vrot.lane.b32.xlu0 %v650, 122
      %v669 = vpop.permute.xlu0 %668
      %vm670 = vcmask 998400
      %v671 = vsel %vm670, %v661, %v663
      %v672 = vsel %vm670, %v663, %v665
      %v673 = vsel %vm670, %v665, %v667
      %v674 = vsel %vm670, %v667, %v669
      %v679 = vsel %vm651, %v671, 0.0
      %v680 = vsel %vm652, %v672, 0.0
      %v681 = vsel %vm653, %v673, 0.0
      %v682 = vsel %vm654, %v674, 0.0
      %683 = vst [vmem:[#allocation3 + $0xc0] sm:$0xff] %v679
      %684 = vst [vmem:[#allocation3 + $0xc8] sm:$0xff] %v680
      %685 = vst [vmem:[#allocation3 + $0xd0] sm:$0xff] %v681
      %686 = vst [vmem:[#allocation3 + $0xd8] sm:$0xff] %v682
      %v687 = vld [vmem:[#allocation2] sm:$0xff]
      %v688 = vld [vmem:[#allocation2 + $0x8] sm:$0xff]
      %v689 = vld [vmem:[#allocation2 + $0x10] sm:$0xff]
      %v690 = vld [vmem:[#allocation2 + $0x18] sm:$0xff]
      %v691 = vld [vmem:[#allocation2 + $0x20] sm:$0xff]
      %vm692 = vcmp.ge.s32.totalorder %v421, 12
      %vm693 = vcmp.ge.s32.totalorder %v422, 12
      %vm694 = vcmp.ge.s32.totalorder %v423, 12
      %vm695 = vcmp.ge.s32.totalorder %v424, 12
      %701 = vrot.lane.b32.xlu0 %v687, 121
      %v702 = vpop.permute.xlu0 %701
      %703 = vrot.lane.b32.xlu0 %v688, 121
      %v704 = vpop.permute.xlu0 %703
      %705 = vrot.lane.b32.xlu0 %v689, 121
      %v706 = vpop.permute.xlu0 %705
      %707 = vrot.lane.b32.xlu0 %v690, 121
      %v708 = vpop.permute.xlu0 %707
      %709 = vrot.lane.b32.xlu0 %v691, 121
      %v710 = vpop.permute.xlu0 %709
      %vm711 = vcmask 990208
      %v712 = vsel %vm711, %v702, %v704
      %v713 = vsel %vm711, %v704, %v706
      %v714 = vsel %vm711, %v706, %v708
      %v715 = vsel %vm711, %v708, %v710
      %v720 = vsel %vm692, %v712, 0.0
      %v721 = vsel %vm693, %v713, 0.0
      %v722 = vsel %vm694, %v714, 0.0
      %v723 = vsel %vm695, %v715, 0.0
      %724 = vst [vmem:[#allocation3 + $0xe0] sm:$0xff] %v720
      %725 = vst [vmem:[#allocation3 + $0xe8] sm:$0xff] %v721
      %726 = vst [vmem:[#allocation3 + $0xf0] sm:$0xff] %v722
      %727 = vst [vmem:[#allocation3 + $0xf8] sm:$0xff] %v723
      %v728 = vld [vmem:[#allocation2] sm:$0xff]
      %v729 = vld [vmem:[#allocation2 + $0x8] sm:$0xff]
      %v730 = vld [vmem:[#allocation2 + $0x10] sm:$0xff]
      %v731 = vld [vmem:[#allocation2 + $0x18] sm:$0xff]
      %v732 = vld [vmem:[#allocation2 + $0x20] sm:$0xff]
      %vm733 = vcmp.ge.s32.totalorder %v421, 11
      %vm734 = vcmp.ge.s32.totalorder %v422, 11
      %vm735 = vcmp.ge.s32.totalorder %v423, 11
      %vm736 = vcmp.ge.s32.totalorder %v424, 11
      %742 = vrot.lane.b32.xlu0 %v728, 120
      %v743 = vpop.permute.xlu0 %742
      %744 = vrot.lane.b32.xlu0 %v729, 120
      %v745 = vpop.permute.xlu0 %744
      %746 = vrot.lane.b32.xlu0 %v730, 120
      %v747 = vpop.permute.xlu0 %746
      %748 = vrot.lane.b32.xlu0 %v731, 120
      %v749 = vpop.permute.xlu0 %748
      %750 = vrot.lane.b32.xlu0 %v732, 120
      %v751 = vpop.permute.xlu0 %750
      %vm752 = vcmask 982016
      %v753 = vsel %vm752, %v743, %v745
      %v754 = vsel %vm752, %v745, %v747
      %v755 = vsel %vm752, %v747, %v749
      %v756 = vsel %vm752, %v749, %v751
      %v761 = vsel %vm733, %v753, 0.0
      %v762 = vsel %vm734, %v754, 0.0
      %v763 = vsel %vm735, %v755, 0.0
      %v764 = vsel %vm736, %v756, 0.0
      %765 = vst [vmem:[#allocation3 + $0x100] sm:$0xff] %v761
      %766 = vst [vmem:[#allocation3 + $0x108] sm:$0xff] %v762
      %767 = vst [vmem:[#allocation3 + $0x110] sm:$0xff] %v763
      %768 = vst [vmem:[#allocation3 + $0x118] sm:$0xff] %v764
      %v769 = vld [vmem:[#allocation2] sm:$0xff]
      %v770 = vld [vmem:[#allocation2 + $0x8] sm:$0xff]
      %v771 = vld [vmem:[#allocation2 + $0x10] sm:$0xff]
      %v772 = vld [vmem:[#allocation2 + $0x18] sm:$0xff]
      %v773 = vld [vmem:[#allocation2 + $0x20] sm:$0xff]
      %vm774 = vcmp.ge.s32.totalorder %v421, 10
      %vm775 = vcmp.ge.s32.totalorder %v422, 10
      %vm776 = vcmp.ge.s32.totalorder %v423, 10
      %vm777 = vcmp.ge.s32.totalorder %v424, 10
      %783 = vrot.lane.b32.xlu0 %v769, 119
      %v784 = vpop.permute.xlu0 %783
      %785 = vrot.lane.b32.xlu0 %v770, 119
      %v786 = vpop.permute.xlu0 %785
      %787 = vrot.lane.b32.xlu0 %v771, 119
      %v788 = vpop.permute.xlu0 %787
      %789 = vrot.lane.b32.xlu0 %v772, 119
      %v790 = vpop.permute.xlu0 %789
      %791 = vrot.lane.b32.xlu0 %v773, 119
      %v792 = vpop.permute.xlu0 %791
      %vm793 = vcmask 973824
      %v794 = vsel %vm793, %v784, %v786
      %v795 = vsel %vm793, %v786, %v788
      %v796 = vsel %vm793, %v788, %v790
      %v797 = vsel %vm793, %v790, %v792
      %v802 = vsel %vm774, %v794, 0.0
      %v803 = vsel %vm775, %v795, 0.0
      %v804 = vsel %vm776, %v796, 0.0
      %v805 = vsel %vm777, %v797, 0.0
      %806 = vst [vmem:[#allocation3 + $0x120] sm:$0xff] %v802
      %807 = vst [vmem:[#allocation3 + $0x128] sm:$0xff] %v803
      %808 = vst [vmem:[#allocation3 + $0x130] sm:$0xff] %v804
      %809 = vst [vmem:[#allocation3 + $0x138] sm:$0xff] %v805
      %v810 = vld [vmem:[#allocation2] sm:$0xff]
      %v811 = vld [vmem:[#allocation2 + $0x8] sm:$0xff]
      %v812 = vld [vmem:[#allocation2 + $0x10] sm:$0xff]
      %v813 = vld [vmem:[#allocation2 + $0x18] sm:$0xff]
      %v814 = vld [vmem:[#allocation2 + $0x20] sm:$0xff]
      %vm815 = vcmp.ge.s32.totalorder %v421, 9
      %vm816 = vcmp.ge.s32.totalorder %v422, 9
      %vm817 = vcmp.ge.s32.totalorder %v423, 9
      %vm818 = vcmp.ge.s32.totalorder %v424, 9
      %824 = vrot.lane.b32.xlu0 %v810, 118
      %v825 = vpop.permute.xlu0 %824
      %826 = vrot.lane.b32.xlu0 %v811, 118
      %v827 = vpop.permute.xlu0 %826
      %828 = vrot.lane.b32.xlu0 %v812, 118
      %v829 = vpop.permute.xlu0 %828
      %830 = vrot.lane.b32.xlu0 %v813, 118
      %v831 = vpop.permute.xlu0 %830
      %832 = vrot.lane.b32.xlu0 %v814, 118
      %v833 = vpop.permute.xlu0 %832
      %vm834 = vcmask 965632
      %v835 = vsel %vm834, %v825, %v827
      %v836 = vsel %vm834, %v827, %v829
      %v837 = vsel %vm834, %v829, %v831
      %v838 = vsel %vm834, %v831, %v833
      %v843 = vsel %vm815, %v835, 0.0
      %v844 = vsel %vm816, %v836, 0.0
      %v845 = vsel %vm817, %v837, 0.0
      %v846 = vsel %vm818, %v838, 0.0
      %847 = vst [vmem:[#allocation3 + $0x140] sm:$0xff] %v843
      %848 = vst [vmem:[#allocation3 + $0x148] sm:$0xff] %v844
      %849 = vst [vmem:[#allocation3 + $0x150] sm:$0xff] %v845
      %850 = vst [vmem:[#allocation3 + $0x158] sm:$0xff] %v846
      %v851 = vld [vmem:[#allocation2] sm:$0xff]
      %v852 = vld [vmem:[#allocation2 + $0x8] sm:$0xff]
      %v853 = vld [vmem:[#allocation2 + $0x10] sm:$0xff]
      %v854 = vld [vmem:[#allocation2 + $0x18] sm:$0xff]
      %v855 = vld [vmem:[#allocation2 + $0x20] sm:$0xff]
      %vm856 = vcmp.ge.s32.totalorder %v421, 8
      %vm857 = vcmp.ge.s32.totalorder %v422, 8
      %vm858 = vcmp.ge.s32.totalorder %v423, 8
      %vm859 = vcmp.ge.s32.totalorder %v424, 8
      %865 = vrot.lane.b32.xlu0 %v851, 117
      %v866 = vpop.permute.xlu0 %865
      %867 = vrot.lane.b32.xlu0 %v852, 117
      %v868 = vpop.permute.xlu0 %867
      %869 = vrot.lane.b32.xlu0 %v853, 117
      %v870 = vpop.permute.xlu0 %869
      %871 = vrot.lane.b32.xlu0 %v854, 117
      %v872 = vpop.permute.xlu0 %871
      %873 = vrot.lane.b32.xlu0 %v855, 117
      %v874 = vpop.permute.xlu0 %873
      %vm875 = vcmask 957440
      %v876 = vsel %vm875, %v866, %v868
      %v877 = vsel %vm875, %v868, %v870
      %v878 = vsel %vm875, %v870, %v872
      %v879 = vsel %vm875, %v872, %v874
      %v884 = vsel %vm856, %v876, 0.0
      %v885 = vsel %vm857, %v877, 0.0
      %v886 = vsel %vm858, %v878, 0.0
      %v887 = vsel %vm859, %v879, 0.0
      %888 = vst [vmem:[#allocation3 + $0x160] sm:$0xff] %v884
      %889 = vst [vmem:[#allocation3 + $0x168] sm:$0xff] %v885
      %890 = vst [vmem:[#allocation3 + $0x170] sm:$0xff] %v886
      %891 = vst [vmem:[#allocation3 + $0x178] sm:$0xff] %v887
      %v892 = vld [vmem:[#allocation2] sm:$0xff]
      %v893 = vld [vmem:[#allocation2 + $0x8] sm:$0xff]
      %v894 = vld [vmem:[#allocation2 + $0x10] sm:$0xff]
      %v895 = vld [vmem:[#allocation2 + $0x18] sm:$0xff]
      %v896 = vld [vmem:[#allocation2 + $0x20] sm:$0xff]
      %vm897 = vcmp.ge.s32.totalorder %v421, 7
      %vm898 = vcmp.ge.s32.totalorder %v422, 7
      %vm899 = vcmp.ge.s32.totalorder %v423, 7
      %vm900 = vcmp.ge.s32.totalorder %v424, 7
      %906 = vrot.lane.b32.xlu0 %v892, 116
      %v907 = vpop.permute.xlu0 %906
      %908 = vrot.lane.b32.xlu0 %v893, 116
      %v909 = vpop.permute.xlu0 %908
      %910 = vrot.lane.b32.xlu0 %v894, 116
      %v911 = vpop.permute.xlu0 %910
      %912 = vrot.lane.b32.xlu0 %v895, 116
      %v913 = vpop.permute.xlu0 %912
      %914 = vrot.lane.b32.xlu0 %v896, 116
      %v915 = vpop.permute.xlu0 %914
      %vm916 = vcmask 949248
      %v917 = vsel %vm916, %v907, %v909
      %v918 = vsel %vm916, %v909, %v911
      %v919 = vsel %vm916, %v911, %v913
      %v920 = vsel %vm916, %v913, %v915
      %v925 = vsel %vm897, %v917, 0.0
      %v926 = vsel %vm898, %v918, 0.0
      %v927 = vsel %vm899, %v919, 0.0
      %v928 = vsel %vm900, %v920, 0.0
      %929 = vst [vmem:[#allocation3 + $0x180] sm:$0xff] %v925
      %930 = vst [vmem:[#allocation3 + $0x188] sm:$0xff] %v926
      %931 = vst [vmem:[#allocation3 + $0x190] sm:$0xff] %v927
      %932 = vst [vmem:[#allocation3 + $0x198] sm:$0xff] %v928
      %v933 = vld [vmem:[#allocation2] sm:$0xff]
      %v934 = vld [vmem:[#allocation2 + $0x8] sm:$0xff]
      %v935 = vld [vmem:[#allocation2 + $0x10] sm:$0xff]
      %v936 = vld [vmem:[#allocation2 + $0x18] sm:$0xff]
      %v937 = vld [vmem:[#allocation2 + $0x20] sm:$0xff]
      %vm938 = vcmp.ge.s32.totalorder %v421, 6
      %vm939 = vcmp.ge.s32.totalorder %v422, 6
      %vm940 = vcmp.ge.s32.totalorder %v423, 6
      %vm941 = vcmp.ge.s32.totalorder %v424, 6
      %947 = vrot.lane.b32.xlu0 %v933, 115
      %v948 = vpop.permute.xlu0 %947
      %949 = vrot.lane.b32.xlu0 %v934, 115
      %v950 = vpop.permute.xlu0 %949
      %951 = vrot.lane.b32.xlu0 %v935, 115
      %v952 = vpop.permute.xlu0 %951
      %953 = vrot.lane.b32.xlu0 %v936, 115
      %v954 = vpop.permute.xlu0 %953
      %955 = vrot.lane.b32.xlu0 %v937, 115
      %v956 = vpop.permute.xlu0 %955
      %vm957 = vcmask 941056
      %v958 = vsel %vm957, %v948, %v950
      %v959 = vsel %vm957, %v950, %v952
      %v960 = vsel %vm957, %v952, %v954
      %v961 = vsel %vm957, %v954, %v956
      %v966 = vsel %vm938, %v958, 0.0
      %v967 = vsel %vm939, %v959, 0.0
      %v968 = vsel %vm940, %v960, 0.0
      %v969 = vsel %vm941, %v961, 0.0
      %970 = vst [vmem:[#allocation3 + $0x1a0] sm:$0xff] %v966
      %971 = vst [vmem:[#allocation3 + $0x1a8] sm:$0xff] %v967
      %972 = vst [vmem:[#allocation3 + $0x1b0] sm:$0xff] %v968
      %973 = vst [vmem:[#allocation3 + $0x1b8] sm:$0xff] %v969
      %v974 = vld [vmem:[#allocation2] sm:$0xff]
      %v975 = vld [vmem:[#allocation2 + $0x8] sm:$0xff]
      %v976 = vld [vmem:[#allocation2 + $0x10] sm:$0xff]
      %v977 = vld [vmem:[#allocation2 + $0x18] sm:$0xff]
      %v978 = vld [vmem:[#allocation2 + $0x20] sm:$0xff]
      %vm979 = vcmp.ge.s32.totalorder %v421, 5
      %vm980 = vcmp.ge.s32.totalorder %v422, 5
      %vm981 = vcmp.ge.s32.totalorder %v423, 5
      %vm982 = vcmp.ge.s32.totalorder %v424, 5
      %988 = vrot.lane.b32.xlu0 %v974, 114
      %v989 = vpop.permute.xlu0 %988
      %990 = vrot.lane.b32.xlu0 %v975, 114
      %v991 = vpop.permute.xlu0 %990
      %992 = vrot.lane.b32.xlu0 %v976, 114
      %v993 = vpop.permute.xlu0 %992
      %994 = vrot.lane.b32.xlu0 %v977, 114
      %v995 = vpop.permute.xlu0 %994
      %996 = vrot.lane.b32.xlu0 %v978, 114
      %v997 = vpop.permute.xlu0 %996
      %vm998 = vcmask 932864
      %v999 = vsel %vm998, %v989, %v991
      %v1000 = vsel %vm998, %v991, %v993
      %v1001 = vsel %vm998, %v993, %v995
      %v1002 = vsel %vm998, %v995, %v997
      %v1007 = vsel %vm979, %v999, 0.0
      %v1008 = vsel %vm980, %v1000, 0.0
      %v1009 = vsel %vm981, %v1001, 0.0
      %v1010 = vsel %vm982, %v1002, 0.0
      %1011 = vst [vmem:[#allocation3 + $0x1c0] sm:$0xff] %v1007
      %1012 = vst [vmem:[#allocation3 + $0x1c8] sm:$0xff] %v1008
      %1013 = vst [vmem:[#allocation3 + $0x1d0] sm:$0xff] %v1009
      %1014 = vst [vmem:[#allocation3 + $0x1d8] sm:$0xff] %v1010
      %v1015 = vld [vmem:[#allocation2] sm:$0xff]
      %v1016 = vld [vmem:[#allocation2 + $0x8] sm:$0xff]
      %v1017 = vld [vmem:[#allocation2 + $0x10] sm:$0xff]
      %v1018 = vld [vmem:[#allocation2 + $0x18] sm:$0xff]
      %v1019 = vld [vmem:[#allocation2 + $0x20] sm:$0xff]
      %vm1020 = vcmp.ge.s32.totalorder %v421, 4
      %vm1021 = vcmp.ge.s32.totalorder %v422, 4
      %vm1022 = vcmp.ge.s32.totalorder %v423, 4
      %vm1023 = vcmp.ge.s32.totalorder %v424, 4
      %1029 = vrot.lane.b32.xlu0 %v1015, 113
      %v1030 = vpop.permute.xlu0 %1029
      %1031 = vrot.lane.b32.xlu0 %v1016, 113
      %v1032 = vpop.permute.xlu0 %1031
      %1033 = vrot.lane.b32.xlu0 %v1017, 113
      %v1034 = vpop.permute.xlu0 %1033
      %1035 = vrot.lane.b32.xlu0 %v1018, 113
      %v1036 = vpop.permute.xlu0 %1035
      %1037 = vrot.lane.b32.xlu0 %v1019, 113
      %v1038 = vpop.permute.xlu0 %1037
      %vm1039 = vcmask 924672
      %v1040 = vsel %vm1039, %v1030, %v1032
      %v1041 = vsel %vm1039, %v1032, %v1034
      %v1042 = vsel %vm1039, %v1034, %v1036
      %v1043 = vsel %vm1039, %v1036, %v1038
      %v1048 = vsel %vm1020, %v1040, 0.0
      %v1049 = vsel %vm1021, %v1041, 0.0
      %v1050 = vsel %vm1022, %v1042, 0.0
      %v1051 = vsel %vm1023, %v1043, 0.0
      %1052 = vst [vmem:[#allocation3 + $0x1e0] sm:$0xff] %v1048
      %1053 = vst [vmem:[#allocation3 + $0x1e8] sm:$0xff] %v1049
      %1054 = vst [vmem:[#allocation3 + $0x1f0] sm:$0xff] %v1050
      %1055 = vst [vmem:[#allocation3 + $0x1f8] sm:$0xff] %v1051
      %v1056 = vld [vmem:[#allocation2] sm:$0xff]
      %v1057 = vld [vmem:[#allocation2 + $0x8] sm:$0xff]
      %v1058 = vld [vmem:[#allocation2 + $0x10] sm:$0xff]
      %v1059 = vld [vmem:[#allocation2 + $0x18] sm:$0xff]
      %v1060 = vld [vmem:[#allocation2 + $0x20] sm:$0xff]
      %vm1061 = vcmp.ge.s32.totalorder %v421, 3
      %vm1062 = vcmp.ge.s32.totalorder %v422, 3
      %vm1063 = vcmp.ge.s32.totalorder %v423, 3
      %vm1064 = vcmp.ge.s32.totalorder %v424, 3
      %1070 = vrot.lane.b32.xlu0 %v1056, 112
      %v1071 = vpop.permute.xlu0 %1070
      %1072 = vrot.lane.b32.xlu0 %v1057, 112
      %v1073 = vpop.permute.xlu0 %1072
      %1074 = vrot.lane.b32.xlu0 %v1058, 112
      %v1075 = vpop.permute.xlu0 %1074
      %1076 = vrot.lane.b32.xlu0 %v1059, 112
      %v1077 = vpop.permute.xlu0 %1076
      %1078 = vrot.lane.b32.xlu0 %v1060, 112
      %v1079 = vpop.permute.xlu0 %1078
      %vm1080 = vcmask 916480
      %v1081 = vsel %vm1080, %v1071, %v1073
      %v1082 = vsel %vm1080, %v1073, %v1075
      %v1083 = vsel %vm1080, %v1075, %v1077
      %v1084 = vsel %vm1080, %v1077, %v1079
      %v1089 = vsel %vm1061, %v1081, 0.0
      %v1090 = vsel %vm1062, %v1082, 0.0
      %v1091 = vsel %vm1063, %v1083, 0.0
      %v1092 = vsel %vm1064, %v1084, 0.0
      %1093 = vst [vmem:[#allocation3 + $0x200] sm:$0xff] %v1089
      %1094 = vst [vmem:[#allocation3 + $0x208] sm:$0xff] %v1090
      %1095 = vst [vmem:[#allocation3 + $0x210] sm:$0xff] %v1091
      %1096 = vst [vmem:[#allocation3 + $0x218] sm:$0xff] %v1092
      %v1097 = vld [vmem:[#allocation2] sm:$0xff]
      %v1098 = vld [vmem:[#allocation2 + $0x8] sm:$0xff]
      %v1099 = vld [vmem:[#allocation2 + $0x10] sm:$0xff]
      %v1100 = vld [vmem:[#allocation2 + $0x18] sm:$0xff]
      %v1101 = vld [vmem:[#allocation2 + $0x20] sm:$0xff]
      %vm1102 = vcmp.ge.s32.totalorder %v421, 2
      %vm1103 = vcmp.ge.s32.totalorder %v422, 2
      %vm1104 = vcmp.ge.s32.totalorder %v423, 2
      %vm1105 = vcmp.ge.s32.totalorder %v424, 2
      %1111 = vrot.lane.b32.xlu0 %v1097, 111
      %v1112 = vpop.permute.xlu0 %1111
      %1113 = vrot.lane.b32.xlu0 %v1098, 111
      %v1114 = vpop.permute.xlu0 %1113
      %1115 = vrot.lane.b32.xlu0 %v1099, 111
      %v1116 = vpop.permute.xlu0 %1115
      %1117 = vrot.lane.b32.xlu0 %v1100, 111
      %v1118 = vpop.permute.xlu0 %1117
      %1119 = vrot.lane.b32.xlu0 %v1101, 111
      %v1120 = vpop.permute.xlu0 %1119
      %vm1121 = vcmask 908288
      %v1122 = vsel %vm1121, %v1112, %v1114
      %v1123 = vsel %vm1121, %v1114, %v1116
      %v1124 = vsel %vm1121, %v1116, %v1118
      %v1125 = vsel %vm1121, %v1118, %v1120
      %v1130 = vsel %vm1102, %v1122, 0.0
      %v1131 = vsel %vm1103, %v1123, 0.0
      %v1132 = vsel %vm1104, %v1124, 0.0
      %v1133 = vsel %vm1105, %v1125, 0.0
      %1134 = vst [vmem:[#allocation3 + $0x220] sm:$0xff] %v1130
      %1135 = vst [vmem:[#allocation3 + $0x228] sm:$0xff] %v1131
      %1136 = vst [vmem:[#allocation3 + $0x230] sm:$0xff] %v1132
      %1137 = vst [vmem:[#allocation3 + $0x238] sm:$0xff] %v1133
      %v1138 = vld [vmem:[#allocation2] sm:$0xff]
      %v1139 = vld [vmem:[#allocation2 + $0x8] sm:$0xff]
      %v1140 = vld [vmem:[#allocation2 + $0x10] sm:$0xff]
      %v1141 = vld [vmem:[#allocation2 + $0x18] sm:$0xff]
      %v1142 = vld [vmem:[#allocation2 + $0x20] sm:$0xff]
      %vm1143 = vcmp.ge.s32.totalorder %v421, 1
      %vm1144 = vcmp.ge.s32.totalorder %v422, 1
      %vm1145 = vcmp.ge.s32.totalorder %v423, 1
      %vm1146 = vcmp.ge.s32.totalorder %v424, 1
      %1152 = vrot.lane.b32.xlu0 %v1138, 110
      %v1153 = vpop.permute.xlu0 %1152
      %1154 = vrot.lane.b32.xlu0 %v1139, 110
      %v1155 = vpop.permute.xlu0 %1154
      %1156 = vrot.lane.b32.xlu0 %v1140, 110
      %v1157 = vpop.permute.xlu0 %1156
      %1158 = vrot.lane.b32.xlu0 %v1141, 110
      %v1159 = vpop.permute.xlu0 %1158
      %1160 = vrot.lane.b32.xlu0 %v1142, 110
      %v1161 = vpop.permute.xlu0 %1160
      %vm1162 = vcmask 900096
      %v1163 = vsel %vm1162, %v1153, %v1155
      %v1164 = vsel %vm1162, %v1155, %v1157
      %v1165 = vsel %vm1162, %v1157, %v1159
      %v1166 = vsel %vm1162, %v1159, %v1161
      %v1171 = vsel %vm1143, %v1163, 0.0
      %v1172 = vsel %vm1144, %v1164, 0.0
      %v1173 = vsel %vm1145, %v1165, 0.0
      %v1174 = vsel %vm1146, %v1166, 0.0
      %1175 = vst [vmem:[#allocation3 + $0x240] sm:$0xff] %v1171
      %1176 = vst [vmem:[#allocation3 + $0x248] sm:$0xff] %v1172
      %1177 = vst [vmem:[#allocation3 + $0x250] sm:$0xff] %v1173
      %1178 = vst [vmem:[#allocation3 + $0x258] sm:$0xff] %v1174
      %v1179 = vld [vmem:[#allocation2] sm:$0xff]
      %v1180 = vld [vmem:[#allocation2 + $0x8] sm:$0xff]
      %v1181 = vld [vmem:[#allocation2 + $0x10] sm:$0xff]
      %v1182 = vld [vmem:[#allocation2 + $0x18] sm:$0xff]
      %v1183 = vld [vmem:[#allocation2 + $0x20] sm:$0xff]
      %1189 = vrot.lane.b32.xlu0 %v1179, 109
      %v1190 = vpop.permute.xlu0 %1189
      %1191 = vrot.lane.b32.xlu0 %v1180, 109
      %v1192 = vpop.permute.xlu0 %1191
      %1193 = vrot.lane.b32.xlu0 %v1181, 109
      %v1194 = vpop.permute.xlu0 %1193
      %1195 = vrot.lane.b32.xlu0 %v1182, 109
      %v1196 = vpop.permute.xlu0 %1195
      %1197 = vrot.lane.b32.xlu0 %v1183, 109
      %v1198 = vpop.permute.xlu0 %1197
      %vm1199 = vcmask 891904
      %v1200 = vsel %vm1199, %v1190, %v1192
      %v1201 = vsel %vm1199, %v1192, %v1194
      %v1202 = vsel %vm1199, %v1194, %v1196
      %v1203 = vsel %vm1199, %v1196, %v1198
      %1208 = vst [vmem:[#allocation3 + $0x260] sm:$0xff] %v1200
      %1209 = vst [vmem:[#allocation3 + $0x268] sm:$0xff] %v1201
      %1210 = vst [vmem:[#allocation3 + $0x270] sm:$0xff] %v1202
      %1211 = vst [vmem:[#allocation3 + $0x278] sm:$0xff] %v1203
      %v1212 = vld [vmem:[#allocation2] sm:$0xff]
      %v1213 = vld [vmem:[#allocation2 + $0x8] sm:$0xff]
      %v1214 = vld [vmem:[#allocation2 + $0x10] sm:$0xff]
      %v1215 = vld [vmem:[#allocation2 + $0x18] sm:$0xff]
      %v1216 = vld [vmem:[#allocation2 + $0x20] sm:$0xff]
      %vm1217 = vcmp.lt.s32.totalorder %v421, 63
      %vm1218 = vcmp.lt.s32.totalorder %v422, 63
      %vm1219 = vcmp.lt.s32.totalorder %v423, 63
      %vm1220 = vcmp.lt.s32.totalorder %v424, 63
      %1226 = vrot.lane.b32.xlu0 %v1212, 108
      %v1227 = vpop.permute.xlu0 %1226
      %1228 = vrot.lane.b32.xlu0 %v1213, 108
      %v1229 = vpop.permute.xlu0 %1228
      %1230 = vrot.lane.b32.xlu0 %v1214, 108
      %v1231 = vpop.permute.xlu0 %1230
      %1232 = vrot.lane.b32.xlu0 %v1215, 108
      %v1233 = vpop.permute.xlu0 %1232
      %1234 = vrot.lane.b32.xlu0 %v1216, 108
      %v1235 = vpop.permute.xlu0 %1234
      %vm1236 = vcmask 883712
      %v1237 = vsel %vm1236, %v1227, %v1229
      %v1238 = vsel %vm1236, %v1229, %v1231
      %v1239 = vsel %vm1236, %v1231, %v1233
      %v1240 = vsel %vm1236, %v1233, %v1235
      %v1245 = vsel %vm1217, %v1237, 0.0
      %v1246 = vsel %vm1218, %v1238, 0.0
      %v1247 = vsel %vm1219, %v1239, 0.0
      %v1248 = vsel %vm1220, %v1240, 0.0
      %1249 = vst [vmem:[#allocation3 + $0x280] sm:$0xff] %v1245
      %1250 = vst [vmem:[#allocation3 + $0x288] sm:$0xff] %v1246
      %1251 = vst [vmem:[#allocation3 + $0x290] sm:$0xff] %v1247
      %1252 = vst [vmem:[#allocation3 + $0x298] sm:$0xff] %v1248
      %v1253 = vld [vmem:[#allocation2] sm:$0xff]
      %v1254 = vld [vmem:[#allocation2 + $0x8] sm:$0xff]
      %v1255 = vld [vmem:[#allocation2 + $0x10] sm:$0xff]
      %v1256 = vld [vmem:[#allocation2 + $0x18] sm:$0xff]
      %v1257 = vld [vmem:[#allocation2 + $0x20] sm:$0xff]
      %vm1258 = vcmp.lt.s32.totalorder %v421, 62
      %vm1259 = vcmp.lt.s32.totalorder %v422, 62
      %vm1260 = vcmp.lt.s32.totalorder %v423, 62
      %vm1261 = vcmp.lt.s32.totalorder %v424, 62
      %1267 = vrot.lane.b32.xlu0 %v1253, 107
      %v1268 = vpop.permute.xlu0 %1267
      %1269 = vrot.lane.b32.xlu0 %v1254, 107
      %v1270 = vpop.permute.xlu0 %1269
      %1271 = vrot.lane.b32.xlu0 %v1255, 107
      %v1272 = vpop.permute.xlu0 %1271
      %1273 = vrot.lane.b32.xlu0 %v1256, 107
      %v1274 = vpop.permute.xlu0 %1273
      %1275 = vrot.lane.b32.xlu0 %v1257, 107
      %v1276 = vpop.permute.xlu0 %1275
      %vm1277 = vcmask 875520
      %v1278 = vsel %vm1277, %v1268, %v1270
      %v1279 = vsel %vm1277, %v1270, %v1272
      %v1280 = vsel %vm1277, %v1272, %v1274
      %v1281 = vsel %vm1277, %v1274, %v1276
      %v1286 = vsel %vm1258, %v1278, 0.0
      %v1287 = vsel %vm1259, %v1279, 0.0
      %v1288 = vsel %vm1260, %v1280, 0.0
      %v1289 = vsel %vm1261, %v1281, 0.0
      %1290 = vst [vmem:[#allocation3 + $0x2a0] sm:$0xff] %v1286
      %1291 = vst [vmem:[#allocation3 + $0x2a8] sm:$0xff] %v1287
      %1292 = vst [vmem:[#allocation3 + $0x2b0] sm:$0xff] %v1288
      %1293 = vst [vmem:[#allocation3 + $0x2b8] sm:$0xff] %v1289
      %v1294 = vld [vmem:[#allocation2] sm:$0xff]
      %v1295 = vld [vmem:[#allocation2 + $0x8] sm:$0xff]
      %v1296 = vld [vmem:[#allocation2 + $0x10] sm:$0xff]
      %v1297 = vld [vmem:[#allocation2 + $0x18] sm:$0xff]
      %v1298 = vld [vmem:[#allocation2 + $0x20] sm:$0xff]
      %vm1299 = vcmp.lt.s32.totalorder %v421, 61
      %vm1300 = vcmp.lt.s32.totalorder %v422, 61
      %vm1301 = vcmp.lt.s32.totalorder %v423, 61
      %vm1302 = vcmp.lt.s32.totalorder %v424, 61
      %1308 = vrot.lane.b32.xlu0 %v1294, 106
      %v1309 = vpop.permute.xlu0 %1308
      %1310 = vrot.lane.b32.xlu0 %v1295, 106
      %v1311 = vpop.permute.xlu0 %1310
      %1312 = vrot.lane.b32.xlu0 %v1296, 106
      %v1313 = vpop.permute.xlu0 %1312
      %1314 = vrot.lane.b32.xlu0 %v1297, 106
      %v1315 = vpop.permute.xlu0 %1314
      %1316 = vrot.lane.b32.xlu0 %v1298, 106
      %v1317 = vpop.permute.xlu0 %1316
      %vm1318 = vcmask 867328
      %v1319 = vsel %vm1318, %v1309, %v1311
      %v1320 = vsel %vm1318, %v1311, %v1313
      %v1321 = vsel %vm1318, %v1313, %v1315
      %v1322 = vsel %vm1318, %v1315, %v1317
      %v1327 = vsel %vm1299, %v1319, 0.0
      %v1328 = vsel %vm1300, %v1320, 0.0
      %v1329 = vsel %vm1301, %v1321, 0.0
      %v1330 = vsel %vm1302, %v1322, 0.0
      %1331 = vst [vmem:[#allocation3 + $0x2c0] sm:$0xff] %v1327
      %1332 = vst [vmem:[#allocation3 + $0x2c8] sm:$0xff] %v1328
      %1333 = vst [vmem:[#allocation3 + $0x2d0] sm:$0xff] %v1329
      %1334 = vst [vmem:[#allocation3 + $0x2d8] sm:$0xff] %v1330
      %v1335 = vld [vmem:[#allocation2] sm:$0xff]
      %v1336 = vld [vmem:[#allocation2 + $0x8] sm:$0xff]
      %v1337 = vld [vmem:[#allocation2 + $0x10] sm:$0xff]
      %v1338 = vld [vmem:[#allocation2 + $0x18] sm:$0xff]
      %v1339 = vld [vmem:[#allocation2 + $0x20] sm:$0xff]
      %vm1340 = vcmp.lt.s32.totalorder %v421, 60
      %vm1341 = vcmp.lt.s32.totalorder %v422, 60
      %vm1342 = vcmp.lt.s32.totalorder %v423, 60
      %vm1343 = vcmp.lt.s32.totalorder %v424, 60
      %1349 = vrot.lane.b32.xlu0 %v1335, 105
      %v1350 = vpop.permute.xlu0 %1349
      %1351 = vrot.lane.b32.xlu0 %v1336, 105
      %v1352 = vpop.permute.xlu0 %1351
      %1353 = vrot.lane.b32.xlu0 %v1337, 105
      %v1354 = vpop.permute.xlu0 %1353
      %1355 = vrot.lane.b32.xlu0 %v1338, 105
      %v1356 = vpop.permute.xlu0 %1355
      %1357 = vrot.lane.b32.xlu0 %v1339, 105
      %v1358 = vpop.permute.xlu0 %1357
      %vm1359 = vcmask 859136
      %v1360 = vsel %vm1359, %v1350, %v1352
      %v1361 = vsel %vm1359, %v1352, %v1354
      %v1362 = vsel %vm1359, %v1354, %v1356
      %v1363 = vsel %vm1359, %v1356, %v1358
      %v1368 = vsel %vm1340, %v1360, 0.0
      %v1369 = vsel %vm1341, %v1361, 0.0
      %v1370 = vsel %vm1342, %v1362, 0.0
      %v1371 = vsel %vm1343, %v1363, 0.0
      %1372 = vst [vmem:[#allocation3 + $0x2e0] sm:$0xff] %v1368
      %1373 = vst [vmem:[#allocation3 + $0x2e8] sm:$0xff] %v1369
      %1374 = vst [vmem:[#allocation3 + $0x2f0] sm:$0xff] %v1370
      %1375 = vst [vmem:[#allocation3 + $0x2f8] sm:$0xff] %v1371
      %v1376 = vld [vmem:[#allocation2] sm:$0xff]
      %v1377 = vld [vmem:[#allocation2 + $0x8] sm:$0xff]
      %v1378 = vld [vmem:[#allocation2 + $0x10] sm:$0xff]
      %v1379 = vld [vmem:[#allocation2 + $0x18] sm:$0xff]
      %v1380 = vld [vmem:[#allocation2 + $0x20] sm:$0xff]
      %vm1381 = vcmp.lt.s32.totalorder %v421, 59
      %vm1382 = vcmp.lt.s32.totalorder %v422, 59
      %vm1383 = vcmp.lt.s32.totalorder %v423, 59
      %vm1384 = vcmp.lt.s32.totalorder %v424, 59
      %1390 = vrot.lane.b32.xlu0 %v1376, 104
      %v1391 = vpop.permute.xlu0 %1390
      %1392 = vrot.lane.b32.xlu0 %v1377, 104
      %v1393 = vpop.permute.xlu0 %1392
      %1394 = vrot.lane.b32.xlu0 %v1378, 104
      %v1395 = vpop.permute.xlu0 %1394
      %1396 = vrot.lane.b32.xlu0 %v1379, 104
      %v1397 = vpop.permute.xlu0 %1396
      %1398 = vrot.lane.b32.xlu0 %v1380, 104
      %v1399 = vpop.permute.xlu0 %1398
      %vm1400 = vcmask 850944
      %v1401 = vsel %vm1400, %v1391, %v1393
      %v1402 = vsel %vm1400, %v1393, %v1395
      %v1403 = vsel %vm1400, %v1395, %v1397
      %v1404 = vsel %vm1400, %v1397, %v1399
      %v1409 = vsel %vm1381, %v1401, 0.0
      %v1410 = vsel %vm1382, %v1402, 0.0
      %v1411 = vsel %vm1383, %v1403, 0.0
      %v1412 = vsel %vm1384, %v1404, 0.0
      %1413 = vst [vmem:[#allocation3 + $0x300] sm:$0xff] %v1409
      %1414 = vst [vmem:[#allocation3 + $0x308] sm:$0xff] %v1410
      %1415 = vst [vmem:[#allocation3 + $0x310] sm:$0xff] %v1411
      %1416 = vst [vmem:[#allocation3 + $0x318] sm:$0xff] %v1412
      %v1417 = vld [vmem:[#allocation2] sm:$0xff]
      %v1418 = vld [vmem:[#allocation2 + $0x8] sm:$0xff]
      %v1419 = vld [vmem:[#allocation2 + $0x10] sm:$0xff]
      %v1420 = vld [vmem:[#allocation2 + $0x18] sm:$0xff]
      %v1421 = vld [vmem:[#allocation2 + $0x20] sm:$0xff]
      %vm1422 = vcmp.lt.s32.totalorder %v421, 58
      %vm1423 = vcmp.lt.s32.totalorder %v422, 58
      %vm1424 = vcmp.lt.s32.totalorder %v423, 58
      %vm1425 = vcmp.lt.s32.totalorder %v424, 58
      %1431 = vrot.lane.b32.xlu0 %v1417, 103
      %v1432 = vpop.permute.xlu0 %1431
      %1433 = vrot.lane.b32.xlu0 %v1418, 103
      %v1434 = vpop.permute.xlu0 %1433
      %1435 = vrot.lane.b32.xlu0 %v1419, 103
      %v1436 = vpop.permute.xlu0 %1435
      %1437 = vrot.lane.b32.xlu0 %v1420, 103
      %v1438 = vpop.permute.xlu0 %1437
      %1439 = vrot.lane.b32.xlu0 %v1421, 103
      %v1440 = vpop.permute.xlu0 %1439
      %vm1441 = vcmask 842752
      %v1442 = vsel %vm1441, %v1432, %v1434
      %v1443 = vsel %vm1441, %v1434, %v1436
      %v1444 = vsel %vm1441, %v1436, %v1438
      %v1445 = vsel %vm1441, %v1438, %v1440
      %v1450 = vsel %vm1422, %v1442, 0.0
      %v1451 = vsel %vm1423, %v1443, 0.0
      %v1452 = vsel %vm1424, %v1444, 0.0
      %v1453 = vsel %vm1425, %v1445, 0.0
      %1454 = vst [vmem:[#allocation3 + $0x320] sm:$0xff] %v1450
      %1455 = vst [vmem:[#allocation3 + $0x328] sm:$0xff] %v1451
      %1456 = vst [vmem:[#allocation3 + $0x330] sm:$0xff] %v1452
      %1457 = vst [vmem:[#allocation3 + $0x338] sm:$0xff] %v1453
      %v1458 = vld [vmem:[#allocation2] sm:$0xff]
      %v1459 = vld [vmem:[#allocation2 + $0x8] sm:$0xff]
      %v1460 = vld [vmem:[#allocation2 + $0x10] sm:$0xff]
      %v1461 = vld [vmem:[#allocation2 + $0x18] sm:$0xff]
      %v1462 = vld [vmem:[#allocation2 + $0x20] sm:$0xff]
      %vm1463 = vcmp.lt.s32.totalorder %v421, 57
      %vm1464 = vcmp.lt.s32.totalorder %v422, 57
      %vm1465 = vcmp.lt.s32.totalorder %v423, 57
      %vm1466 = vcmp.lt.s32.totalorder %v424, 57
      %1472 = vrot.lane.b32.xlu0 %v1458, 102
      %v1473 = vpop.permute.xlu0 %1472
      %1474 = vrot.lane.b32.xlu0 %v1459, 102
      %v1475 = vpop.permute.xlu0 %1474
      %1476 = vrot.lane.b32.xlu0 %v1460, 102
      %v1477 = vpop.permute.xlu0 %1476
      %1478 = vrot.lane.b32.xlu0 %v1461, 102
      %v1479 = vpop.permute.xlu0 %1478
      %1480 = vrot.lane.b32.xlu0 %v1462, 102
      %v1481 = vpop.permute.xlu0 %1480
      %vm1482 = vcmask 834560
      %v1483 = vsel %vm1482, %v1473, %v1475
      %v1484 = vsel %vm1482, %v1475, %v1477
      %v1485 = vsel %vm1482, %v1477, %v1479
      %v1486 = vsel %vm1482, %v1479, %v1481
      %v1491 = vsel %vm1463, %v1483, 0.0
      %v1492 = vsel %vm1464, %v1484, 0.0
      %v1493 = vsel %vm1465, %v1485, 0.0
      %v1494 = vsel %vm1466, %v1486, 0.0
      %1495 = vst [vmem:[#allocation3 + $0x340] sm:$0xff] %v1491
      %1496 = vst [vmem:[#allocation3 + $0x348] sm:$0xff] %v1492
      %1497 = vst [vmem:[#allocation3 + $0x350] sm:$0xff] %v1493
      %1498 = vst [vmem:[#allocation3 + $0x358] sm:$0xff] %v1494
      %v1499 = vld [vmem:[#allocation2] sm:$0xff]
      %v1500 = vld [vmem:[#allocation2 + $0x8] sm:$0xff]
      %v1501 = vld [vmem:[#allocation2 + $0x10] sm:$0xff]
      %v1502 = vld [vmem:[#allocation2 + $0x18] sm:$0xff]
      %v1503 = vld [vmem:[#allocation2 + $0x20] sm:$0xff]
      %vm1504 = vcmp.lt.s32.totalorder %v421, 56
      %vm1505 = vcmp.lt.s32.totalorder %v422, 56
      %vm1506 = vcmp.lt.s32.totalorder %v423, 56
      %vm1507 = vcmp.lt.s32.totalorder %v424, 56
      %1513 = vrot.lane.b32.xlu0 %v1499, 101
      %v1514 = vpop.permute.xlu0 %1513
      %1515 = vrot.lane.b32.xlu0 %v1500, 101
      %v1516 = vpop.permute.xlu0 %1515
      %1517 = vrot.lane.b32.xlu0 %v1501, 101
      %v1518 = vpop.permute.xlu0 %1517
      %1519 = vrot.lane.b32.xlu0 %v1502, 101
      %v1520 = vpop.permute.xlu0 %1519
      %1521 = vrot.lane.b32.xlu0 %v1503, 101
      %v1522 = vpop.permute.xlu0 %1521
      %vm1523 = vcmask 826368
      %v1524 = vsel %vm1523, %v1514, %v1516
      %v1525 = vsel %vm1523, %v1516, %v1518
      %v1526 = vsel %vm1523, %v1518, %v1520
      %v1527 = vsel %vm1523, %v1520, %v1522
      %v1532 = vsel %vm1504, %v1524, 0.0
      %v1533 = vsel %vm1505, %v1525, 0.0
      %v1534 = vsel %vm1506, %v1526, 0.0
      %v1535 = vsel %vm1507, %v1527, 0.0
      %1536 = vst [vmem:[#allocation3 + $0x360] sm:$0xff] %v1532
      %1537 = vst [vmem:[#allocation3 + $0x368] sm:$0xff] %v1533
      %1538 = vst [vmem:[#allocation3 + $0x370] sm:$0xff] %v1534
      %1539 = vst [vmem:[#allocation3 + $0x378] sm:$0xff] %v1535
      %v1540 = vld [vmem:[#allocation2] sm:$0xff]
      %v1541 = vld [vmem:[#allocation2 + $0x8] sm:$0xff]
      %v1542 = vld [vmem:[#allocation2 + $0x10] sm:$0xff]
      %v1543 = vld [vmem:[#allocation2 + $0x18] sm:$0xff]
      %v1544 = vld [vmem:[#allocation2 + $0x20] sm:$0xff]
      %vm1545 = vcmp.lt.s32.totalorder %v421, 55
      %vm1546 = vcmp.lt.s32.totalorder %v422, 55
      %vm1547 = vcmp.lt.s32.totalorder %v423, 55
      %vm1548 = vcmp.lt.s32.totalorder %v424, 55
      %1554 = vrot.lane.b32.xlu0 %v1540, 100
      %v1555 = vpop.permute.xlu0 %1554
      %1556 = vrot.lane.b32.xlu0 %v1541, 100
      %v1557 = vpop.permute.xlu0 %1556
      %1558 = vrot.lane.b32.xlu0 %v1542, 100
      %v1559 = vpop.permute.xlu0 %1558
      %1560 = vrot.lane.b32.xlu0 %v1543, 100
      %v1561 = vpop.permute.xlu0 %1560
      %1562 = vrot.lane.b32.xlu0 %v1544, 100
      %v1563 = vpop.permute.xlu0 %1562
      %vm1564 = vcmask 818176
      %v1565 = vsel %vm1564, %v1555, %v1557
      %v1566 = vsel %vm1564, %v1557, %v1559
      %v1567 = vsel %vm1564, %v1559, %v1561
      %v1568 = vsel %vm1564, %v1561, %v1563
      %v1573 = vsel %vm1545, %v1565, 0.0
      %v1574 = vsel %vm1546, %v1566, 0.0
      %v1575 = vsel %vm1547, %v1567, 0.0
      %v1576 = vsel %vm1548, %v1568, 0.0
      %1577 = vst [vmem:[#allocation3 + $0x380] sm:$0xff] %v1573
      %1578 = vst [vmem:[#allocation3 + $0x388] sm:$0xff] %v1574
      %1579 = vst [vmem:[#allocation3 + $0x390] sm:$0xff] %v1575
      %1580 = vst [vmem:[#allocation3 + $0x398] sm:$0xff] %v1576
      %v1581 = vld [vmem:[#allocation2] sm:$0xff]
      %v1582 = vld [vmem:[#allocation2 + $0x8] sm:$0xff]
      %v1583 = vld [vmem:[#allocation2 + $0x10] sm:$0xff]
      %v1584 = vld [vmem:[#allocation2 + $0x18] sm:$0xff]
      %v1585 = vld [vmem:[#allocation2 + $0x20] sm:$0xff]
      %vm1586 = vcmp.lt.s32.totalorder %v421, 54
      %vm1587 = vcmp.lt.s32.totalorder %v422, 54
      %vm1588 = vcmp.lt.s32.totalorder %v423, 54
      %vm1589 = vcmp.lt.s32.totalorder %v424, 54
      %1595 = vrot.lane.b32.xlu0 %v1581, 99
      %v1596 = vpop.permute.xlu0 %1595
      %1597 = vrot.lane.b32.xlu0 %v1582, 99
      %v1598 = vpop.permute.xlu0 %1597
      %1599 = vrot.lane.b32.xlu0 %v1583, 99
      %v1600 = vpop.permute.xlu0 %1599
      %1601 = vrot.lane.b32.xlu0 %v1584, 99
      %v1602 = vpop.permute.xlu0 %1601
      %1603 = vrot.lane.b32.xlu0 %v1585, 99
      %v1604 = vpop.permute.xlu0 %1603
      %vm1605 = vcmask 809984
      %v1606 = vsel %vm1605, %v1596, %v1598
      %v1607 = vsel %vm1605, %v1598, %v1600
      %v1608 = vsel %vm1605, %v1600, %v1602
      %v1609 = vsel %vm1605, %v1602, %v1604
      %v1614 = vsel %vm1586, %v1606, 0.0
      %v1615 = vsel %vm1587, %v1607, 0.0
      %v1616 = vsel %vm1588, %v1608, 0.0
      %v1617 = vsel %vm1589, %v1609, 0.0
      %1618 = vst [vmem:[#allocation3 + $0x3a0] sm:$0xff] %v1614
      %1619 = vst [vmem:[#allocation3 + $0x3a8] sm:$0xff] %v1615
      %1620 = vst [vmem:[#allocation3 + $0x3b0] sm:$0xff] %v1616
      %1621 = vst [vmem:[#allocation3 + $0x3b8] sm:$0xff] %v1617
      %v1622 = vld [vmem:[#allocation2] sm:$0xff]
      %v1623 = vld [vmem:[#allocation2 + $0x8] sm:$0xff]
      %v1624 = vld [vmem:[#allocation2 + $0x10] sm:$0xff]
      %v1625 = vld [vmem:[#allocation2 + $0x18] sm:$0xff]
      %v1626 = vld [vmem:[#allocation2 + $0x20] sm:$0xff]
      %vm1627 = vcmp.lt.s32.totalorder %v421, 53
      %vm1628 = vcmp.lt.s32.totalorder %v422, 53
      %vm1629 = vcmp.lt.s32.totalorder %v423, 53
      %vm1630 = vcmp.lt.s32.totalorder %v424, 53
      %1636 = vrot.lane.b32.xlu0 %v1622, 98
      %v1637 = vpop.permute.xlu0 %1636
      %1638 = vrot.lane.b32.xlu0 %v1623, 98
      %v1639 = vpop.permute.xlu0 %1638
      %1640 = vrot.lane.b32.xlu0 %v1624, 98
      %v1641 = vpop.permute.xlu0 %1640
      %1642 = vrot.lane.b32.xlu0 %v1625, 98
      %v1643 = vpop.permute.xlu0 %1642
      %1644 = vrot.lane.b32.xlu0 %v1626, 98
      %v1645 = vpop.permute.xlu0 %1644
      %vm1646 = vcmask 801792
      %v1647 = vsel %vm1646, %v1637, %v1639
      %v1648 = vsel %vm1646, %v1639, %v1641
      %v1649 = vsel %vm1646, %v1641, %v1643
      %v1650 = vsel %vm1646, %v1643, %v1645
      %v1655 = vsel %vm1627, %v1647, 0.0
      %v1656 = vsel %vm1628, %v1648, 0.0
      %v1657 = vsel %vm1629, %v1649, 0.0
      %v1658 = vsel %vm1630, %v1650, 0.0
      %1659 = vst [vmem:[#allocation3 + $0x3c0] sm:$0xff] %v1655
      %1660 = vst [vmem:[#allocation3 + $0x3c8] sm:$0xff] %v1656
      %1661 = vst [vmem:[#allocation3 + $0x3d0] sm:$0xff] %v1657
      %1662 = vst [vmem:[#allocation3 + $0x3d8] sm:$0xff] %v1658
      %v1663 = vld [vmem:[#allocation2] sm:$0xff]
      %v1664 = vld [vmem:[#allocation2 + $0x8] sm:$0xff]
      %v1665 = vld [vmem:[#allocation2 + $0x10] sm:$0xff]
      %v1666 = vld [vmem:[#allocation2 + $0x18] sm:$0xff]
      %v1667 = vld [vmem:[#allocation2 + $0x20] sm:$0xff]
      %vm1668 = vcmp.lt.s32.totalorder %v421, 52
      %vm1669 = vcmp.lt.s32.totalorder %v422, 52
      %vm1670 = vcmp.lt.s32.totalorder %v423, 52
      %vm1671 = vcmp.lt.s32.totalorder %v424, 52
      %1677 = vrot.lane.b32.xlu0 %v1663, 97
      %v1678 = vpop.permute.xlu0 %1677
      %1679 = vrot.lane.b32.xlu0 %v1664, 97
      %v1680 = vpop.permute.xlu0 %1679
      %1681 = vrot.lane.b32.xlu0 %v1665, 97
      %v1682 = vpop.permute.xlu0 %1681
      %1683 = vrot.lane.b32.xlu0 %v1666, 97
      %v1684 = vpop.permute.xlu0 %1683
      %1685 = vrot.lane.b32.xlu0 %v1667, 97
      %v1686 = vpop.permute.xlu0 %1685
      %vm1687 = vcmask 793600
      %v1688 = vsel %vm1687, %v1678, %v1680
      %v1689 = vsel %vm1687, %v1680, %v1682
      %v1690 = vsel %vm1687, %v1682, %v1684
      %v1691 = vsel %vm1687, %v1684, %v1686
      %v1696 = vsel %vm1668, %v1688, 0.0
      %v1697 = vsel %vm1669, %v1689, 0.0
      %v1698 = vsel %vm1670, %v1690, 0.0
      %v1699 = vsel %vm1671, %v1691, 0.0
      %1700 = vst [vmem:[#allocation3 + $0x3e0] sm:$0xff] %v1696
      %1701 = vst [vmem:[#allocation3 + $0x3e8] sm:$0xff] %v1697
      %1702 = vst [vmem:[#allocation3 + $0x3f0] sm:$0xff] %v1698
      %1703 = vst [vmem:[#allocation3 + $0x3f8] sm:$0xff] %v1699
      %v1704 = vld [vmem:[#allocation2] sm:$0xff]
      %v1705 = vld [vmem:[#allocation2 + $0x8] sm:$0xff]
      %v1706 = vld [vmem:[#allocation2 + $0x10] sm:$0xff]
      %v1707 = vld [vmem:[#allocation2 + $0x18] sm:$0xff]
      %v1708 = vld [vmem:[#allocation2 + $0x20] sm:$0xff]
      %vm1709 = vcmp.lt.s32.totalorder %v421, 51
      %vm1710 = vcmp.lt.s32.totalorder %v422, 51
      %vm1711 = vcmp.lt.s32.totalorder %v423, 51
      %vm1712 = vcmp.lt.s32.totalorder %v424, 51
      %1718 = vrot.lane.b32.xlu0 %v1704, 96
      %v1719 = vpop.permute.xlu0 %1718
      %1720 = vrot.lane.b32.xlu0 %v1705, 96
      %v1721 = vpop.permute.xlu0 %1720
      %1722 = vrot.lane.b32.xlu0 %v1706, 96
      %v1723 = vpop.permute.xlu0 %1722
      %1724 = vrot.lane.b32.xlu0 %v1707, 96
      %v1725 = vpop.permute.xlu0 %1724
      %1726 = vrot.lane.b32.xlu0 %v1708, 96
      %v1727 = vpop.permute.xlu0 %1726
      %vm1728 = vcmask 785408
      %v1729 = vsel %vm1728, %v1719, %v1721
      %v1730 = vsel %vm1728, %v1721, %v1723
      %v1731 = vsel %vm1728, %v1723, %v1725
      %v1732 = vsel %vm1728, %v1725, %v1727
      %v1737 = vsel %vm1709, %v1729, 0.0
      %v1738 = vsel %vm1710, %v1730, 0.0
      %v1739 = vsel %vm1711, %v1731, 0.0
      %v1740 = vsel %vm1712, %v1732, 0.0
      %1741 = vst [vmem:[#allocation3 + $0x400] sm:$0xff] %v1737
      %1742 = vst [vmem:[#allocation3 + $0x408] sm:$0xff] %v1738
      %1743 = vst [vmem:[#allocation3 + $0x410] sm:$0xff] %v1739
      %1744 = vst [vmem:[#allocation3 + $0x418] sm:$0xff] %v1740
      %v1745 = vld [vmem:[#allocation2] sm:$0xff]
      %v1746 = vld [vmem:[#allocation2 + $0x8] sm:$0xff]
      %v1747 = vld [vmem:[#allocation2 + $0x10] sm:$0xff]
      %v1748 = vld [vmem:[#allocation2 + $0x18] sm:$0xff]
      %v1749 = vld [vmem:[#allocation2 + $0x20] sm:$0xff]
      %vm1750 = vcmp.lt.s32.totalorder %v421, 50
      %vm1751 = vcmp.lt.s32.totalorder %v422, 50
      %vm1752 = vcmp.lt.s32.totalorder %v423, 50
      %vm1753 = vcmp.lt.s32.totalorder %v424, 50
      %1759 = vrot.lane.b32.xlu0 %v1745, 95
      %v1760 = vpop.permute.xlu0 %1759
      %1761 = vrot.lane.b32.xlu0 %v1746, 95
      %v1762 = vpop.permute.xlu0 %1761
      %1763 = vrot.lane.b32.xlu0 %v1747, 95
      %v1764 = vpop.permute.xlu0 %1763
      %1765 = vrot.lane.b32.xlu0 %v1748, 95
      %v1766 = vpop.permute.xlu0 %1765
      %1767 = vrot.lane.b32.xlu0 %v1749, 95
      %v1768 = vpop.permute.xlu0 %1767
      %vm1769 = vcmask 777216
      %v1770 = vsel %vm1769, %v1760, %v1762
      %v1771 = vsel %vm1769, %v1762, %v1764
      %v1772 = vsel %vm1769, %v1764, %v1766
      %v1773 = vsel %vm1769, %v1766, %v1768
      %v1778 = vsel %vm1750, %v1770, 0.0
      %v1779 = vsel %vm1751, %v1771, 0.0
      %v1780 = vsel %vm1752, %v1772, 0.0
      %v1781 = vsel %vm1753, %v1773, 0.0
      %1782 = vst [vmem:[#allocation3 + $0x420] sm:$0xff] %v1778
      %1783 = vst [vmem:[#allocation3 + $0x428] sm:$0xff] %v1779
      %1784 = vst [vmem:[#allocation3 + $0x430] sm:$0xff] %v1780
      %1785 = vst [vmem:[#allocation3 + $0x438] sm:$0xff] %v1781
      %v1786 = vld [vmem:[#allocation2] sm:$0xff]
      %v1787 = vld [vmem:[#allocation2 + $0x8] sm:$0xff]
      %v1788 = vld [vmem:[#allocation2 + $0x10] sm:$0xff]
      %v1789 = vld [vmem:[#allocation2 + $0x18] sm:$0xff]
      %v1790 = vld [vmem:[#allocation2 + $0x20] sm:$0xff]
      %vm1791 = vcmp.lt.s32.totalorder %v421, 49
      %vm1792 = vcmp.lt.s32.totalorder %v422, 49
      %vm1793 = vcmp.lt.s32.totalorder %v423, 49
      %vm1794 = vcmp.lt.s32.totalorder %v424, 49
      %1800 = vrot.lane.b32.xlu0 %v1786, 94
      %v1801 = vpop.permute.xlu0 %1800
      %1802 = vrot.lane.b32.xlu0 %v1787, 94
      %v1803 = vpop.permute.xlu0 %1802
      %1804 = vrot.lane.b32.xlu0 %v1788, 94
      %v1805 = vpop.permute.xlu0 %1804
      %1806 = vrot.lane.b32.xlu0 %v1789, 94
      %v1807 = vpop.permute.xlu0 %1806
      %1808 = vrot.lane.b32.xlu0 %v1790, 94
      %v1809 = vpop.permute.xlu0 %1808
      %vm1810 = vcmask 769024
      %v1811 = vsel %vm1810, %v1801, %v1803
      %v1812 = vsel %vm1810, %v1803, %v1805
      %v1813 = vsel %vm1810, %v1805, %v1807
      %v1814 = vsel %vm1810, %v1807, %v1809
      %v1819 = vsel %vm1791, %v1811, 0.0
      %v1820 = vsel %vm1792, %v1812, 0.0
      %v1821 = vsel %vm1793, %v1813, 0.0
      %v1822 = vsel %vm1794, %v1814, 0.0
      %1823 = vst [vmem:[#allocation3 + $0x440] sm:$0xff] %v1819
      %1824 = vst [vmem:[#allocation3 + $0x448] sm:$0xff] %v1820
      %1825 = vst [vmem:[#allocation3 + $0x450] sm:$0xff] %v1821
      %1826 = vst [vmem:[#allocation3 + $0x458] sm:$0xff] %v1822
      %v1827 = vld [vmem:[#allocation2] sm:$0xff]
      %v1828 = vld [vmem:[#allocation2 + $0x8] sm:$0xff]
      %v1829 = vld [vmem:[#allocation2 + $0x10] sm:$0xff]
      %v1830 = vld [vmem:[#allocation2 + $0x18] sm:$0xff]
      %v1831 = vld [vmem:[#allocation2 + $0x20] sm:$0xff]
      %vm1832 = vcmp.lt.s32.totalorder %v421, 48
      %vm1833 = vcmp.lt.s32.totalorder %v422, 48
      %vm1834 = vcmp.lt.s32.totalorder %v423, 48
      %vm1835 = vcmp.lt.s32.totalorder %v424, 48
      %1841 = vrot.lane.b32.xlu0 %v1827, 93
      %v1842 = vpop.permute.xlu0 %1841
      %1843 = vrot.lane.b32.xlu0 %v1828, 93
      %v1844 = vpop.permute.xlu0 %1843
      %1845 = vrot.lane.b32.xlu0 %v1829, 93
      %v1846 = vpop.permute.xlu0 %1845
      %1847 = vrot.lane.b32.xlu0 %v1830, 93
      %v1848 = vpop.permute.xlu0 %1847
      %1849 = vrot.lane.b32.xlu0 %v1831, 93
      %v1850 = vpop.permute.xlu0 %1849
      %vm1851 = vcmask 760832
      %v1852 = vsel %vm1851, %v1842, %v1844
      %v1853 = vsel %vm1851, %v1844, %v1846
      %v1854 = vsel %vm1851, %v1846, %v1848
      %v1855 = vsel %vm1851, %v1848, %v1850
      %v1860 = vsel %vm1832, %v1852, 0.0
      %v1861 = vsel %vm1833, %v1853, 0.0
      %v1862 = vsel %vm1834, %v1854, 0.0
      %v1863 = vsel %vm1835, %v1855, 0.0
      %1864 = vst [vmem:[#allocation3 + $0x460] sm:$0xff] %v1860
      %1865 = vst [vmem:[#allocation3 + $0x468] sm:$0xff] %v1861
      %1866 = vst [vmem:[#allocation3 + $0x470] sm:$0xff] %v1862
      %1867 = vst [vmem:[#allocation3 + $0x478] sm:$0xff] %v1863
      %v1868 = vld [vmem:[#allocation2] sm:$0xff]
      %v1869 = vld [vmem:[#allocation2 + $0x8] sm:$0xff]
      %v1870 = vld [vmem:[#allocation2 + $0x10] sm:$0xff]
      %v1871 = vld [vmem:[#allocation2 + $0x18] sm:$0xff]
      %v1872 = vld [vmem:[#allocation2 + $0x20] sm:$0xff]
      %vm1873 = vcmp.lt.s32.totalorder %v421, 47
      %vm1874 = vcmp.lt.s32.totalorder %v422, 47
      %vm1875 = vcmp.lt.s32.totalorder %v423, 47
      %vm1876 = vcmp.lt.s32.totalorder %v424, 47
      %1882 = vrot.lane.b32.xlu0 %v1868, 92
      %v1883 = vpop.permute.xlu0 %1882
      %1884 = vrot.lane.b32.xlu0 %v1869, 92
      %v1885 = vpop.permute.xlu0 %1884
      %1886 = vrot.lane.b32.xlu0 %v1870, 92
      %v1887 = vpop.permute.xlu0 %1886
      %1888 = vrot.lane.b32.xlu0 %v1871, 92
      %v1889 = vpop.permute.xlu0 %1888
      %1890 = vrot.lane.b32.xlu0 %v1872, 92
      %v1891 = vpop.permute.xlu0 %1890
      %vm1892 = vcmask 752640
      %v1893 = vsel %vm1892, %v1883, %v1885
      %v1894 = vsel %vm1892, %v1885, %v1887
      %v1895 = vsel %vm1892, %v1887, %v1889
      %v1896 = vsel %vm1892, %v1889, %v1891
      %v1901 = vsel %vm1873, %v1893, 0.0
      %v1902 = vsel %vm1874, %v1894, 0.0
      %v1903 = vsel %vm1875, %v1895, 0.0
      %v1904 = vsel %vm1876, %v1896, 0.0
      %1905 = vst [vmem:[#allocation3 + $0x480] sm:$0xff] %v1901
      %1906 = vst [vmem:[#allocation3 + $0x488] sm:$0xff] %v1902
      %1907 = vst [vmem:[#allocation3 + $0x490] sm:$0xff] %v1903
      %1908 = vst [vmem:[#allocation3 + $0x498] sm:$0xff] %v1904
      %v1909 = vld [vmem:[#allocation2] sm:$0xff]
      %v1910 = vld [vmem:[#allocation2 + $0x8] sm:$0xff]
      %v1911 = vld [vmem:[#allocation2 + $0x10] sm:$0xff]
      %v1912 = vld [vmem:[#allocation2 + $0x18] sm:$0xff]
      %v1913 = vld [vmem:[#allocation2 + $0x20] sm:$0xff]
      %vm1914 = vcmp.lt.s32.totalorder %v421, 46
      %vm1915 = vcmp.lt.s32.totalorder %v422, 46
      %vm1916 = vcmp.lt.s32.totalorder %v423, 46
      %vm1917 = vcmp.lt.s32.totalorder %v424, 46
      %1923 = vrot.lane.b32.xlu0 %v1909, 91
      %v1924 = vpop.permute.xlu0 %1923
      %1925 = vrot.lane.b32.xlu0 %v1910, 91
      %v1926 = vpop.permute.xlu0 %1925
      %1927 = vrot.lane.b32.xlu0 %v1911, 91
      %v1928 = vpop.permute.xlu0 %1927
      %1929 = vrot.lane.b32.xlu0 %v1912, 91
      %v1930 = vpop.permute.xlu0 %1929
      %1931 = vrot.lane.b32.xlu0 %v1913, 91
      %v1932 = vpop.permute.xlu0 %1931
      %vm1933 = vcmask 744448
      %v1934 = vsel %vm1933, %v1924, %v1926
      %v1935 = vsel %vm1933, %v1926, %v1928
      %v1936 = vsel %vm1933, %v1928, %v1930
      %v1937 = vsel %vm1933, %v1930, %v1932
      %v1942 = vsel %vm1914, %v1934, 0.0
      %v1943 = vsel %vm1915, %v1935, 0.0
      %v1944 = vsel %vm1916, %v1936, 0.0
      %v1945 = vsel %vm1917, %v1937, 0.0
      %1946 = vst [vmem:[#allocation3 + $0x4a0] sm:$0xff] %v1942
      %1947 = vst [vmem:[#allocation3 + $0x4a8] sm:$0xff] %v1943
      %1948 = vst [vmem:[#allocation3 + $0x4b0] sm:$0xff] %v1944
      %1949 = vst [vmem:[#allocation3 + $0x4b8] sm:$0xff] %v1945
      %v1950 = vld [vmem:[#allocation2] sm:$0xff]
      %v1951 = vld [vmem:[#allocation2 + $0x8] sm:$0xff]
      %v1952 = vld [vmem:[#allocation2 + $0x10] sm:$0xff]
      %v1953 = vld [vmem:[#allocation2 + $0x18] sm:$0xff]
      %v1954 = vld [vmem:[#allocation2 + $0x20] sm:$0xff]
      %vm1955 = vcmp.lt.s32.totalorder %v421, 45
      %vm1956 = vcmp.lt.s32.totalorder %v422, 45
      %vm1957 = vcmp.lt.s32.totalorder %v423, 45
      %vm1958 = vcmp.lt.s32.totalorder %v424, 45
      %1964 = vrot.lane.b32.xlu0 %v1950, 90
      %v1965 = vpop.permute.xlu0 %1964
      %1966 = vrot.lane.b32.xlu0 %v1951, 90
      %v1967 = vpop.permute.xlu0 %1966
      %1968 = vrot.lane.b32.xlu0 %v1952, 90
      %v1969 = vpop.permute.xlu0 %1968
      %1970 = vrot.lane.b32.xlu0 %v1953, 90
      %v1971 = vpop.permute.xlu0 %1970
      %1972 = vrot.lane.b32.xlu0 %v1954, 90
      %v1973 = vpop.permute.xlu0 %1972
      %vm1974 = vcmask 736256
      %v1975 = vsel %vm1974, %v1965, %v1967
      %v1976 = vsel %vm1974, %v1967, %v1969
      %v1977 = vsel %vm1974, %v1969, %v1971
      %v1978 = vsel %vm1974, %v1971, %v1973
      %v1983 = vsel %vm1955, %v1975, 0.0
      %v1984 = vsel %vm1956, %v1976, 0.0
      %v1985 = vsel %vm1957, %v1977, 0.0
      %v1986 = vsel %vm1958, %v1978, 0.0
      %1987 = vst [vmem:[#allocation3 + $0x4c0] sm:$0xff] %v1983
      %1988 = vst [vmem:[#allocation3 + $0x4c8] sm:$0xff] %v1984
      %1989 = vst [vmem:[#allocation3 + $0x4d0] sm:$0xff] %v1985
      %1990 = vst [vmem:[#allocation3 + $0x4d8] sm:$0xff] %v1986
      %v1991 = vld [vmem:[#allocation2] sm:$0xff]
      %v1992 = vld [vmem:[#allocation2 + $0x8] sm:$0xff]
      %v1993 = vld [vmem:[#allocation2 + $0x10] sm:$0xff]
      %v1994 = vld [vmem:[#allocation2 + $0x18] sm:$0xff]
      %v1995 = vld [vmem:[#allocation2 + $0x20] sm:$0xff]
      %vm1996 = vcmp.lt.s32.totalorder %v421, 44
      %vm1997 = vcmp.lt.s32.totalorder %v422, 44
      %vm1998 = vcmp.lt.s32.totalorder %v423, 44
      %vm1999 = vcmp.lt.s32.totalorder %v424, 44
      %2005 = vrot.lane.b32.xlu0 %v1991, 89
      %v2006 = vpop.permute.xlu0 %2005
      %2007 = vrot.lane.b32.xlu0 %v1992, 89
      %v2008 = vpop.permute.xlu0 %2007
      %2009 = vrot.lane.b32.xlu0 %v1993, 89
      %v2010 = vpop.permute.xlu0 %2009
      %2011 = vrot.lane.b32.xlu0 %v1994, 89
      %v2012 = vpop.permute.xlu0 %2011
      %2013 = vrot.lane.b32.xlu0 %v1995, 89
      %v2014 = vpop.permute.xlu0 %2013
      %vm2015 = vcmask 728064
      %v2016 = vsel %vm2015, %v2006, %v2008
      %v2017 = vsel %vm2015, %v2008, %v2010
      %v2018 = vsel %vm2015, %v2010, %v2012
      %v2019 = vsel %vm2015, %v2012, %v2014
      %v2024 = vsel %vm1996, %v2016, 0.0
      %v2025 = vsel %vm1997, %v2017, 0.0
      %v2026 = vsel %vm1998, %v2018, 0.0
      %v2027 = vsel %vm1999, %v2019, 0.0
      %2028 = vst [vmem:[#allocation3 + $0x4e0] sm:$0xff] %v2024
      %2029 = vst [vmem:[#allocation3 + $0x4e8] sm:$0xff] %v2025
      %2030 = vst [vmem:[#allocation3 + $0x4f0] sm:$0xff] %v2026
      %2031 = vst [vmem:[#allocation3 + $0x4f8] sm:$0xff] %v2027
      %2032 = vrot.lane.b32.xlu0 %v171, 1
      %v2033 = vpop.permute.xlu0 %2032
      %2034 = vrot.lane.b32.xlu0 %v188, 1
      %v2035 = vpop.permute.xlu0 %2034
      %2036 = vrot.lane.b32.xlu0 %v172, 1
      %v2037 = vpop.permute.xlu0 %2036
      %2038 = vrot.lane.b32.xlu0 %v189, 1
      %v2039 = vpop.permute.xlu0 %2038
      %vm2040 = vcmask 7168
      %v2041 = vsel %vm2040, %v2033, %v2035
      %v2042 = vsel %vm2040, %v2035, %v2037
      %v2043 = vsel %vm2040, %v2037, %v2039
      %v2048 = vsel %vm2040, %v171, %v2033
      %2049 = vrot.lane.b32.xlu0 %v171, 127
      %v2050 = vpop.permute.xlu0 %2049
      %2051 = vrot.lane.b32.xlu0 %v188, 127
      %v2052 = vpop.permute.xlu0 %2051
      %2053 = vrot.lane.b32.xlu0 %v172, 127
      %v2054 = vpop.permute.xlu0 %2053
      %2055 = vrot.lane.b32.xlu0 %v189, 127
      %v2056 = vpop.permute.xlu0 %2055
      %v2057 = vsel %vm465, %v2050, %v2052
      %v2058 = vsel %vm465, %v2052, %v2054
      %v2059 = vsel %vm465, %v2054, %v2056
      %v2065 = vsel %vm465, %v2056, %v189
      %vm2066 = vcmp.eq.s32.totalorder %v421, 0
      %vm2067 = vcmp.eq.s32.totalorder %v422, 0
      %vm2068 = vcmp.eq.s32.totalorder %v423, 0
      %vm2069 = vcmp.eq.s32.totalorder %v424, 0
      %v2071 = vsel %vm2066, %v171, %v2048
      %v2072 = vsel %vm2067, %v188, %v2041
      %v2073 = vsel %vm2068, %v172, %v2042
      %v2074 = vsel %vm2069, %v189, %v2043
      %vm2075 = vcmp.eq.s32.totalorder %v421, 63
      %vm2076 = vcmp.eq.s32.totalorder %v422, 63
      %vm2077 = vcmp.eq.s32.totalorder %v423, 63
      %vm2078 = vcmp.eq.s32.totalorder %v424, 63
      %v2079 = vsel %vm2075, %v171, %v2057
      %v2080 = vsel %vm2076, %v188, %v2058
      %v2081 = vsel %vm2077, %v172, %v2059
      %v2082 = vsel %vm2078, %v189, %v2065
      %v2083 = vmax.f32 %v2071, %v171
      %v2084 = vmax.f32 %v2072, %v188
      %v2085 = vmax.f32 %v2073, %v172
      %v2086 = vmax.f32 %v2074, %v189
      %v2087 = vmax.f32 %v2083, %v2079
      %v2088 = vmax.f32 %v2084, %v2080
      %v2089 = vmax.f32 %v2085, %v2081
      %v2090 = vmax.f32 %v2086, %v2082
      %2091 = vst [vmem:[#allocation3 + $0x500] sm:$0xf] %v2087
      %2092 = vst [vmem:[#allocation3 + $0x508] sm:$0xf] %v2088
      %2093 = vst [vmem:[#allocation3 + $0x510] sm:$0xf] %v2089
      %2094 = vst [vmem:[#allocation3 + $0x518] sm:$0xf] %v2090
      %v2095 = vld [vmem:[#allocation3] sm:$0xff]
      %v2096 = vld [vmem:[#allocation3 + $0x8] sm:$0xff]
      %v2097 = vld [vmem:[#allocation3 + $0x10] sm:$0xff]
      %v2098 = vld [vmem:[#allocation3 + $0x18] sm:$0xff]
      %v2099 = vld [vmem:[#allocation3 + $0x20] sm:$0xff]
      %v2100 = vld [vmem:[#allocation3 + $0x28] sm:$0xff]
      %v2101 = vld [vmem:[#allocation3 + $0x30] sm:$0xff]
      %v2102 = vld [vmem:[#allocation3 + $0x38] sm:$0xff]
      %v2103 = vld [vmem:[#allocation3 + $0x40] sm:$0xff]
      %v2104 = vld [vmem:[#allocation3 + $0x48] sm:$0xff]
      %v2105 = vld [vmem:[#allocation3 + $0x50] sm:$0xff]
      %v2106 = vld [vmem:[#allocation3 + $0x58] sm:$0xff]
      %v2107 = vld [vmem:[#allocation3 + $0x60] sm:$0xff]
      %v2108 = vld [vmem:[#allocation3 + $0x68] sm:$0xff]
      %v2109 = vld [vmem:[#allocation3 + $0x70] sm:$0xff]
      %v2110 = vld [vmem:[#allocation3 + $0x78] sm:$0xff]
      %v2111 = vld [vmem:[#allocation3 + $0x80] sm:$0xff]
      %v2112 = vld [vmem:[#allocation3 + $0x88] sm:$0xff]
      %v2113 = vld [vmem:[#allocation3 + $0x90] sm:$0xff]
      %v2114 = vld [vmem:[#allocation3 + $0x98] sm:$0xff]
      %v2115 = vld [vmem:[#allocation3 + $0xa0] sm:$0xff]
      %v2116 = vld [vmem:[#allocation3 + $0xa8] sm:$0xff]
      %v2117 = vld [vmem:[#allocation3 + $0xb0] sm:$0xff]
      %v2118 = vld [vmem:[#allocation3 + $0xb8] sm:$0xff]
      %v2119 = vld [vmem:[#allocation3 + $0xc0] sm:$0xff]
      %v2120 = vld [vmem:[#allocation3 + $0xc8] sm:$0xff]
      %v2121 = vld [vmem:[#allocation3 + $0xd0] sm:$0xff]
      %v2122 = vld [vmem:[#allocation3 + $0xd8] sm:$0xff]
      %v2123 = vld [vmem:[#allocation3 + $0xe0] sm:$0xff]
      %v2124 = vld [vmem:[#allocation3 + $0xe8] sm:$0xff]
      %v2125 = vld [vmem:[#allocation3 + $0xf0] sm:$0xff]
      %v2126 = vld [vmem:[#allocation3 + $0xf8] sm:$0xff]
      %v2127 = vld [vmem:[#allocation3 + $0x100] sm:$0xff]
      %v2128 = vld [vmem:[#allocation3 + $0x108] sm:$0xff]
      %v2129 = vld [vmem:[#allocation3 + $0x110] sm:$0xff]
      %v2130 = vld [vmem:[#allocation3 + $0x118] sm:$0xff]
      %v2131 = vld [vmem:[#allocation3 + $0x120] sm:$0xff]
      %v2132 = vld [vmem:[#allocation3 + $0x128] sm:$0xff]
      %v2133 = vld [vmem:[#allocation3 + $0x130] sm:$0xff]
      %v2134 = vld [vmem:[#allocation3 + $0x138] sm:$0xff]
      %v2135 = vld [vmem:[#allocation3 + $0x140] sm:$0xff]
      %v2136 = vld [vmem:[#allocation3 + $0x148] sm:$0xff]
      %v2137 = vld [vmem:[#allocation3 + $0x150] sm:$0xff]
      %v2138 = vld [vmem:[#allocation3 + $0x158] sm:$0xff]
      %v2139 = vld [vmem:[#allocation3 + $0x160] sm:$0xff]
      %v2140 = vld [vmem:[#allocation3 + $0x168] sm:$0xff]
      %v2141 = vld [vmem:[#allocation3 + $0x170] sm:$0xff]
      %v2142 = vld [vmem:[#allocation3 + $0x178] sm:$0xff]
      %v2143 = vld [vmem:[#allocation3 + $0x180] sm:$0xff]
      %v2144 = vld [vmem:[#allocation3 + $0x188] sm:$0xff]
      %v2145 = vld [vmem:[#allocation3 + $0x190] sm:$0xff]
      %v2146 = vld [vmem:[#allocation3 + $0x198] sm:$0xff]
      %v2147 = vld [vmem:[#allocation3 + $0x1a0] sm:$0xff]
      %v2148 = vld [vmem:[#allocation3 + $0x1a8] sm:$0xff]
      %v2149 = vld [vmem:[#allocation3 + $0x1b0] sm:$0xff]
      %v2150 = vld [vmem:[#allocation3 + $0x1b8] sm:$0xff]
      %v2151 = vld [vmem:[#allocation3 + $0x1c0] sm:$0xff]
      %v2152 = vld [vmem:[#allocation3 + $0x1c8] sm:$0xff]
      %v2153 = vld [vmem:[#allocation3 + $0x1d0] sm:$0xff]
      %v2154 = vld [vmem:[#allocation3 + $0x1d8] sm:$0xff]
      %v2155 = vld [vmem:[#allocation3 + $0x1e0] sm:$0xff]
      %v2156 = vld [vmem:[#allocation3 + $0x1e8] sm:$0xff]
      %v2157 = vld [vmem:[#allocation3 + $0x1f0] sm:$0xff]
      %v2158 = vld [vmem:[#allocation3 + $0x1f8] sm:$0xff]
      %v2159 = vld [vmem:[#allocation3 + $0x200] sm:$0xff]
      %v2160 = vld [vmem:[#allocation3 + $0x208] sm:$0xff]
      %v2161 = vld [vmem:[#allocation3 + $0x210] sm:$0xff]
      %v2162 = vld [vmem:[#allocation3 + $0x218] sm:$0xff]
      %v2163 = vld [vmem:[#allocation3 + $0x220] sm:$0xff]
      %v2164 = vld [vmem:[#allocation3 + $0x228] sm:$0xff]
      %v2165 = vld [vmem:[#allocation3 + $0x230] sm:$0xff]
      %v2166 = vld [vmem:[#allocation3 + $0x238] sm:$0xff]
      %v2167 = vld [vmem:[#allocation3 + $0x240] sm:$0xff]
      %v2168 = vld [vmem:[#allocation3 + $0x248] sm:$0xff]
      %v2169 = vld [vmem:[#allocation3 + $0x250] sm:$0xff]
      %v2170 = vld [vmem:[#allocation3 + $0x258] sm:$0xff]
      %v2171 = vld [vmem:[#allocation3 + $0x260] sm:$0xff]
      %v2172 = vld [vmem:[#allocation3 + $0x268] sm:$0xff]
      %v2173 = vld [vmem:[#allocation3 + $0x270] sm:$0xff]
      %v2174 = vld [vmem:[#allocation3 + $0x278] sm:$0xff]
      %v2175 = vld [vmem:[#allocation3 + $0x280] sm:$0xff]
      %v2176 = vld [vmem:[#allocation3 + $0x288] sm:$0xff]
      %v2177 = vld [vmem:[#allocation3 + $0x290] sm:$0xff]
      %v2178 = vld [vmem:[#allocation3 + $0x298] sm:$0xff]
      %v2179 = vld [vmem:[#allocation3 + $0x2a0] sm:$0xff]
      %v2180 = vld [vmem:[#allocation3 + $0x2a8] sm:$0xff]
      %v2181 = vld [vmem:[#allocation3 + $0x2b0] sm:$0xff]
      %v2182 = vld [vmem:[#allocation3 + $0x2b8] sm:$0xff]
      %v2183 = vld [vmem:[#allocation3 + $0x2c0] sm:$0xff]
      %v2184 = vld [vmem:[#allocation3 + $0x2c8] sm:$0xff]
      %v2185 = vld [vmem:[#allocation3 + $0x2d0] sm:$0xff]
      %v2186 = vld [vmem:[#allocation3 + $0x2d8] sm:$0xff]
      %v2187 = vld [vmem:[#allocation3 + $0x2e0] sm:$0xff]
      %v2188 = vld [vmem:[#allocation3 + $0x2e8] sm:$0xff]
      %v2189 = vld [vmem:[#allocation3 + $0x2f0] sm:$0xff]
      %v2190 = vld [vmem:[#allocation3 + $0x2f8] sm:$0xff]
      %v2191 = vld [vmem:[#allocation3 + $0x300] sm:$0xff]
      %v2192 = vld [vmem:[#allocation3 + $0x308] sm:$0xff]
      %v2193 = vld [vmem:[#allocation3 + $0x310] sm:$0xff]
      %v2194 = vld [vmem:[#allocation3 + $0x318] sm:$0xff]
      %v2195 = vld [vmem:[#allocation3 + $0x320] sm:$0xff]
      %v2196 = vld [vmem:[#allocation3 + $0x328] sm:$0xff]
      %v2197 = vld [vmem:[#allocation3 + $0x330] sm:$0xff]
      %v2198 = vld [vmem:[#allocation3 + $0x338] sm:$0xff]
      %v2199 = vld [vmem:[#allocation3 + $0x340] sm:$0xff]
      %v2200 = vld [vmem:[#allocation3 + $0x348] sm:$0xff]
      %v2201 = vld [vmem:[#allocation3 + $0x350] sm:$0xff]
      %v2202 = vld [vmem:[#allocation3 + $0x358] sm:$0xff]
      %v2203 = vld [vmem:[#allocation3 + $0x360] sm:$0xff]
      %v2204 = vld [vmem:[#allocation3 + $0x368] sm:$0xff]
      %v2205 = vld [vmem:[#allocation3 + $0x370] sm:$0xff]
      %v2206 = vld [vmem:[#allocation3 + $0x378] sm:$0xff]
      %v2207 = vld [vmem:[#allocation3 + $0x380] sm:$0xff]
      %v2208 = vld [vmem:[#allocation3 + $0x388] sm:$0xff]
      %v2209 = vld [vmem:[#allocation3 + $0x390] sm:$0xff]
      %v2210 = vld [vmem:[#allocation3 + $0x398] sm:$0xff]
      %v2211 = vld [vmem:[#allocation3 + $0x3a0] sm:$0xff]
      %v2212 = vld [vmem:[#allocation3 + $0x3a8] sm:$0xff]
      %v2213 = vld [vmem:[#allocation3 + $0x3b0] sm:$0xff]
      %v2214 = vld [vmem:[#allocation3 + $0x3b8] sm:$0xff]
      %v2215 = vld [vmem:[#allocation3 + $0x3c0] sm:$0xff]
      %v2216 = vld [vmem:[#allocation3 + $0x3c8] sm:$0xff]
      %v2217 = vld [vmem:[#allocation3 + $0x3d0] sm:$0xff]
      %v2218 = vld [vmem:[#allocation3 + $0x3d8] sm:$0xff]
      %v2219 = vld [vmem:[#allocation3 + $0x3e0] sm:$0xff]
      %v2220 = vld [vmem:[#allocation3 + $0x3e8] sm:$0xff]
      %v2221 = vld [vmem:[#allocation3 + $0x3f0] sm:$0xff]
      %v2222 = vld [vmem:[#allocation3 + $0x3f8] sm:$0xff]
      %v2223 = vld [vmem:[#allocation3 + $0x400] sm:$0xff]
      %v2224 = vld [vmem:[#allocation3 + $0x408] sm:$0xff]
      %v2225 = vld [vmem:[#allocation3 + $0x410] sm:$0xff]
      %v2226 = vld [vmem:[#allocation3 + $0x418] sm:$0xff]
      %v2227 = vld [vmem:[#allocation3 + $0x420] sm:$0xff]
      %v2228 = vld [vmem:[#allocation3 + $0x428] sm:$0xff]
      %v2229 = vld [vmem:[#allocation3 + $0x430] sm:$0xff]
      %v2230 = vld [vmem:[#allocation3 + $0x438] sm:$0xff]
      %v2231 = vld [vmem:[#allocation3 + $0x440] sm:$0xff]
      %v2232 = vld [vmem:[#allocation3 + $0x448] sm:$0xff]
      %v2233 = vld [vmem:[#allocation3 + $0x450] sm:$0xff]
      %v2234 = vld [vmem:[#allocation3 + $0x458] sm:$0xff]
      %v2235 = vld [vmem:[#allocation3 + $0x460] sm:$0xff]
      %v2236 = vld [vmem:[#allocation3 + $0x468] sm:$0xff]
      %v2237 = vld [vmem:[#allocation3 + $0x470] sm:$0xff]
      %v2238 = vld [vmem:[#allocation3 + $0x478] sm:$0xff]
      %v2239 = vld [vmem:[#allocation3 + $0x480] sm:$0xff]
      %v2240 = vld [vmem:[#allocation3 + $0x488] sm:$0xff]
      %v2241 = vld [vmem:[#allocation3 + $0x490] sm:$0xff]
      %v2242 = vld [vmem:[#allocation3 + $0x498] sm:$0xff]
      %v2243 = vld [vmem:[#allocation3 + $0x4a0] sm:$0xff]
      %v2244 = vld [vmem:[#allocation3 + $0x4a8] sm:$0xff]
      %v2245 = vld [vmem:[#allocation3 + $0x4b0] sm:$0xff]
      %v2246 = vld [vmem:[#allocation3 + $0x4b8] sm:$0xff]
      %v2247 = vld [vmem:[#allocation3 + $0x4c0] sm:$0xff]
      %v2248 = vld [vmem:[#allocation3 + $0x4c8] sm:$0xff]
      %v2249 = vld [vmem:[#allocation3 + $0x4d0] sm:$0xff]
      %v2250 = vld [vmem:[#allocation3 + $0x4d8] sm:$0xff]
      %v2251 = vld [vmem:[#allocation3 + $0x4e0] sm:$0xff]
      %v2252 = vld [vmem:[#allocation3 + $0x4e8] sm:$0xff]
      %v2253 = vld [vmem:[#allocation3 + $0x4f0] sm:$0xff]
      %v2254 = vld [vmem:[#allocation3 + $0x4f8] sm:$0xff]
      %v2255 = vld [vmem:[#allocation3 + $0x500] sm:$0xf]
      %v2256 = vld [vmem:[#allocation3 + $0x508] sm:$0xf]
      %v2257 = vld [vmem:[#allocation3 + $0x510] sm:$0xf]
      %v2258 = vld [vmem:[#allocation3 + $0x518] sm:$0xf]
      %vm2259 = vcmask 556032
      %v2261 = vsel %vm2259, %v175, 0
      %v2264 = vsel %vm2259, %v178, 0
      %v2267 = vsel %vm2259, %v181, 0
      %v2270 = vsel %vm2259, %v184, 0
      %v2273 = vsel %vm194, %v2255, 0
      %v2276 = vsel %vm194, %v2256, 0
      %v2279 = vsel %vm194, %v2257, 0
      %v2282 = vsel %vm194, %v2258, 0
      %2284 = vmatprep.subr.mxu0 %v2156
      %2285 = vmatpush1.msra.mxu0 %v2155
      %2286 = vmatprep.subr.mxu0 %v2152
      %2287 = vmatpush1.msra.mxu0 %v2151
      %2288 = vmatprep.subr.mxu0 %v2148
      %2289 = vmatpush1.msra.mxu0 %v2147
      %2290 = vmatprep.subr.mxu0 %v2144
      %2291 = vmatpush1.msra.mxu0 %v2143
      %2292 = vmatprep.subr.mxu0 %v2140
      %2293 = vmatpush1.msra.mxu0 %v2139
      %2294 = vmatprep.subr.mxu0 %v2136
      %2295 = vmatpush1.msra.mxu0 %v2135
      %2296 = vmatprep.subr.mxu0 %v2132
      %2297 = vmatpush1.msra.mxu0 %v2131
      %2298 = vmatprep.subr.mxu0 %v2128
      %2299 = vmatpush1.msra.mxu0 %v2127
      %2300 = vmatprep.subr.mxu0 %v2124
      %2301 = vmatpush1.msra.mxu0 %v2123
      %2302 = vmatprep.subr.mxu0 %v2120
      %2303 = vmatpush1.msra.mxu0 %v2119
      %2304 = vmatprep.subr.mxu0 %v2116
      %2305 = vmatpush1.msra.mxu0 %v2115
      %2306 = vmatprep.subr.mxu0 %v2112
      %2307 = vmatpush1.msra.mxu0 %v2111
      %2308 = vmatprep.subr.mxu0 %v2108
      %2309 = vmatpush1.msra.mxu0 %v2107
      %2310 = vmatprep.subr.mxu0 %v2104
      %2311 = vmatpush1.msra.mxu0 %v2103
      %2312 = vmatprep.subr.mxu0 %v2100
      %2313 = vmatpush1.msra.mxu0 %v2099
      %2314 = vmatprep.subr.mxu0 %v2096
      %2315 = vmatpush1.msra.mxu0 %v2095
      %2316 = vmatprep.subr.mxu0 %v2220
      %2317 = vmatpush2.msra.mxu0 %v2219
      %2318 = vmatprep.subr.mxu0 %v2216
      %2319 = vmatpush2.msra.mxu0 %v2215
      %2320 = vmatprep.subr.mxu0 %v2212
      %2321 = vmatpush2.msra.mxu0 %v2211
      %2322 = vmatprep.subr.mxu0 %v2208
      %2323 = vmatpush2.msra.mxu0 %v2207
      %2324 = vmatprep.subr.mxu0 %v2204
      %2325 = vmatpush2.msra.mxu0 %v2203
      %2326 = vmatprep.subr.mxu0 %v2200
      %2327 = vmatpush2.msra.mxu0 %v2199
      %2328 = vmatprep.subr.mxu0 %v2196
      %2329 = vmatpush2.msra.mxu0 %v2195
      %2330 = vmatprep.subr.mxu0 %v2192
      %2331 = vmatpush2.msra.mxu0 %v2191
      %2332 = vmatprep.subr.mxu0 %v2188
      %2333 = vmatpush2.msra.mxu0 %v2187
      %2334 = vmatprep.subr.mxu0 %v2184
      %2335 = vmatpush2.msra.mxu0 %v2183
      %2336 = vmatprep.subr.mxu0 %v2180
      %2337 = vmatpush2.msra.mxu0 %v2179
      %2338 = vmatprep.subr.mxu0 %v2176
      %2339 = vmatpush2.msra.mxu0 %v2175
      %2340 = vmatprep.subr.mxu0 %v2172
      %2341 = vmatpush2.msra.mxu0 %v2171
      %2342 = vmatprep.subr.mxu0 %v2168
      %2343 = vmatpush2.msra.mxu0 %v2167
      %2344 = vmatprep.subr.mxu0 %v2164
      %2345 = vmatpush2.msra.mxu0 %v2163
      %2346 = vmatprep.subr.mxu0 %v2160
      %2347 = vmatpush2.msra.mxu0 %v2159
      %2348 = vmatprep.mubr.f32.mxu0 %v174
      %2349 = vmatmul.mubr.f32.gmra.mxu0 %v173
      %v2350 = vpop.f32.mrf.mxu0
      %v2351 = vadd.f32 0.0, %v2350
      %v2352 = vpop.f32.mrf.mxu0
      %v2353 = vadd.f32 0.0, %v2352
      %2354 = vmatprep.mubr.f32.mxu0 %v177
      %2355 = vmatmul.mubr.f32.gmra.mxu0 %v176
      %v2356 = vpop.f32.mrf.mxu0
      %v2357 = vadd.f32 0.0, %v2356
      %v2358 = vpop.f32.mrf.mxu0
      %v2359 = vadd.f32 0.0, %v2358
      %2360 = vmatprep.mubr.f32.mxu0 %v180
      %2361 = vmatmul.mubr.f32.gmra.mxu0 %v179
      %v2362 = vpop.f32.mrf.mxu0
      %v2363 = vadd.f32 0.0, %v2362
      %v2364 = vpop.f32.mrf.mxu0
      %v2365 = vadd.f32 0.0, %v2364
      %2366 = vmatprep.mubr.f32.mxu0 %v183
      %2367 = vmatmul.mubr.f32.gmra.mxu0 %v182
      %v2368 = vpop.f32.mrf.mxu0
      %v2369 = vadd.f32 0.0, %v2368
      %v2370 = vpop.f32.mrf.mxu0
      %v2371 = vadd.f32 0.0, %v2370
      %2372 = vdwg.mxu0
      %2373 = vmatprep.subr.mxu0 0.0
      %2374 = vmatpush1.msra.mxu0 0.0
      %2375 = vmatprep.subr.mxu0 0.0
      %2376 = vmatpush1.msra.mxu0 0.0
      %2377 = vmatprep.subr.mxu0 0.0
      %2378 = vmatpush1.msra.mxu0 0.0
      %2379 = vmatprep.subr.mxu0 0.0
      %2380 = vmatpush1.msra.mxu0 0.0
      %2381 = vmatprep.subr.mxu0 0.0
      %2382 = vmatpush1.msra.mxu0 0.0
      %2383 = vmatprep.subr.mxu0 0.0
      %2384 = vmatpush1.msra.mxu0 0.0
      %2385 = vmatprep.subr.mxu0 0.0
      %2386 = vmatpush1.msra.mxu0 0.0
      %2387 = vmatprep.subr.mxu0 %v2276
      %2388 = vmatpush1.msra.mxu0 %v2273
      %2389 = vmatprep.subr.mxu0 %v2252
      %2390 = vmatpush1.msra.mxu0 %v2251
      %2391 = vmatprep.subr.mxu0 %v2248
      %2392 = vmatpush1.msra.mxu0 %v2247
      %2393 = vmatprep.subr.mxu0 %v2244
      %2394 = vmatpush1.msra.mxu0 %v2243
      %2395 = vmatprep.subr.mxu0 %v2240
      %2396 = vmatpush1.msra.mxu0 %v2239
      %2397 = vmatprep.subr.mxu0 %v2236
      %2398 = vmatpush1.msra.mxu0 %v2235
      %2399 = vmatprep.subr.mxu0 %v2232
      %2400 = vmatpush1.msra.mxu0 %v2231
      %2401 = vmatprep.subr.mxu0 %v2228
      %2402 = vmatpush1.msra.mxu0 %v2227
      %2403 = vmatprep.subr.mxu0 %v2224
      %2404 = vmatpush1.msra.mxu0 %v2223
      %2405 = vmatprep.subr.mxu0 0.0
      %2406 = vmatpush2.msra.mxu0 0.0
      %2407 = vmatprep.subr.mxu0 0.0
      %2408 = vmatpush2.msra.mxu0 0.0
      %2409 = vmatprep.subr.mxu0 0.0
      %2410 = vmatpush2.msra.mxu0 0.0
      %2411 = vmatprep.subr.mxu0 0.0
      %2412 = vmatpush2.msra.mxu0 0.0
      %2413 = vmatprep.subr.mxu0 0.0
      %2414 = vmatpush2.msra.mxu0 0.0
      %2415 = vmatprep.subr.mxu0 0.0
      %2416 = vmatpush2.msra.mxu0 0.0
      %2417 = vmatprep.subr.mxu0 0.0
      %2418 = vmatpush2.msra.mxu0 0.0
      %2419 = vmatprep.subr.mxu0 0.0
      %2420 = vmatpush2.msra.mxu0 0.0
      %2421 = vmatprep.subr.mxu0 0.0
      %2422 = vmatpush2.msra.mxu0 0.0
      %2423 = vmatprep.subr.mxu0 0.0
      %2424 = vmatpush2.msra.mxu0 0.0
      %2425 = vmatprep.subr.mxu0 0.0
      %2426 = vmatpush2.msra.mxu0 0.0
      %2427 = vmatprep.subr.mxu0 0.0
      %2428 = vmatpush2.msra.mxu0 0.0
      %2429 = vmatprep.subr.mxu0 0.0
      %2430 = vmatpush2.msra.mxu0 0.0
      %2431 = vmatprep.subr.mxu0 0.0
      %2432 = vmatpush2.msra.mxu0 0.0
      %2433 = vmatprep.subr.mxu0 0.0
      %2434 = vmatpush2.msra.mxu0 0.0
      %2435 = vmatprep.subr.mxu0 0.0
      %2436 = vmatpush2.msra.mxu0 0.0
      %2437 = vmatprep.mubr.f32.mxu0 0.0
      %2438 = vmatmul.mubr.f32.gmra.mxu0 %v2261
      %v2439 = vpop.f32.mrf.mxu0
      %v2440 = vadd.f32 %v2351, %v2439
      %v2441 = vpop.f32.mrf.mxu0
      %v2442 = vadd.f32 %v2353, %v2441
      %2443 = vmatprep.mubr.f32.mxu0 0.0
      %2444 = vmatmul.mubr.f32.gmra.mxu0 %v2264
      %v2445 = vpop.f32.mrf.mxu0
      %v2446 = vadd.f32 %v2357, %v2445
      %v2447 = vpop.f32.mrf.mxu0
      %v2448 = vadd.f32 %v2359, %v2447
      %2449 = vmatprep.mubr.f32.mxu0 0.0
      %2450 = vmatmul.mubr.f32.gmra.mxu0 %v2267
      %v2451 = vpop.f32.mrf.mxu0
      %v2452 = vadd.f32 %v2363, %v2451
      %v2453 = vpop.f32.mrf.mxu0
      %v2454 = vadd.f32 %v2365, %v2453
      %2455 = vmatprep.mubr.f32.mxu0 0.0
      %2456 = vmatmul.mubr.f32.gmra.mxu0 %v2270
      %v2457 = vpop.f32.mrf.mxu0
      %v2458 = vadd.f32 %v2369, %v2457
      %v2459 = vpop.f32.mrf.mxu0
      %v2460 = vadd.f32 %v2371, %v2459
      %2461 = vdwg.mxu0
      %2462 = vmatprep.subr.mxu0 %v2158
      %2463 = vmatpush1.msra.mxu0 %v2157
      %2464 = vmatprep.subr.mxu0 %v2154
      %2465 = vmatpush1.msra.mxu0 %v2153
      %2466 = vmatprep.subr.mxu0 %v2150
      %2467 = vmatpush1.msra.mxu0 %v2149
      %2468 = vmatprep.subr.mxu0 %v2146
      %2469 = vmatpush1.msra.mxu0 %v2145
      %2470 = vmatprep.subr.mxu0 %v2142
      %2471 = vmatpush1.msra.mxu0 %v2141
      %2472 = vmatprep.subr.mxu0 %v2138
      %2473 = vmatpush1.msra.mxu0 %v2137
      %2474 = vmatprep.subr.mxu0 %v2134
      %2475 = vmatpush1.msra.mxu0 %v2133
      %2476 = vmatprep.subr.mxu0 %v2130
      %2477 = vmatpush1.msra.mxu0 %v2129
      %2478 = vmatprep.subr.mxu0 %v2126
      %2479 = vmatpush1.msra.mxu0 %v2125
      %2480 = vmatprep.subr.mxu0 %v2122
      %2481 = vmatpush1.msra.mxu0 %v2121
      %2482 = vmatprep.subr.mxu0 %v2118
      %2483 = vmatpush1.msra.mxu0 %v2117
      %2484 = vmatprep.subr.mxu0 %v2114
      %2485 = vmatpush1.msra.mxu0 %v2113
      %2486 = vmatprep.subr.mxu0 %v2110
      %2487 = vmatpush1.msra.mxu0 %v2109
      %2488 = vmatprep.subr.mxu0 %v2106
      %2489 = vmatpush1.msra.mxu0 %v2105
      %2490 = vmatprep.subr.mxu0 %v2102
      %2491 = vmatpush1.msra.mxu0 %v2101
      %2492 = vmatprep.subr.mxu0 %v2098
      %2493 = vmatpush1.msra.mxu0 %v2097
      %2494 = vmatprep.subr.mxu0 %v2222
      %2495 = vmatpush2.msra.mxu0 %v2221
      %2496 = vmatprep.subr.mxu0 %v2218
      %2497 = vmatpush2.msra.mxu0 %v2217
      %2498 = vmatprep.subr.mxu0 %v2214
      %2499 = vmatpush2.msra.mxu0 %v2213
      %2500 = vmatprep.subr.mxu0 %v2210
      %2501 = vmatpush2.msra.mxu0 %v2209
      %2502 = vmatprep.subr.mxu0 %v2206
      %2503 = vmatpush2.msra.mxu0 %v2205
      %2504 = vmatprep.subr.mxu0 %v2202
      %2505 = vmatpush2.msra.mxu0 %v2201
      %2506 = vmatprep.subr.mxu0 %v2198
      %2507 = vmatpush2.msra.mxu0 %v2197
      %2508 = vmatprep.subr.mxu0 %v2194
      %2509 = vmatpush2.msra.mxu0 %v2193
      %2510 = vmatprep.subr.mxu0 %v2190
      %2511 = vmatpush2.msra.mxu0 %v2189
      %2512 = vmatprep.subr.mxu0 %v2186
      %2513 = vmatpush2.msra.mxu0 %v2185
      %2514 = vmatprep.subr.mxu0 %v2182
      %2515 = vmatpush2.msra.mxu0 %v2181
      %2516 = vmatprep.subr.mxu0 %v2178
      %2517 = vmatpush2.msra.mxu0 %v2177
      %2518 = vmatprep.subr.mxu0 %v2174
      %2519 = vmatpush2.msra.mxu0 %v2173
      %2520 = vmatprep.subr.mxu0 %v2170
      %2521 = vmatpush2.msra.mxu0 %v2169
      %2522 = vmatprep.subr.mxu0 %v2166
      %2523 = vmatpush2.msra.mxu0 %v2165
      %2524 = vmatprep.subr.mxu0 %v2162
      %2525 = vmatpush2.msra.mxu0 %v2161
      %2526 = vmatprep.mubr.f32.mxu0 %v174
      %2527 = vmatmul.mubr.f32.gmra.mxu0 %v173
      %v2528 = vpop.f32.mrf.mxu0
      %v2529 = vadd.f32 0.0, %v2528
      %v2530 = vpop.f32.mrf.mxu0
      %v2531 = vadd.f32 0.0, %v2530
      %2532 = vmatprep.mubr.f32.mxu0 %v177
      %2533 = vmatmul.mubr.f32.gmra.mxu0 %v176
      %v2534 = vpop.f32.mrf.mxu0
      %v2535 = vadd.f32 0.0, %v2534
      %v2536 = vpop.f32.mrf.mxu0
      %v2537 = vadd.f32 0.0, %v2536
      %2538 = vmatprep.mubr.f32.mxu0 %v180
      %2539 = vmatmul.mubr.f32.gmra.mxu0 %v179
      %v2540 = vpop.f32.mrf.mxu0
      %v2541 = vadd.f32 0.0, %v2540
      %v2542 = vpop.f32.mrf.mxu0
      %v2543 = vadd.f32 0.0, %v2542
      %2544 = vmatprep.mubr.f32.mxu0 %v183
      %2545 = vmatmul.mubr.f32.gmra.mxu0 %v182
      %v2546 = vpop.f32.mrf.mxu0
      %v2547 = vadd.f32 0.0, %v2546
      %v2548 = vpop.f32.mrf.mxu0
      %v2549 = vadd.f32 0.0, %v2548
      %2550 = vdwg.mxu0
      %2551 = vmatprep.subr.mxu0 0.0
      %2552 = vmatpush1.msra.mxu0 0.0
      %2553 = vmatprep.subr.mxu0 0.0
      %2554 = vmatpush1.msra.mxu0 0.0
      %2555 = vmatprep.subr.mxu0 0.0
      %2556 = vmatpush1.msra.mxu0 0.0
      %2557 = vmatprep.subr.mxu0 0.0
      %2558 = vmatpush1.msra.mxu0 0.0
      %2559 = vmatprep.subr.mxu0 0.0
      %2560 = vmatpush1.msra.mxu0 0.0
      %2561 = vmatprep.subr.mxu0 0.0
      %2562 = vmatpush1.msra.mxu0 0.0
      %2563 = vmatprep.subr.mxu0 0.0
      %2564 = vmatpush1.msra.mxu0 0.0
      %2565 = vmatprep.subr.mxu0 %v2282
      %2566 = vmatpush1.msra.mxu0 %v2279
      %2567 = vmatprep.subr.mxu0 %v2254
      %2568 = vmatpush1.msra.mxu0 %v2253
      %2569 = vmatprep.subr.mxu0 %v2250
      %2570 = vmatpush1.msra.mxu0 %v2249
      %2571 = vmatprep.subr.mxu0 %v2246
      %2572 = vmatpush1.msra.mxu0 %v2245
      %2573 = vmatprep.subr.mxu0 %v2242
      %2574 = vmatpush1.msra.mxu0 %v2241
      %2575 = vmatprep.subr.mxu0 %v2238
      %2576 = vmatpush1.msra.mxu0 %v2237
      %2577 = vmatprep.subr.mxu0 %v2234
      %2578 = vmatpush1.msra.mxu0 %v2233
      %2579 = vmatprep.subr.mxu0 %v2230
      %2580 = vmatpush1.msra.mxu0 %v2229
      %2581 = vmatprep.subr.mxu0 %v2226
      %2582 = vmatpush1.msra.mxu0 %v2225
      %2583 = vmatprep.subr.mxu0 0.0
      %2584 = vmatpush2.msra.mxu0 0.0
      %2585 = vmatprep.subr.mxu0 0.0
      %2586 = vmatpush2.msra.mxu0 0.0
      %2587 = vmatprep.subr.mxu0 0.0
      %2588 = vmatpush2.msra.mxu0 0.0
      %2589 = vmatprep.subr.mxu0 0.0
      %2590 = vmatpush2.msra.mxu0 0.0
      %2591 = vmatprep.subr.mxu0 0.0
      %2592 = vmatpush2.msra.mxu0 0.0
      %2593 = vmatprep.subr.mxu0 0.0
      %2594 = vmatpush2.msra.mxu0 0.0
      %2595 = vmatprep.subr.mxu0 0.0
      %2596 = vmatpush2.msra.mxu0 0.0
      %2597 = vmatprep.subr.mxu0 0.0
      %2598 = vmatpush2.msra.mxu0 0.0
      %2599 = vmatprep.subr.mxu0 0.0
      %2600 = vmatpush2.msra.mxu0 0.0
      %2601 = vmatprep.subr.mxu0 0.0
      %2602 = vmatpush2.msra.mxu0 0.0
      %2603 = vmatprep.subr.mxu0 0.0
      %2604 = vmatpush2.msra.mxu0 0.0
      %2605 = vmatprep.subr.mxu0 0.0
      %2606 = vmatpush2.msra.mxu0 0.0
      %2607 = vmatprep.subr.mxu0 0.0
      %2608 = vmatpush2.msra.mxu0 0.0
      %2609 = vmatprep.subr.mxu0 0.0
      %2610 = vmatpush2.msra.mxu0 0.0
      %2611 = vmatprep.subr.mxu0 0.0
      %2612 = vmatpush2.msra.mxu0 0.0
      %2613 = vmatprep.subr.mxu0 0.0
      %2614 = vmatpush2.msra.mxu0 0.0
      %2615 = vmatprep.mubr.f32.mxu0 0.0
      %2616 = vmatmul.mubr.f32.gmra.mxu0 %v2261
      %v2617 = vpop.f32.mrf.mxu0
      %v2618 = vadd.f32 %v2529, %v2617
      %v2619 = vpop.f32.mrf.mxu0
      %v2620 = vadd.f32 %v2531, %v2619
      %2621 = vmatprep.mubr.f32.mxu0 0.0
      %2622 = vmatmul.mubr.f32.gmra.mxu0 %v2264
      %v2623 = vpop.f32.mrf.mxu0
      %v2624 = vadd.f32 %v2535, %v2623
      %v2625 = vpop.f32.mrf.mxu0
      %v2626 = vadd.f32 %v2537, %v2625
      %2627 = vmatprep.mubr.f32.mxu0 0.0
      %2628 = vmatmul.mubr.f32.gmra.mxu0 %v2267
      %v2629 = vpop.f32.mrf.mxu0
      %v2630 = vadd.f32 %v2541, %v2629
      %v2631 = vpop.f32.mrf.mxu0
      %v2632 = vadd.f32 %v2543, %v2631
      %2633 = vmatprep.mubr.f32.mxu0 0.0
      %2634 = vmatmul.mubr.f32.gmra.mxu0 %v2270
      %v2635 = vpop.f32.mrf.mxu0
      %v2636 = vadd.f32 %v2547, %v2635
      %v2637 = vpop.f32.mrf.mxu0
      %v2638 = vadd.f32 %v2549, %v2637
      %2639 = vdwg.mxu0
      %v2640 = vmax.f32 %v2440, 0.0
      %v2641 = vmax.f32 %v2442, 0.0
      %v2642 = vmax.f32 %v2618, 0.0
      %v2643 = vmax.f32 %v2620, 0.0
      %v2644 = vmax.f32 %v2446, 0.0
      %v2645 = vmax.f32 %v2448, 0.0
      %v2646 = vmax.f32 %v2624, 0.0
      %v2647 = vmax.f32 %v2626, 0.0
      %v2648 = vmax.f32 %v2452, 0.0
      %v2649 = vmax.f32 %v2454, 0.0
      %v2650 = vmax.f32 %v2630, 0.0
      %v2651 = vmax.f32 %v2632, 0.0
      %v2652 = vmax.f32 %v2458, 0.0
      %v2653 = vmax.f32 %v2460, 0.0
      %v2654 = vmax.f32 %v2636, 0.0
      %v2655 = vmax.f32 %v2638, 0.0
      %2656 = vst [vmem:[%s170] sm:$0xff] %v2640
      %2657 = vst [vmem:[%s170 + $0x8] sm:$0xff] %v2641
      %2658 = vst [vmem:[%s170 + $0x10] sm:$0xff] %v2642
      %2659 = vst [vmem:[%s170 + $0x18] sm:$0xff] %v2643
      %2660 = vst [vmem:[%s170 + $0x20] sm:$0xff] %v2644
      %2661 = vst [vmem:[%s170 + $0x28] sm:$0xff] %v2645
      %2662 = vst [vmem:[%s170 + $0x30] sm:$0xff] %v2646
      %2663 = vst [vmem:[%s170 + $0x38] sm:$0xff] %v2647
      %2664 = vst [vmem:[%s170 + $0x40] sm:$0xff] %v2648
      %2665 = vst [vmem:[%s170 + $0x48] sm:$0xff] %v2649
      %2666 = vst [vmem:[%s170 + $0x50] sm:$0xff] %v2650
      %2667 = vst [vmem:[%s170 + $0x58] sm:$0xff] %v2651
      %2668 = vst [vmem:[%s170 + $0x60] sm:$0xff] %v2652
      %2669 = vst [vmem:[%s170 + $0x68] sm:$0xff] %v2653
      %2670 = vst [vmem:[%s170 + $0x70] sm:$0xff] %v2654
      %2671 = vst [vmem:[%s170 + $0x78] sm:$0xff] %v2655
      %p2672 = scmp.lt.s32.totalorder %s14, 1
      %s2673 = scalar_select %p2672, %s14, 1
      %s2674 = smul.addr %s2673, 16
      %s2675 = smul.addr %s2674, 8
      %s2676 = scalar_lea.vmem %s3, %s2675
      // Predicated region
      $region33: #{inception_module.1} parent=31 // pred_check
        %p2677 = pneg %p100
      $region34: #{inception_module.1} parent=31 // pred_check_branch
        %2679 = sbr.rel (%p2677) target = $region36
      $region35: #{inception_module.1} parent=31 // pred_region
        _
      $region36: #{inception_module.1} parent=31 // pred_fallthru
        _
    $region32: #{inception_module.1} parent=5 // pred_fallthru
      _
    %p2680 = scmp.le.s32.totalorder 2, %s9
    // Predicated region
    $region37: #{inception_module.1} parent=5 // pred_check
      %p2681 = pneg %p2680
    $region38: #{inception_module.1} parent=5 // pred_check_branch
      %2683 = sbr.rel (%p2681) target = $region40
    $region39: #{inception_module.1} parent=5 // pred_region
      %s2684 = ssub.s32 %s9, 2
      // Predicated region
      $region41: #{inception_module.1} parent=39 // pred_check
        %p2685 = pneg %p106
      $region42: #{inception_module.1} parent=39 // pred_check_branch
        %2687 = sbr.rel (%p2685) target = $region44
      $region43: #{inception_module.1} parent=39 // pred_region
        %p2688 = scmp.lt.s32.totalorder %s15, 1
        %s2689 = scalar_select %p2688, %s15, 1
        %s2690 = smul.addr %s2689, 16
        %s2691 = smul.addr %s2690, 8
        %s2692 = scalar_lea.vmem %s3, %s2691
      $region44: #{inception_module.1} parent=39 // pred_fallthru
        _
    $region40: #{inception_module.1} parent=5 // pred_fallthru
      _
  $region6: #{inception_module.1} parent=0 // loop_footer
    %s13 = sadd.s32 1, %s9
  $region7: #{inception_module.1} parent=0 // loop_footer_branch
    %8 = sbr.rel target = $region3
  $region8: #{inception_module.1} parent=0 // loop_exit
    _

</llo_original>
